<compile_context>
chip_gen: v7x
topology: tpu7x:2x2x1
jax: 0.10.0
libtpu: 0.0.40
codegen_flags: <defaults>
</compile_context>

<pallas_src>
import numpy as np

import jax
import jax.numpy as jnp
from jax import lax
from jax.experimental import pallas as pl
from jax.experimental.pallas import tpu as pltpu

_EPS = 1e-5


def _round_up(x, m):
    return (x + m - 1) // m * m


# ------------------------- wrapper-side constant prep -------------------------
def _structure_mats_np(H, W, C, lpad):
    """Static 0/1 matrices: h/w-halo scatter (Lin -> lpad, halo/pad lanes stay
    zero) and the per-channel selector (Lin -> C) plus its transpose."""
    Wp = W + 2
    Lin = H * W * C
    h, w, c = np.meshgrid(np.arange(H), np.arange(W), np.arange(C), indexing="ij")
    src = ((h * W + w) * C + c).ravel()
    dst = (((h + 1) * Wp + (w + 1)) * C + c).ravel()
    padmat = np.zeros((Lin, lpad), np.float32)
    padmat[src, dst] = 1.0
    sel = np.zeros((Lin, C), np.float32)
    sel[np.arange(Lin), np.arange(Lin) % C] = 1.0
    return padmat, sel, np.ascontiguousarray(sel.T)


def _band_matrices_np(w, H, W, C, lpad):
    """Fold a (C_out, C_in, 3, 3, 3) conv weight into 3 banded matrices (one per
    depth tap kd), each mapping an h/w-padded plane (lpad lanes, tail rows zero)
    to an output plane (Lin lanes):
        out_plane[d] = sum_kd in_padded_plane[d + kd - 1] @ band[kd]."""
    Wp = W + 2
    Lin = H * W * C
    kh, kw, h, ww, ci, co = np.meshgrid(
        np.arange(3), np.arange(3), np.arange(H), np.arange(W),
        np.arange(C), np.arange(C), indexing="ij")
    in_lane = (((h + kh) * Wp + (ww + kw)) * C + ci).ravel()
    out_lane = ((h * W + ww) * C + co).ravel()
    wt = np.transpose(np.asarray(w, np.float32), (2, 3, 4, 1, 0))   # (kd,kh,kw,ci,co)
    bands = []
    for kd in range(3):
        band = np.zeros((lpad, Lin), np.float32)
        band[in_lane, out_lane] = wt[kd][kh, kw, ci, co].ravel()
        bands.append(band)
    return bands


def prepare_block_constants(params, H, W):
    """Weight-dependent kernel constants.  Run once per weight update, OUTSIDE
    the per-call jitted path (the .at[].set-style scatters / tiling here would
    otherwise dominate the forward wall time at this kernel's size)."""
    C = int(params["b1"].shape[0])
    Lin = H * W * C
    lpad = _round_up((H + 2) * (W + 2) * C, 128)      # 400 -> 512: full lane tiles

    padmat, sel, selt = _structure_mats_np(H, W, C, lpad)
    b1 = _band_matrices_np(params["w1"], H, W, C, lpad)
    b2 = _band_matrices_np(params["w2"], H, W, C, lpad)

    lane_c = np.arange(Lin) % C
    consts = {
        "b1k0": b1[0], "b1k1": b1[1], "b1k2": b1[2],
        "b2k0": b2[0], "b2k1": b2[1], "b2k2": b2[2],
        "bias1": np.asarray(params["b1"], np.float32)[lane_c].reshape(1, Lin),
        "bias2": np.asarray(params["b2"], np.float32)[lane_c].reshape(1, Lin),
        "g1": np.asarray(params["g1"], np.float32).reshape(1, C),
        "be1": np.asarray(params["be1"], np.float32).reshape(1, C),
        "g2": np.asarray(params["g2"], np.float32).reshape(1, C),
        "be2": np.asarray(params["be2"], np.float32).reshape(1, C),
        "padmat": padmat, "sel": sel, "selt": selt,
    }
    return {k: jnp.asarray(v) for k, v in consts.items()}


# --------------------------------- the kernel ---------------------------------
def _make_kernel(N, D, H, W, C):
    M = N * D
    Lin = H * W * C
    inv_m = 1.0 / float(N * D * H * W)

    def kernel(x_ref, b1k0_ref, b1k1_ref, b1k2_ref, bias1_ref, g1_ref, be1_ref,
               b2k0_ref, b2k1_ref, b2k2_ref, bias2_ref, g2_ref, be2_ref,
               padmat_ref, sel_ref, selt_ref, out_ref):
        f32 = jnp.float32
        x = x_ref[...]                                          # (M, Lin)

        # Depth-boundary masks shared by both convs: the kd=0 tap is invalid at
        # d == 0, the kd=2 tap at d == D-1.  Masking also kills the cross-batch
        # wraparound rows introduced by the sublane roll.
        d_idx = lax.broadcasted_iota(jnp.int32, (M, Lin), 0) % D
        mask_lo = (d_idx != 0).astype(f32)
        mask_hi = (d_idx != (D - 1)).astype(f32)

        def conv(xp, bk0_ref, bk1_ref, bk2_ref, bias_ref):
            # Three full-M banded matmuls (one per depth tap).  Boundary taps
            # are realigned with an XLU sublane roll + VPU mask, accumulating
            # in vregs (no VMEM scratch, no misaligned RMW slices).
            mid = jnp.dot(xp, bk1_ref[...], preferred_element_type=f32)
            lo = jnp.dot(xp, bk0_ref[...], preferred_element_type=f32)
            hi = jnp.dot(xp, bk2_ref[...], preferred_element_type=f32)
            lo = pltpu.roll(lo, 1, axis=0) * mask_lo        # out[d] += in[d-1] @ bk0
            hi = pltpu.roll(hi, M - 1, axis=0) * mask_hi    # out[d] += in[d+1] @ bk2
            return mid + lo + hi + bias_ref[...]

        def bn(y, g_ref, be_ref):
            # Single-pass training-mode BatchNorm fused into the conv epilogue.
            # The two selector matmuls are fused by stacking [sum; sum_sq] and
            # [scale; shift] (halves the number of tiny MXU pushes).
            s = jnp.concatenate([jnp.sum(y, axis=0, keepdims=True),
                                 jnp.sum(y * y, axis=0, keepdims=True)], axis=0)
            stats = jnp.dot(s, sel_ref[...], preferred_element_type=f32) * inv_m
            mean = stats[0:1, :]                            # (1, C)
            var = stats[1:2, :] - mean * mean               # biased variance
            scale = g_ref[...] * lax.rsqrt(var + _EPS)      # (1, C)
            shift = be_ref[...] - mean * scale              # (1, C)
            ss = jnp.dot(jnp.concatenate([scale, shift], axis=0), selt_ref[...],
                         preferred_element_type=f32)        # (2, Lin) lane-dense
            return y * ss[0:1, :] + ss[1:2, :]

        # ---- conv1 -> BN -> ReLU (h/w halo created by the padmat matmul) ----
        xp = jnp.dot(x, padmat_ref[...], preferred_element_type=f32)   # (M, Lpad)
        y1 = jnp.maximum(bn(conv(xp, b1k0_ref, b1k1_ref, b1k2_ref, bias1_ref),
                            g1_ref, be1_ref), 0.0)

        # ---- conv2 -> BN ----
        y1p = jnp.dot(y1, padmat_ref[...], preferred_element_type=f32)
        y2 = bn(conv(y1p, b2k0_ref, b2k1_ref, b2k2_ref, bias2_ref),
                g2_ref, be2_ref)

        # ---- residual add + ReLU, lane-dense (multiple-of-128) store ----
        out_ref[...] = jnp.maximum(x + y2, 0.0)

    return kernel


# --------------------------------- the wrapper ---------------------------------
@jax.jit
def basic_block_forward(x_ncdhw, consts):
    """x_ncdhw: (N, C, D, H, W) float32 (PyTorch Conv3d layout)."""
    N, C, D, H, W = x_ncdhw.shape
    Lin = H * W * C

    # Lane-dense activation layout (N*D, H*W*C); the only per-call layout work.
    x_flat = jnp.transpose(x_ncdhw, (0, 2, 3, 4, 1)).reshape(N * D, Lin)

    args = (x_flat,
            consts["b1k0"], consts["b1k1"], consts["b1k2"], consts["bias1"],
            consts["g1"], consts["be1"],
            consts["b2k0"], consts["b2k1"], consts["b2k2"], consts["bias2"],
            consts["g2"], consts["be2"],
            consts["padmat"], consts["sel"], consts["selt"])

    out_flat = pl.pallas_call(
        _make_kernel(N, D, H, W, C),
        out_shape=jax.ShapeDtypeStruct((N * D, Lin), jnp.float32),
        in_specs=[pl.BlockSpec(memory_space=pltpu.MemorySpace.VMEM)] * len(args),
        out_specs=pl.BlockSpec(memory_space=pltpu.MemorySpace.VMEM),
    )(*args)

    return jnp.transpose(out_flat.reshape(N, D, H, W, C), (0, 4, 1, 2, 3))  # NCDHW


# ---------------------- pure-JAX reference (for checking) ----------------------
def _reference(x, params):
    dn = lax.conv_dimension_numbers(x.shape, params["w1"].shape,
                                    ("NCDHW", "OIDHW", "NCDHW"))

    def conv(inp, w, b):
        y = lax.conv_general_dilated(inp, w, (1, 1, 1),
                                     [(1, 1), (1, 1), (1, 1)],
                                     dimension_numbers=dn)
        return y + b[None, :, None, None, None]

    def bn(y, g, be):
        mean = jnp.mean(y, axis=(0, 2, 3, 4), keepdims=True)
        var = jnp.mean(jnp.square(y - mean), axis=(0, 2, 3, 4), keepdims=True)
        return ((y - mean) * lax.rsqrt(var + _EPS)
                * g[None, :, None, None, None] + be[None, :, None, None, None])

    y = jnp.maximum(bn(conv(x, params["w1"], params["b1"]),
                       params["g1"], params["be1"]), 0.0)
    y = bn(conv(y, params["w2"], params["b2"]), params["g2"], params["be2"])
    return jnp.maximum(x + y, 0.0)


if __name__ == "__main__":
    dim = 4
    N, D, H, W = 2, 8, 8, 8

    key = jax.random.PRNGKey(0)
    ks = jax.random.split(key, 9)
    params = {
        "w1": 0.1 * jax.random.normal(ks[0], (dim, dim, 3, 3, 3), jnp.float32),
        "b1": 0.1 * jax.random.normal(ks[1], (dim,), jnp.float32),
        "g1": 1.0 + 0.1 * jax.random.normal(ks[2], (dim,), jnp.float32),
        "be1": 0.1 * jax.random.normal(ks[3], (dim,), jnp.float32),
        "w2": 0.1 * jax.random.normal(ks[4], (dim, dim, 3, 3, 3), jnp.float32),
        "b2": 0.1 * jax.random.normal(ks[5], (dim,), jnp.float32),
        "g2": 1.0 + 0.1 * jax.random.normal(ks[6], (dim,), jnp.float32),
        "be2": 0.1 * jax.random.normal(ks[7], (dim,), jnp.float32),
    }
    x = jax.random.normal(ks[8], (N, dim, D, H, W), jnp.float32)

    consts = prepare_block_constants(params, H, W)     # once per weight update

    out = jax.block_until_ready(basic_block_forward(x, consts))
    ref = jax.block_until_ready(_reference(x, params))
    assert out.shape == x.shape
    max_err = float(jnp.max(jnp.abs(out - ref)))
    assert jnp.allclose(out, ref, atol=2e-3, rtol=2e-3), max_err

    print("KERNEL_OK")
</pallas_src>

<mosaic_0001>
module attributes {stable_mosaic.version = 11 : i64} {
  func.func @kernel(%arg0: memref<16x256xf32, #tpu.memory_space<vmem>>, %arg1: memref<512x256xf32, #tpu.memory_space<vmem>>, %arg2: memref<512x256xf32, #tpu.memory_space<vmem>>, %arg3: memref<512x256xf32, #tpu.memory_space<vmem>>, %arg4: memref<1x256xf32, #tpu.memory_space<vmem>>, %arg5: memref<1x4xf32, #tpu.memory_space<vmem>>, %arg6: memref<1x4xf32, #tpu.memory_space<vmem>>, %arg7: memref<512x256xf32, #tpu.memory_space<vmem>>, %arg8: memref<512x256xf32, #tpu.memory_space<vmem>>, %arg9: memref<512x256xf32, #tpu.memory_space<vmem>>, %arg10: memref<1x256xf32, #tpu.memory_space<vmem>>, %arg11: memref<1x4xf32, #tpu.memory_space<vmem>>, %arg12: memref<1x4xf32, #tpu.memory_space<vmem>>, %arg13: memref<256x512xf32, #tpu.memory_space<vmem>>, %arg14: memref<256x4xf32, #tpu.memory_space<vmem>>, %arg15: memref<4x256xf32, #tpu.memory_space<vmem>>, %arg16: memref<16x256xf32, #tpu.memory_space<vmem>>) attributes {dimension_semantics = [], scalar_prefetch = 0 : i64, scratch_operands = 0 : i64, tpu.core_type = #tpu.core_type<tc>} {
    %c0 = arith.constant 0 : index
    %c0_0 = arith.constant 0 : index
    %0 = vector.load %arg0[%c0, %c0_0] : memref<16x256xf32, #tpu.memory_space<vmem>>, vector<16x256xf32>
    %1 = tpu.iota {dimensions = array<i32: 0>} : vector<16x256xi32>
    %c8_i32 = arith.constant 8 : i32
    %c0_i32 = arith.constant 0 : i32
    %2 = arith.cmpi eq, %c8_i32, %c0_i32 : i32
    %c1_i32 = arith.constant 1 : i32
    %3 = arith.select %2, %c1_i32, %c8_i32 : i32
    %4 = vector.broadcast %3 : i32 to vector<16x256xi32>
    %5 = arith.remsi %1, %4 : vector<16x256xi32>
    %c0_i32_1 = arith.constant 0 : i32
    %6 = vector.broadcast %c0_i32_1 : i32 to vector<16x256xi32>
    %7 = arith.cmpi ne, %5, %6 : vector<16x256xi32>
    %c0_i32_2 = arith.constant 0 : i32
    %8 = vector.broadcast %c0_i32_2 : i32 to vector<16x256xi32>
    %9 = arith.cmpi slt, %5, %8 : vector<16x256xi32>
    %c0_i32_3 = arith.constant 0 : i32
    %10 = arith.cmpi slt, %3, %c0_i32_3 : i32
    %11 = vector.broadcast %10 : i1 to vector<16x256xi1>
    %12 = vector.broadcast %11 : vector<16x256xi1> to vector<16x256xi1>
    %13 = arith.xori %9, %12 : vector<16x256xi1>
    %14 = arith.andi %13, %7 : vector<16x256xi1>
    %15 = vector.broadcast %3 : i32 to vector<16x256xi32>
    %16 = arith.addi %5, %15 : vector<16x256xi32>
    %17 = arith.select %14, %16, %5 : vector<16x256xi1>, vector<16x256xi32>
    %c0_i32_4 = arith.constant 0 : i32
    %18 = vector.broadcast %c0_i32_4 : i32 to vector<16x256xi32>
    %19 = arith.cmpi ne, %17, %18 : vector<16x256xi32>
    %20 = arith.extui %19 : vector<16x256xi1> to vector<16x256xi32>
    %21 = arith.sitofp %20 : vector<16x256xi32> to vector<16x256xf32>
    %c7_i32 = arith.constant 7 : i32
    %22 = vector.broadcast %c7_i32 : i32 to vector<16x256xi32>
    %23 = arith.cmpi ne, %17, %22 : vector<16x256xi32>
    %24 = arith.extui %23 : vector<16x256xi1> to vector<16x256xi32>
    %25 = arith.sitofp %24 : vector<16x256xi32> to vector<16x256xf32>
    %c0_5 = arith.constant 0 : index
    %c0_6 = arith.constant 0 : index
    %26 = vector.load %arg13[%c0_5, %c0_6] : memref<256x512xf32, #tpu.memory_space<vmem>>, vector<256x512xf32>
    %cst = arith.constant dense<0.000000e+00> : vector<16x512xf32>
    %27 = tpu.matmul %0, %26, %cst {dimension_numbers = #tpu.dot_dimension_numbers<[1], [0], [0], [1], [0, 0, 1, 1], [], []>} : vector<16x256xf32>, vector<256x512xf32>, vector<16x512xf32> -> vector<16x512xf32>
    %c0_7 = arith.constant 0 : index
    %c0_8 = arith.constant 0 : index
    %28 = vector.load %arg2[%c0_7, %c0_8] : memref<512x256xf32, #tpu.memory_space<vmem>>, vector<512x256xf32>
    %cst_9 = arith.constant dense<0.000000e+00> : vector<16x256xf32>
    %29 = tpu.matmul %27, %28, %cst_9 {dimension_numbers = #tpu.dot_dimension_numbers<[1], [0], [0], [1], [0, 0, 1, 1], [], []>} : vector<16x512xf32>, vector<512x256xf32>, vector<16x256xf32> -> vector<16x256xf32>
    %c0_10 = arith.constant 0 : index
    %c0_11 = arith.constant 0 : index
    %30 = vector.load %arg1[%c0_10, %c0_11] : memref<512x256xf32, #tpu.memory_space<vmem>>, vector<512x256xf32>
    %cst_12 = arith.constant dense<0.000000e+00> : vector<16x256xf32>
    %31 = tpu.matmul %27, %30, %cst_12 {dimension_numbers = #tpu.dot_dimension_numbers<[1], [0], [0], [1], [0, 0, 1, 1], [], []>} : vector<16x512xf32>, vector<512x256xf32>, vector<16x256xf32> -> vector<16x256xf32>
    %c0_13 = arith.constant 0 : index
    %c0_14 = arith.constant 0 : index
    %32 = vector.load %arg3[%c0_13, %c0_14] : memref<512x256xf32, #tpu.memory_space<vmem>>, vector<512x256xf32>
    %cst_15 = arith.constant dense<0.000000e+00> : vector<16x256xf32>
    %33 = tpu.matmul %27, %32, %cst_15 {dimension_numbers = #tpu.dot_dimension_numbers<[1], [0], [0], [1], [0, 0, 1, 1], [], []>} : vector<16x512xf32>, vector<512x256xf32>, vector<16x256xf32> -> vector<16x256xf32>
    %c1_i32_16 = arith.constant 1 : i32
    %34 = tpu.dynamic_rotate %31 by %c1_i32_16 dim 0 : vector<16x256xf32>, i32 -> vector<16x256xf32>
    %35 = arith.mulf %34, %21 : vector<16x256xf32>
    %c15_i32 = arith.constant 15 : i32
    %36 = tpu.dynamic_rotate %33 by %c15_i32 dim 0 : vector<16x256xf32>, i32 -> vector<16x256xf32>
    %37 = arith.mulf %36, %25 : vector<16x256xf32>
    %38 = arith.addf %29, %35 : vector<16x256xf32>
    %39 = arith.addf %38, %37 : vector<16x256xf32>
    %c0_17 = arith.constant 0 : index
    %c0_18 = arith.constant 0 : index
    %40 = vector.load %arg4[%c0_17, %c0_18] : memref<1x256xf32, #tpu.memory_space<vmem>>, vector<1x256xf32>
    %41 = vector.broadcast %40 : vector<1x256xf32> to vector<16x256xf32>
    %42 = arith.addf %39, %41 : vector<16x256xf32>
    %cst_19 = arith.constant dense<0.000000e+00> : vector<256xf32>
    %43 = vector.multi_reduction <add>, %42, %cst_19 [0] : vector<16x256xf32> to vector<256xf32>
    %44 = vector.shape_cast %43 : vector<256xf32> to vector<1x256xf32>
    %45 = arith.mulf %42, %42 : vector<16x256xf32>
    %cst_20 = arith.constant dense<0.000000e+00> : vector<256xf32>
    %46 = vector.multi_reduction <add>, %45, %cst_20 [0] : vector<16x256xf32> to vector<256xf32>
    %47 = vector.shape_cast %46 : vector<256xf32> to vector<1x256xf32>
    %48 = tpu.concatenate %44, %47 in 0 : vector<1x256xf32>, vector<1x256xf32> -> vector<2x256xf32>
    %c0_21 = arith.constant 0 : index
    %c0_22 = arith.constant 0 : index
    %49 = vector.load %arg14[%c0_21, %c0_22] : memref<256x4xf32, #tpu.memory_space<vmem>>, vector<256x4xf32>
    %cst_23 = arith.constant dense<0.000000e+00> : vector<2x4xf32>
    %50 = tpu.matmul %48, %49, %cst_23 {dimension_numbers = #tpu.dot_dimension_numbers<[1], [0], [0], [1], [0, 0, 1, 1], [], []>} : vector<2x256xf32>, vector<256x4xf32>, vector<2x4xf32> -> vector<2x4xf32>
    %cst_24 = arith.constant 9.765625E-4 : f32
    %51 = vector.broadcast %cst_24 : f32 to vector<2x4xf32>
    %52 = arith.mulf %50, %51 : vector<2x4xf32>
    %53 = vector.extract_strided_slice %52 {offsets = [0, 0], sizes = [1, 4], strides = [1, 1]} : vector<2x4xf32> to vector<1x4xf32>
    %54 = vector.extract_strided_slice %52 {offsets = [1, 0], sizes = [1, 4], strides = [1, 1]} : vector<2x4xf32> to vector<1x4xf32>
    %55 = arith.mulf %53, %53 : vector<1x4xf32>
    %56 = arith.subf %54, %55 : vector<1x4xf32>
    %c0_25 = arith.constant 0 : index
    %c0_26 = arith.constant 0 : index
    %57 = vector.load %arg5[%c0_25, %c0_26] : memref<1x4xf32, #tpu.memory_space<vmem>>, vector<1x4xf32>
    %cst_27 = arith.constant 9.99999974E-6 : f32
    %58 = vector.broadcast %cst_27 : f32 to vector<1x4xf32>
    %59 = arith.addf %56, %58 : vector<1x4xf32>
    %60 = math.rsqrt %59 : vector<1x4xf32>
    %61 = arith.mulf %57, %60 : vector<1x4xf32>
    %c0_28 = arith.constant 0 : index
    %c0_29 = arith.constant 0 : index
    %62 = vector.load %arg6[%c0_28, %c0_29] : memref<1x4xf32, #tpu.memory_space<vmem>>, vector<1x4xf32>
    %63 = arith.mulf %53, %61 : vector<1x4xf32>
    %64 = arith.subf %62, %63 : vector<1x4xf32>
    %65 = tpu.concatenate %61, %64 in 0 : vector<1x4xf32>, vector<1x4xf32> -> vector<2x4xf32>
    %c0_30 = arith.constant 0 : index
    %c0_31 = arith.constant 0 : index
    %66 = vector.load %arg15[%c0_30, %c0_31] : memref<4x256xf32, #tpu.memory_space<vmem>>, vector<4x256xf32>
    %cst_32 = arith.constant dense<0.000000e+00> : vector<2x256xf32>
    %67 = tpu.matmul %65, %66, %cst_32 {dimension_numbers = #tpu.dot_dimension_numbers<[1], [0], [0], [1], [0, 0, 1, 1], [], []>} : vector<2x4xf32>, vector<4x256xf32>, vector<2x256xf32> -> vector<2x256xf32>
    %68 = vector.extract_strided_slice %67 {offsets = [0, 0], sizes = [1, 256], strides = [1, 1]} : vector<2x256xf32> to vector<1x256xf32>
    %69 = vector.broadcast %68 : vector<1x256xf32> to vector<16x256xf32>
    %70 = arith.mulf %42, %69 : vector<16x256xf32>
    %71 = vector.extract_strided_slice %67 {offsets = [1, 0], sizes = [1, 256], strides = [1, 1]} : vector<2x256xf32> to vector<1x256xf32>
    %72 = vector.broadcast %71 : vector<1x256xf32> to vector<16x256xf32>
    %73 = arith.addf %70, %72 : vector<16x256xf32>
    %cst_33 = arith.constant 0.000000e+00 : f32
    %74 = vector.broadcast %cst_33 : f32 to vector<16x256xf32>
    %75 = arith.maximumf %73, %74 : vector<16x256xf32>
    %c0_34 = arith.constant 0 : index
    %c0_35 = arith.constant 0 : index
    %76 = vector.load %arg13[%c0_34, %c0_35] : memref<256x512xf32, #tpu.memory_space<vmem>>, vector<256x512xf32>
    %cst_36 = arith.constant dense<0.000000e+00> : vector<16x512xf32>
    %77 = tpu.matmul %75, %76, %cst_36 {dimension_numbers = #tpu.dot_dimension_numbers<[1], [0], [0], [1], [0, 0, 1, 1], [], []>} : vector<16x256xf32>, vector<256x512xf32>, vector<16x512xf32> -> vector<16x512xf32>
    %c0_37 = arith.constant 0 : index
    %c0_38 = arith.constant 0 : index
    %78 = vector.load %arg8[%c0_37, %c0_38] : memref<512x256xf32, #tpu.memory_space<vmem>>, vector<512x256xf32>
    %cst_39 = arith.constant dense<0.000000e+00> : vector<16x256xf32>
    %79 = tpu.matmul %77, %78, %cst_39 {dimension_numbers = #tpu.dot_dimension_numbers<[1], [0], [0], [1], [0, 0, 1, 1], [], []>} : vector<16x512xf32>, vector<512x256xf32>, vector<16x256xf32> -> vector<16x256xf32>
    %c0_40 = arith.constant 0 : index
    %c0_41 = arith.constant 0 : index
    %80 = vector.load %arg7[%c0_40, %c0_41] : memref<512x256xf32, #tpu.memory_space<vmem>>, vector<512x256xf32>
    %cst_42 = arith.constant dense<0.000000e+00> : vector<16x256xf32>
    %81 = tpu.matmul %77, %80, %cst_42 {dimension_numbers = #tpu.dot_dimension_numbers<[1], [0], [0], [1], [0, 0, 1, 1], [], []>} : vector<16x512xf32>, vector<512x256xf32>, vector<16x256xf32> -> vector<16x256xf32>
    %c0_43 = arith.constant 0 : index
    %c0_44 = arith.constant 0 : index
    %82 = vector.load %arg9[%c0_43, %c0_44] : memref<512x256xf32, #tpu.memory_space<vmem>>, vector<512x256xf32>
    %cst_45 = arith.constant dense<0.000000e+00> : vector<16x256xf32>
    %83 = tpu.matmul %77, %82, %cst_45 {dimension_numbers = #tpu.dot_dimension_numbers<[1], [0], [0], [1], [0, 0, 1, 1], [], []>} : vector<16x512xf32>, vector<512x256xf32>, vector<16x256xf32> -> vector<16x256xf32>
    %c1_i32_46 = arith.constant 1 : i32
    %84 = tpu.dynamic_rotate %81 by %c1_i32_46 dim 0 : vector<16x256xf32>, i32 -> vector<16x256xf32>
    %85 = arith.mulf %84, %21 : vector<16x256xf32>
    %c15_i32_47 = arith.constant 15 : i32
    %86 = tpu.dynamic_rotate %83 by %c15_i32_47 dim 0 : vector<16x256xf32>, i32 -> vector<16x256xf32>
    %87 = arith.mulf %86, %25 : vector<16x256xf32>
    %88 = arith.addf %79, %85 : vector<16x256xf32>
    %89 = arith.addf %88, %87 : vector<16x256xf32>
    %c0_48 = arith.constant 0 : index
    %c0_49 = arith.constant 0 : index
    %90 = vector.load %arg10[%c0_48, %c0_49] : memref<1x256xf32, #tpu.memory_space<vmem>>, vector<1x256xf32>
    %91 = vector.broadcast %90 : vector<1x256xf32> to vector<16x256xf32>
    %92 = arith.addf %89, %91 : vector<16x256xf32>
    %cst_50 = arith.constant dense<0.000000e+00> : vector<256xf32>
    %93 = vector.multi_reduction <add>, %92, %cst_50 [0] : vector<16x256xf32> to vector<256xf32>
    %94 = vector.shape_cast %93 : vector<256xf32> to vector<1x256xf32>
    %95 = arith.mulf %92, %92 : vector<16x256xf32>
    %cst_51 = arith.constant dense<0.000000e+00> : vector<256xf32>
    %96 = vector.multi_reduction <add>, %95, %cst_51 [0] : vector<16x256xf32> to vector<256xf32>
    %97 = vector.shape_cast %96 : vector<256xf32> to vector<1x256xf32>
    %98 = tpu.concatenate %94, %97 in 0 : vector<1x256xf32>, vector<1x256xf32> -> vector<2x256xf32>
    %c0_52 = arith.constant 0 : index
    %c0_53 = arith.constant 0 : index
    %99 = vector.load %arg14[%c0_52, %c0_53] : memref<256x4xf32, #tpu.memory_space<vmem>>, vector<256x4xf32>
    %cst_54 = arith.constant dense<0.000000e+00> : vector<2x4xf32>
    %100 = tpu.matmul %98, %99, %cst_54 {dimension_numbers = #tpu.dot_dimension_numbers<[1], [0], [0], [1], [0, 0, 1, 1], [], []>} : vector<2x256xf32>, vector<256x4xf32>, vector<2x4xf32> -> vector<2x4xf32>
    %cst_55 = arith.constant 9.765625E-4 : f32
    %101 = vector.broadcast %cst_55 : f32 to vector<2x4xf32>
    %102 = arith.mulf %100, %101 : vector<2x4xf32>
    %103 = vector.extract_strided_slice %102 {offsets = [0, 0], sizes = [1, 4], strides = [1, 1]} : vector<2x4xf32> to vector<1x4xf32>
    %104 = vector.extract_strided_slice %102 {offsets = [1, 0], sizes = [1, 4], strides = [1, 1]} : vector<2x4xf32> to vector<1x4xf32>
    %105 = arith.mulf %103, %103 : vector<1x4xf32>
    %106 = arith.subf %104, %105 : vector<1x4xf32>
    %c0_56 = arith.constant 0 : index
    %c0_57 = arith.constant 0 : index
    %107 = vector.load %arg11[%c0_56, %c0_57] : memref<1x4xf32, #tpu.memory_space<vmem>>, vector<1x4xf32>
    %cst_58 = arith.constant 9.99999974E-6 : f32
    %108 = vector.broadcast %cst_58 : f32 to vector<1x4xf32>
    %109 = arith.addf %106, %108 : vector<1x4xf32>
    %110 = math.rsqrt %109 : vector<1x4xf32>
    %111 = arith.mulf %107, %110 : vector<1x4xf32>
    %c0_59 = arith.constant 0 : index
    %c0_60 = arith.constant 0 : index
    %112 = vector.load %arg12[%c0_59, %c0_60] : memref<1x4xf32, #tpu.memory_space<vmem>>, vector<1x4xf32>
    %113 = arith.mulf %103, %111 : vector<1x4xf32>
    %114 = arith.subf %112, %113 : vector<1x4xf32>
    %115 = tpu.concatenate %111, %114 in 0 : vector<1x4xf32>, vector<1x4xf32> -> vector<2x4xf32>
    %c0_61 = arith.constant 0 : index
    %c0_62 = arith.constant 0 : index
    %116 = vector.load %arg15[%c0_61, %c0_62] : memref<4x256xf32, #tpu.memory_space<vmem>>, vector<4x256xf32>
    %cst_63 = arith.constant dense<0.000000e+00> : vector<2x256xf32>
    %117 = tpu.matmul %115, %116, %cst_63 {dimension_numbers = #tpu.dot_dimension_numbers<[1], [0], [0], [1], [0, 0, 1, 1], [], []>} : vector<2x4xf32>, vector<4x256xf32>, vector<2x256xf32> -> vector<2x256xf32>
    %118 = vector.extract_strided_slice %117 {offsets = [0, 0], sizes = [1, 256], strides = [1, 1]} : vector<2x256xf32> to vector<1x256xf32>
    %119 = vector.broadcast %118 : vector<1x256xf32> to vector<16x256xf32>
    %120 = arith.mulf %92, %119 : vector<16x256xf32>
    %121 = vector.extract_strided_slice %117 {offsets = [1, 0], sizes = [1, 256], strides = [1, 1]} : vector<2x256xf32> to vector<1x256xf32>
    %122 = vector.broadcast %121 : vector<1x256xf32> to vector<16x256xf32>
    %123 = arith.addf %120, %122 : vector<16x256xf32>
    %124 = arith.addf %0, %123 : vector<16x256xf32>
    %cst_64 = arith.constant 0.000000e+00 : f32
    %125 = vector.broadcast %cst_64 : f32 to vector<16x256xf32>
    %126 = arith.maximumf %124, %125 : vector<16x256xf32>
    %c0_65 = arith.constant 0 : index
    %c0_66 = arith.constant 0 : index
    %127 = vector.load %arg16[%c0_65, %c0_66] : memref<16x256xf32, #tpu.memory_space<vmem>>, vector<16x256xf32>
    tpu.vector_store %arg16[%c0_65, %c0_66], %126 {strides = array<i32>} : memref<16x256xf32, #tpu.memory_space<vmem>>, vector<16x256xf32>,
    return
  }
}

</mosaic_0001>

<llo_original>
// kernel: basic_block_forward.1
$region0: #{basic_block_forward.1}
  #allocation0 [shape = 'u32[]', space=smem, size = 0x4, offset = 0x4, fixed_abs, tag = 'smem constant byte address 0x4 - core index']
  #allocation1 [shape = 'u32[144,128]{1,0:T(1,128)}', space=vmem, size = 0x12000, scoped, tag = 'internal scratch']
  %s0 = inlined_call_operand.vmem [shape: f32[16,256], index: 0, kind: input, shape index: {}]
  %s1 = inlined_call_operand.vmem [shape: f32[512,256], index: 1, kind: input, shape index: {}]
  %s2 = inlined_call_operand.vmem [shape: f32[512,256], index: 2, kind: input, shape index: {}]
  %s3 = inlined_call_operand.hbm [shape: f32[512,256], index: 3, kind: input, shape index: {}]
  %s4 = inlined_call_operand.vmem [shape: f32[1,256], index: 4, kind: input, shape index: {}]
  %s5 = inlined_call_operand.vmem [shape: f32[1,4], index: 5, kind: input, shape index: {}]
  %s6 = inlined_call_operand.vmem [shape: f32[1,4], index: 6, kind: input, shape index: {}]
  %s7 = inlined_call_operand.hbm [shape: f32[512,256], index: 7, kind: input, shape index: {}]
  %s8 = inlined_call_operand.hbm [shape: f32[512,256], index: 8, kind: input, shape index: {}]
  %s9 = inlined_call_operand.hbm [shape: f32[512,256], index: 9, kind: input, shape index: {}]
  %s10 = inlined_call_operand.vmem [shape: f32[1,256], index: 10, kind: input, shape index: {}]
  %s11 = inlined_call_operand.vmem [shape: f32[1,4], index: 11, kind: input, shape index: {}]
  %s12 = inlined_call_operand.vmem [shape: f32[1,4], index: 12, kind: input, shape index: {}]
  %s13 = inlined_call_operand.hbm [shape: f32[256,512], index: 13, kind: input, shape index: {}]
  %s14 = inlined_call_operand.vmem [shape: f32[256,4], index: 14, kind: input, shape index: {}]
  %s15 = inlined_call_operand.vmem [shape: f32[4,256], index: 15, kind: input, shape index: {}]
  %s16 = inlined_call_operand.vmem [shape: f32[16,256], index: 16, kind: output, shape index: {}]
  %s17 = sld [smem:[#allocation0]]
  $region94: #{basic_block_forward.1} parent=0
    _
  %s19 = ssub.s32 1, %s17
  %s20 = scalar_select 0, %s19, %s17
  $region1: #{basic_block_forward.1} parent=0
    #allocation2 [shape = 'u8[524288]{0}', space=vmem, size = 0x80000, scoped, tag = 'input window, operand 3, single buffered']
    #allocation3 [shape = 's32[1]{0}', space=sflag, size = 0x4, scoped, tag = 'scoped memory for basic_block_forward.1']
    #allocation4 [shape = 'u8[524288]{0}', space=vmem, size = 0x80000, scoped, tag = 'input window, operand 7, single buffered']
    #allocation5 [shape = 's32[1]{0}', space=sflag, size = 0x4, scoped, tag = 'scoped memory for basic_block_forward.1']
    #allocation6 [shape = 'u8[524288]{0}', space=vmem, size = 0x80000, scoped, tag = 'input window, operand 8, single buffered']
    #allocation7 [shape = 'u8[524288]{0}', space=vmem, size = 0x80000, scoped, tag = 'input window, operand 9, single buffered']
    #allocation8 [shape = 's32[1]{0}', space=sflag, size = 0x4, scoped, tag = 'scoped memory for basic_block_forward.1']
    #allocation9 [shape = 'u8[524288]{0}', space=vmem, size = 0x80000, scoped, tag = 'input window, operand 13, single buffered']
    %21 = vsyncpa [#allocation3], 0
    %22 = vsyncpa [#allocation5], 0
    %23 = vsyncpa [#allocation8], 0
    // Predicated region
    $region2: #{basic_block_forward.1} parent=1 // pred_check
      _
    $region3: #{basic_block_forward.1} parent=1 // pred_check_branch
      %25 = sbr.rel (0) target = $region5
    $region4: #{basic_block_forward.1} parent=1 // pred_region
      _
    $region5: #{basic_block_forward.1} parent=1 // pred_fallthru
      _
    // Predicated region
    $region6: #{basic_block_forward.1} parent=1 // pred_check
      _
    $region7: #{basic_block_forward.1} parent=1 // pred_check_branch
      %27 = sbr.rel (0) target = $region9
    $region8: #{basic_block_forward.1} parent=1 // pred_region
      _
    $region9: #{basic_block_forward.1} parent=1 // pred_fallthru
      _
    // Predicated region
    $region10: #{basic_block_forward.1} parent=1 // pred_check
      _
    $region11: #{basic_block_forward.1} parent=1 // pred_check_branch
      %29 = sbr.rel (0) target = $region13
    $region12: #{basic_block_forward.1} parent=1 // pred_region
      _
    $region13: #{basic_block_forward.1} parent=1 // pred_fallthru
      _
    // Predicated region
    $region14: #{basic_block_forward.1} parent=1 // pred_check
      _
    $region15: #{basic_block_forward.1} parent=1 // pred_check_branch
      %31 = sbr.rel (0) target = $region17
    $region16: #{basic_block_forward.1} parent=1 // pred_region
      %s33 = ssub.s32 16384, 16384
      %34 = vsyncadd [#allocation3], %s33
      %s35 = sshll.u32 [#allocation2], 4
      %s36 = int_to_ptr.vmem [resolvable:$true] %s35
      %41 = dma.hbm_to_vmem [thread:$0]  %s3, 16384, %s36, [#allocation3], 256, 256, 16
    $region17: #{basic_block_forward.1} parent=1 // pred_fallthru
      _
    // Predicated region
    $region18: #{basic_block_forward.1} parent=1 // pred_check
      _
    $region19: #{basic_block_forward.1} parent=1 // pred_check_branch
      %43 = sbr.rel (0) target = $region21
    $region20: #{basic_block_forward.1} parent=1 // pred_region
      _
    $region21: #{basic_block_forward.1} parent=1 // pred_fallthru
      _
    // Predicated region
    $region22: #{basic_block_forward.1} parent=1 // pred_check
      _
    $region23: #{basic_block_forward.1} parent=1 // pred_check_branch
      %45 = sbr.rel (0) target = $region25
    $region24: #{basic_block_forward.1} parent=1 // pred_region
      _
    $region25: #{basic_block_forward.1} parent=1 // pred_fallthru
      _
    // Predicated region
    $region26: #{basic_block_forward.1} parent=1 // pred_check
      _
    $region27: #{basic_block_forward.1} parent=1 // pred_check_branch
      %47 = sbr.rel (0) target = $region29
    $region28: #{basic_block_forward.1} parent=1 // pred_region
      _
    $region29: #{basic_block_forward.1} parent=1 // pred_fallthru
      _
    // Predicated region
    $region30: #{basic_block_forward.1} parent=1 // pred_check
      _
    $region31: #{basic_block_forward.1} parent=1 // pred_check_branch
      %49 = sbr.rel (0) target = $region33
    $region32: #{basic_block_forward.1} parent=1 // pred_region
      %s51 = ssub.s32 16384, 16384
      %52 = vsyncadd [#allocation5], %s51
      %s53 = sshll.u32 [#allocation4], 4
      %s54 = int_to_ptr.vmem [resolvable:$true] %s53
      %59 = dma.hbm_to_vmem [thread:$0]  %s7, 16384, %s54, [#allocation5], 256, 256, 16
    $region33: #{basic_block_forward.1} parent=1 // pred_fallthru
      _
    // Predicated region
    $region34: #{basic_block_forward.1} parent=1 // pred_check
      _
    $region35: #{basic_block_forward.1} parent=1 // pred_check_branch
      %61 = sbr.rel (0) target = $region37
    $region36: #{basic_block_forward.1} parent=1 // pred_region
      %s63 = ssub.s32 16384, 16384
      %64 = vsyncadd [#allocation5], %s63
      %s65 = sshll.u32 [#allocation6], 4
      %s66 = int_to_ptr.vmem [resolvable:$true] %s65
      %71 = dma.hbm_to_vmem [thread:$0]  %s8, 16384, %s66, [#allocation5], 256, 256, 16
    $region37: #{basic_block_forward.1} parent=1 // pred_fallthru
      _
    // Predicated region
    $region38: #{basic_block_forward.1} parent=1 // pred_check
      _
    $region39: #{basic_block_forward.1} parent=1 // pred_check_branch
      %73 = sbr.rel (0) target = $region41
    $region40: #{basic_block_forward.1} parent=1 // pred_region
      %s75 = ssub.s32 16384, 16384
      %76 = vsyncadd [#allocation8], %s75
      %s77 = sshll.u32 [#allocation7], 4
      %s78 = int_to_ptr.vmem [resolvable:$true] %s77
      %83 = dma.hbm_to_vmem [thread:$0]  %s9, 16384, %s78, [#allocation8], 256, 256, 16
    $region41: #{basic_block_forward.1} parent=1 // pred_fallthru
      _
    // Predicated region
    $region42: #{basic_block_forward.1} parent=1 // pred_check
      _
    $region43: #{basic_block_forward.1} parent=1 // pred_check_branch
      %85 = sbr.rel (0) target = $region45
    $region44: #{basic_block_forward.1} parent=1 // pred_region
      _
    $region45: #{basic_block_forward.1} parent=1 // pred_fallthru
      _
    // Predicated region
    $region46: #{basic_block_forward.1} parent=1 // pred_check
      _
    $region47: #{basic_block_forward.1} parent=1 // pred_check_branch
      %87 = sbr.rel (0) target = $region49
    $region48: #{basic_block_forward.1} parent=1 // pred_region
      _
    $region49: #{basic_block_forward.1} parent=1 // pred_fallthru
      _
    // Predicated region
    $region50: #{basic_block_forward.1} parent=1 // pred_check
      _
    $region51: #{basic_block_forward.1} parent=1 // pred_check_branch
      %89 = sbr.rel (0) target = $region53
    $region52: #{basic_block_forward.1} parent=1 // pred_region
      _
    $region53: #{basic_block_forward.1} parent=1 // pred_fallthru
      _
    // Predicated region
    $region54: #{basic_block_forward.1} parent=1 // pred_check
      _
    $region55: #{basic_block_forward.1} parent=1 // pred_check_branch
      %91 = sbr.rel (0) target = $region57
    $region56: #{basic_block_forward.1} parent=1 // pred_region
      %s93 = ssub.s32 16384, 16384
      %94 = vsyncadd [#allocation8], %s93
      %s95 = sshll.u32 [#allocation9], 4
      %s96 = int_to_ptr.vmem [resolvable:$true] %s95
      %101 = dma.hbm_to_vmem [thread:$0]  %s13, 16384, %s96, [#allocation8], 512, 512, 32
    $region57: #{basic_block_forward.1} parent=1 // pred_fallthru
      _
    // Predicated region
    $region58: #{basic_block_forward.1} parent=1 // pred_check
      _
    $region59: #{basic_block_forward.1} parent=1 // pred_check_branch
      %103 = sbr.rel (0) target = $region61
    $region60: #{basic_block_forward.1} parent=1 // pred_region
      _
    $region61: #{basic_block_forward.1} parent=1 // pred_fallthru
      _
    // Predicated region
    $region62: #{basic_block_forward.1} parent=1 // pred_check
      _
    $region63: #{basic_block_forward.1} parent=1 // pred_check_branch
      %105 = sbr.rel (0) target = $region65
    $region64: #{basic_block_forward.1} parent=1 // pred_region
      _
    $region65: #{basic_block_forward.1} parent=1 // pred_fallthru
      _
    // Predicated region
    $region66: #{basic_block_forward.1} parent=1 // pred_check
      _
    $region67: #{basic_block_forward.1} parent=1 // pred_check_branch
      %107 = sbr.rel (0) target = $region69
    $region68: #{basic_block_forward.1} parent=1 // pred_region
      %108 = dma.done [#allocation3], 16384
    $region69: #{basic_block_forward.1} parent=1 // pred_fallthru
      _
    // Predicated region
    $region70: #{basic_block_forward.1} parent=1 // pred_check
      _
    $region71: #{basic_block_forward.1} parent=1 // pred_check_branch
      %110 = sbr.rel (0) target = $region73
    $region72: #{basic_block_forward.1} parent=1 // pred_region
      %111 = dma.done [#allocation5], 16384
    $region73: #{basic_block_forward.1} parent=1 // pred_fallthru
      _
    // Predicated region
    $region74: #{basic_block_forward.1} parent=1 // pred_check
      _
    $region75: #{basic_block_forward.1} parent=1 // pred_check_branch
      %113 = sbr.rel (0) target = $region77
    $region76: #{basic_block_forward.1} parent=1 // pred_region
      %114 = dma.done [#allocation5], 16384
    $region77: #{basic_block_forward.1} parent=1 // pred_fallthru
      _
    // Predicated region
    $region78: #{basic_block_forward.1} parent=1 // pred_check
      _
    $region79: #{basic_block_forward.1} parent=1 // pred_check_branch
      %116 = sbr.rel (0) target = $region81
    $region80: #{basic_block_forward.1} parent=1 // pred_region
      %117 = dma.done [#allocation8], 16384
    $region81: #{basic_block_forward.1} parent=1 // pred_fallthru
      _
    // Predicated region
    $region82: #{basic_block_forward.1} parent=1 // pred_check
      _
    $region83: #{basic_block_forward.1} parent=1 // pred_check_branch
      %119 = sbr.rel (0) target = $region85
    $region84: #{basic_block_forward.1} parent=1 // pred_region
      %120 = dma.done [#allocation8], 16384
    $region85: #{basic_block_forward.1} parent=1 // pred_fallthru
      _
    %v121 = vld [vmem:[%s0] sm:$0xff]
    %v122 = vld [vmem:[%s0 + $0x8] sm:$0xff]
    %v123 = vld [vmem:[%s0 + $0x10] sm:$0xff]
    %v124 = vld [vmem:[%s0 + $0x18] sm:$0xff]
    %v125 = vlaneseq
    %v126 = vshrl.u32 %v125, 7
    %v127 = vadd.s32 %v126, 8
    %vm128 = vcmp.lt.s32.totalorder %v126, 0
    %v129 = vsub.s32 0, %v126
    %v130 = vsel %vm128, %v129, %v126
    %v131 = vshrl.u32 %v130, 3
    %v132 = vand.u32 %v130, 7
    %v133 = vsub.s32 0, %v132
    %v134 = vsel %vm128, %v133, %v132
    %vm135 = vcmp.lt.s32.totalorder %v127, 0
    %v136 = vsub.s32 0, %v127
    %v137 = vsel %vm135, %v136, %v127
    %v138 = vshrl.u32 %v137, 3
    %v139 = vand.u32 %v137, 7
    %v140 = vsub.s32 0, %v139
    %v141 = vsel %vm135, %v140, %v139
    %vm142 = vcmp.ne.s32.totalorder %v134, 0
    %vm143 = vcmp.ne.s32.totalorder %v141, 0
    %vm144 = vcmp.lt.s32.totalorder %v134, 0
    %vm145 = vcmp.lt.s32.totalorder %v141, 0
    %vm146 = vmand %vm144, %vm142
    %vm147 = vmand %vm145, %vm143
    %v148 = vadd.s32 %v134, 8
    %v149 = vadd.s32 %v141, 8
    %v150 = vsel %vm146, %v148, %v134
    %v151 = vsel %vm147, %v149, %v141
    %vm152 = vcmp.ne.s32.totalorder %v150, 0
    %vm153 = vcmp.ne.s32.totalorder %v151, 0
    %v154 = vsel %vm152, 1, 0
    %v155 = vsel %vm153, 1, 0
    %v156 = vcvt.s32.f32 %v154
    %v157 = vcvt.s32.f32 %v155
    %vm158 = vcmp.ne.s32.totalorder %v150, 7
    %vm159 = vcmp.ne.s32.totalorder %v151, 7
    %v160 = vsel %vm158, 1, 0
    %v161 = vsel %vm159, 1, 0
    %v162 = vcvt.s32.f32 %v160
    %v163 = vcvt.s32.f32 %v161
    %v164 = vld [vmem:[#allocation9] sm:$0xff]
    %v165 = vld [vmem:[#allocation9 + $0x8] sm:$0xff]
    %v166 = vld [vmem:[#allocation9 + $0x10] sm:$0xff]
    %v167 = vld [vmem:[#allocation9 + $0x18] sm:$0xff]
    %v168 = vld [vmem:[#allocation9 + $0x20] sm:$0xff]
    %v169 = vld [vmem:[#allocation9 + $0x28] sm:$0xff]
    %v170 = vld [vmem:[#allocation9 + $0x30] sm:$0xff]
    %v171 = vld [vmem:[#allocation9 + $0x38] sm:$0xff]
    %v172 = vld [vmem:[#allocation9 + $0x40] sm:$0xff]
    %v173 = vld [vmem:[#allocation9 + $0x48] sm:$0xff]
    %v174 = vld [vmem:[#allocation9 + $0x50] sm:$0xff]
    %v175 = vld [vmem:[#allocation9 + $0x58] sm:$0xff]
    %v176 = vld [vmem:[#allocation9 + $0x60] sm:$0xff]
    %v177 = vld [vmem:[#allocation9 + $0x68] sm:$0xff]
    %v178 = vld [vmem:[#allocation9 + $0x70] sm:$0xff]
    %v179 = vld [vmem:[#allocation9 + $0x78] sm:$0xff]
    %v180 = vld [vmem:[#allocation9 + $0x80] sm:$0xff]
    %v181 = vld [vmem:[#allocation9 + $0x88] sm:$0xff]
    %v182 = vld [vmem:[#allocation9 + $0x90] sm:$0xff]
    %v183 = vld [vmem:[#allocation9 + $0x98] sm:$0xff]
    %v184 = vld [vmem:[#allocation9 + $0xa0] sm:$0xff]
    %v185 = vld [vmem:[#allocation9 + $0xa8] sm:$0xff]
    %v186 = vld [vmem:[#allocation9 + $0xb0] sm:$0xff]
    %v187 = vld [vmem:[#allocation9 + $0xb8] sm:$0xff]
    %v188 = vld [vmem:[#allocation9 + $0xc0] sm:$0xff]
    %v189 = vld [vmem:[#allocation9 + $0xc8] sm:$0xff]
    %v190 = vld [vmem:[#allocation9 + $0xd0] sm:$0xff]
    %v191 = vld [vmem:[#allocation9 + $0xd8] sm:$0xff]
    %v192 = vld [vmem:[#allocation9 + $0xe0] sm:$0xff]
    %v193 = vld [vmem:[#allocation9 + $0xe8] sm:$0xff]
    %v194 = vld [vmem:[#allocation9 + $0xf0] sm:$0xff]
    %v195 = vld [vmem:[#allocation9 + $0xf8] sm:$0xff]
    %v196 = vld [vmem:[#allocation9 + $0x100] sm:$0xff]
    %v197 = vld [vmem:[#allocation9 + $0x108] sm:$0xff]
    %v198 = vld [vmem:[#allocation9 + $0x110] sm:$0xff]
    %v199 = vld [vmem:[#allocation9 + $0x118] sm:$0xff]
    %v200 = vld [vmem:[#allocation9 + $0x120] sm:$0xff]
    %v201 = vld [vmem:[#allocation9 + $0x128] sm:$0xff]
    %v202 = vld [vmem:[#allocation9 + $0x130] sm:$0xff]
    %v203 = vld [vmem:[#allocation9 + $0x138] sm:$0xff]
    %v204 = vld [vmem:[#allocation9 + $0x140] sm:$0xff]
    %v205 = vld [vmem:[#allocation9 + $0x148] sm:$0xff]
    %v206 = vld [vmem:[#allocation9 + $0x150] sm:$0xff]
    %v207 = vld [vmem:[#allocation9 + $0x158] sm:$0xff]
    %v208 = vld [vmem:[#allocation9 + $0x160] sm:$0xff]
    %v209 = vld [vmem:[#allocation9 + $0x168] sm:$0xff]
    %v210 = vld [vmem:[#allocation9 + $0x170] sm:$0xff]
    %v211 = vld [vmem:[#allocation9 + $0x178] sm:$0xff]
    %v212 = vld [vmem:[#allocation9 + $0x180] sm:$0xff]
    %v213 = vld [vmem:[#allocation9 + $0x188] sm:$0xff]
    %v214 = vld [vmem:[#allocation9 + $0x190] sm:$0xff]
    %v215 = vld [vmem:[#allocation9 + $0x198] sm:$0xff]
    %v216 = vld [vmem:[#allocation9 + $0x1a0] sm:$0xff]
    %v217 = vld [vmem:[#allocation9 + $0x1a8] sm:$0xff]
    %v218 = vld [vmem:[#allocation9 + $0x1b0] sm:$0xff]
    %v219 = vld [vmem:[#allocation9 + $0x1b8] sm:$0xff]
    %v220 = vld [vmem:[#allocation9 + $0x1c0] sm:$0xff]
    %v221 = vld [vmem:[#allocation9 + $0x1c8] sm:$0xff]
    %v222 = vld [vmem:[#allocation9 + $0x1d0] sm:$0xff]
    %v223 = vld [vmem:[#allocation9 + $0x1d8] sm:$0xff]
    %v224 = vld [vmem:[#allocation9 + $0x1e0] sm:$0xff]
    %v225 = vld [vmem:[#allocation9 + $0x1e8] sm:$0xff]
    %v226 = vld [vmem:[#allocation9 + $0x1f0] sm:$0xff]
    %v227 = vld [vmem:[#allocation9 + $0x1f8] sm:$0xff]
    %v228 = vld [vmem:[#allocation9 + $0x200] sm:$0xff]
    %v229 = vld [vmem:[#allocation9 + $0x208] sm:$0xff]
    %v230 = vld [vmem:[#allocation9 + $0x210] sm:$0xff]
    %v231 = vld [vmem:[#allocation9 + $0x218] sm:$0xff]
    %v232 = vld [vmem:[#allocation9 + $0x220] sm:$0xff]
    %v233 = vld [vmem:[#allocation9 + $0x228] sm:$0xff]
    %v234 = vld [vmem:[#allocation9 + $0x230] sm:$0xff]
    %v235 = vld [vmem:[#allocation9 + $0x238] sm:$0xff]
    %v236 = vld [vmem:[#allocation9 + $0x240] sm:$0xff]
    %v237 = vld [vmem:[#allocation9 + $0x248] sm:$0xff]
    %v238 = vld [vmem:[#allocation9 + $0x250] sm:$0xff]
    %v239 = vld [vmem:[#allocation9 + $0x258] sm:$0xff]
    %v240 = vld [vmem:[#allocation9 + $0x260] sm:$0xff]
    %v241 = vld [vmem:[#allocation9 + $0x268] sm:$0xff]
    %v242 = vld [vmem:[#allocation9 + $0x270] sm:$0xff]
    %v243 = vld [vmem:[#allocation9 + $0x278] sm:$0xff]
    %v244 = vld [vmem:[#allocation9 + $0x280] sm:$0xff]
    %v245 = vld [vmem:[#allocation9 + $0x288] sm:$0xff]
    %v246 = vld [vmem:[#allocation9 + $0x290] sm:$0xff]
    %v247 = vld [vmem:[#allocation9 + $0x298] sm:$0xff]
    %v248 = vld [vmem:[#allocation9 + $0x2a0] sm:$0xff]
    %v249 = vld [vmem:[#allocation9 + $0x2a8] sm:$0xff]
    %v250 = vld [vmem:[#allocation9 + $0x2b0] sm:$0xff]
    %v251 = vld [vmem:[#allocation9 + $0x2b8] sm:$0xff]
    %v252 = vld [vmem:[#allocation9 + $0x2c0] sm:$0xff]
    %v253 = vld [vmem:[#allocation9 + $0x2c8] sm:$0xff]
    %v254 = vld [vmem:[#allocation9 + $0x2d0] sm:$0xff]
    %v255 = vld [vmem:[#allocation9 + $0x2d8] sm:$0xff]
    %v256 = vld [vmem:[#allocation9 + $0x2e0] sm:$0xff]
    %v257 = vld [vmem:[#allocation9 + $0x2e8] sm:$0xff]
    %v258 = vld [vmem:[#allocation9 + $0x2f0] sm:$0xff]
    %v259 = vld [vmem:[#allocation9 + $0x2f8] sm:$0xff]
    %v260 = vld [vmem:[#allocation9 + $0x300] sm:$0xff]
    %v261 = vld [vmem:[#allocation9 + $0x308] sm:$0xff]
    %v262 = vld [vmem:[#allocation9 + $0x310] sm:$0xff]
    %v263 = vld [vmem:[#allocation9 + $0x318] sm:$0xff]
    %v264 = vld [vmem:[#allocation9 + $0x320] sm:$0xff]
    %v265 = vld [vmem:[#allocation9 + $0x328] sm:$0xff]
    %v266 = vld [vmem:[#allocation9 + $0x330] sm:$0xff]
    %v267 = vld [vmem:[#allocation9 + $0x338] sm:$0xff]
    %v268 = vld [vmem:[#allocation9 + $0x340] sm:$0xff]
    %v269 = vld [vmem:[#allocation9 + $0x348] sm:$0xff]
    %v270 = vld [vmem:[#allocation9 + $0x350] sm:$0xff]
    %v271 = vld [vmem:[#allocation9 + $0x358] sm:$0xff]
    %v272 = vld [vmem:[#allocation9 + $0x360] sm:$0xff]
    %v273 = vld [vmem:[#allocation9 + $0x368] sm:$0xff]
    %v274 = vld [vmem:[#allocation9 + $0x370] sm:$0xff]
    %v275 = vld [vmem:[#allocation9 + $0x378] sm:$0xff]
    %v276 = vld [vmem:[#allocation9 + $0x380] sm:$0xff]
    %v277 = vld [vmem:[#allocation9 + $0x388] sm:$0xff]
    %v278 = vld [vmem:[#allocation9 + $0x390] sm:$0xff]
    %v279 = vld [vmem:[#allocation9 + $0x398] sm:$0xff]
    %v280 = vld [vmem:[#allocation9 + $0x3a0] sm:$0xff]
    %v281 = vld [vmem:[#allocation9 + $0x3a8] sm:$0xff]
    %v282 = vld [vmem:[#allocation9 + $0x3b0] sm:$0xff]
    %v283 = vld [vmem:[#allocation9 + $0x3b8] sm:$0xff]
    %v284 = vld [vmem:[#allocation9 + $0x3c0] sm:$0xff]
    %v285 = vld [vmem:[#allocation9 + $0x3c8] sm:$0xff]
    %v286 = vld [vmem:[#allocation9 + $0x3d0] sm:$0xff]
    %v287 = vld [vmem:[#allocation9 + $0x3d8] sm:$0xff]
    %v288 = vld [vmem:[#allocation9 + $0x3e0] sm:$0xff]
    %v289 = vld [vmem:[#allocation9 + $0x3e8] sm:$0xff]
    %v290 = vld [vmem:[#allocation9 + $0x3f0] sm:$0xff]
    %v291 = vld [vmem:[#allocation9 + $0x3f8] sm:$0xff]
    %292 = vmatprep.subr.mxu0 %v165
    %293 = vmatpush1.msra.mxu0 %v164
    %294 = vmatprep.subr.mxu0 %v169
    %295 = vmatpush1.msra.mxu0 %v168
    %296 = vmatprep.subr.mxu0 %v173
    %297 = vmatpush1.msra.mxu0 %v172
    %298 = vmatprep.subr.mxu0 %v177
    %299 = vmatpush1.msra.mxu0 %v176
    %300 = vmatprep.subr.mxu0 %v181
    %301 = vmatpush1.msra.mxu0 %v180
    %302 = vmatprep.subr.mxu0 %v185
    %303 = vmatpush1.msra.mxu0 %v184
    %304 = vmatprep.subr.mxu0 %v189
    %305 = vmatpush1.msra.mxu0 %v188
    %306 = vmatprep.subr.mxu0 %v193
    %307 = vmatpush1.msra.mxu0 %v192
    %308 = vmatprep.subr.mxu0 %v197
    %309 = vmatpush1.msra.mxu0 %v196
    %310 = vmatprep.subr.mxu0 %v201
    %311 = vmatpush1.msra.mxu0 %v200
    %312 = vmatprep.subr.mxu0 %v205
    %313 = vmatpush1.msra.mxu0 %v204
    %314 = vmatprep.subr.mxu0 %v209
    %315 = vmatpush1.msra.mxu0 %v208
    %316 = vmatprep.subr.mxu0 %v213
    %317 = vmatpush1.msra.mxu0 %v212
    %318 = vmatprep.subr.mxu0 %v217
    %319 = vmatpush1.msra.mxu0 %v216
    %320 = vmatprep.subr.mxu0 %v221
    %321 = vmatpush1.msra.mxu0 %v220
    %322 = vmatprep.subr.mxu0 %v225
    %323 = vmatpush1.msra.mxu0 %v224
    %324 = vmatprep.subr.mxu0 %v229
    %325 = vmatpush1.msra.mxu0 %v228
    %326 = vmatprep.subr.mxu0 %v233
    %327 = vmatpush1.msra.mxu0 %v232
    %328 = vmatprep.subr.mxu0 %v237
    %329 = vmatpush1.msra.mxu0 %v236
    %330 = vmatprep.subr.mxu0 %v241
    %331 = vmatpush1.msra.mxu0 %v240
    %332 = vmatprep.subr.mxu0 %v245
    %333 = vmatpush1.msra.mxu0 %v244
    %334 = vmatprep.subr.mxu0 %v249
    %335 = vmatpush1.msra.mxu0 %v248
    %336 = vmatprep.subr.mxu0 %v253
    %337 = vmatpush1.msra.mxu0 %v252
    %338 = vmatprep.subr.mxu0 %v257
    %339 = vmatpush1.msra.mxu0 %v256
    %340 = vmatprep.subr.mxu0 %v261
    %341 = vmatpush1.msra.mxu0 %v260
    %342 = vmatprep.subr.mxu0 %v265
    %343 = vmatpush1.msra.mxu0 %v264
    %344 = vmatprep.subr.mxu0 %v269
    %345 = vmatpush1.msra.mxu0 %v268
    %346 = vmatprep.subr.mxu0 %v273
    %347 = vmatpush1.msra.mxu0 %v272
    %348 = vmatprep.subr.mxu0 %v277
    %349 = vmatpush1.msra.mxu0 %v276
    %350 = vmatprep.subr.mxu0 %v281
    %351 = vmatpush1.msra.mxu0 %v280
    %352 = vmatprep.subr.mxu0 %v285
    %353 = vmatpush1.msra.mxu0 %v284
    %354 = vmatprep.subr.mxu0 %v289
    %355 = vmatpush1.msra.mxu0 %v288
    %356 = vmatprep.mubr.f32.mxu0 %v122
    %357 = vmatmul.mubr.f32.gmra.mrb[0].mxu0 %v121
    %v358 = vpop.f32.mrb[0].mxu0
    %v359 = vadd.f32 0.0, %v358
    %v360 = vpop.f32.mrb[0].mxu0
    %v361 = vadd.f32 0.0, %v360
    %362 = vmatprep.mubr.f32.mxu0 %v124
    %363 = vmatmul.mubr.f32.gmra.mrb[0].mxu0 %v123
    %v364 = vpop.f32.mrb[0].mxu0
    %v365 = vadd.f32 0.0, %v364
    %v366 = vpop.f32.mrb[0].mxu0
    %v367 = vadd.f32 0.0, %v366
    %368 = vdwg.mxu0
    %369 = vmatprep.subr.mxu0 %v167
    %370 = vmatpush1.msra.mxu0 %v166
    %371 = vmatprep.subr.mxu0 %v171
    %372 = vmatpush1.msra.mxu0 %v170
    %373 = vmatprep.subr.mxu0 %v175
    %374 = vmatpush1.msra.mxu0 %v174
    %375 = vmatprep.subr.mxu0 %v179
    %376 = vmatpush1.msra.mxu0 %v178
    %377 = vmatprep.subr.mxu0 %v183
    %378 = vmatpush1.msra.mxu0 %v182
    %379 = vmatprep.subr.mxu0 %v187
    %380 = vmatpush1.msra.mxu0 %v186
    %381 = vmatprep.subr.mxu0 %v191
    %382 = vmatpush1.msra.mxu0 %v190
    %383 = vmatprep.subr.mxu0 %v195
    %384 = vmatpush1.msra.mxu0 %v194
    %385 = vmatprep.subr.mxu0 %v199
    %386 = vmatpush1.msra.mxu0 %v198
    %387 = vmatprep.subr.mxu0 %v203
    %388 = vmatpush1.msra.mxu0 %v202
    %389 = vmatprep.subr.mxu0 %v207
    %390 = vmatpush1.msra.mxu0 %v206
    %391 = vmatprep.subr.mxu0 %v211
    %392 = vmatpush1.msra.mxu0 %v210
    %393 = vmatprep.subr.mxu0 %v215
    %394 = vmatpush1.msra.mxu0 %v214
    %395 = vmatprep.subr.mxu0 %v219
    %396 = vmatpush1.msra.mxu0 %v218
    %397 = vmatprep.subr.mxu0 %v223
    %398 = vmatpush1.msra.mxu0 %v222
    %399 = vmatprep.subr.mxu0 %v227
    %400 = vmatpush1.msra.mxu0 %v226
    %401 = vmatprep.subr.mxu0 %v231
    %402 = vmatpush1.msra.mxu0 %v230
    %403 = vmatprep.subr.mxu0 %v235
    %404 = vmatpush1.msra.mxu0 %v234
    %405 = vmatprep.subr.mxu0 %v239
    %406 = vmatpush1.msra.mxu0 %v238
    %407 = vmatprep.subr.mxu0 %v243
    %408 = vmatpush1.msra.mxu0 %v242
    %409 = vmatprep.subr.mxu0 %v247
    %410 = vmatpush1.msra.mxu0 %v246
    %411 = vmatprep.subr.mxu0 %v251
    %412 = vmatpush1.msra.mxu0 %v250
    %413 = vmatprep.subr.mxu0 %v255
    %414 = vmatpush1.msra.mxu0 %v254
    %415 = vmatprep.subr.mxu0 %v259
    %416 = vmatpush1.msra.mxu0 %v258
    %417 = vmatprep.subr.mxu0 %v263
    %418 = vmatpush1.msra.mxu0 %v262
    %419 = vmatprep.subr.mxu0 %v267
    %420 = vmatpush1.msra.mxu0 %v266
    %421 = vmatprep.subr.mxu0 %v271
    %422 = vmatpush1.msra.mxu0 %v270
    %423 = vmatprep.subr.mxu0 %v275
    %424 = vmatpush1.msra.mxu0 %v274
    %425 = vmatprep.subr.mxu0 %v279
    %426 = vmatpush1.msra.mxu0 %v278
    %427 = vmatprep.subr.mxu0 %v283
    %428 = vmatpush1.msra.mxu0 %v282
    %429 = vmatprep.subr.mxu0 %v287
    %430 = vmatpush1.msra.mxu0 %v286
    %431 = vmatprep.subr.mxu0 %v291
    %432 = vmatpush1.msra.mxu0 %v290
    %433 = vmatprep.mubr.f32.mxu0 %v122
    %434 = vmatmul.mubr.f32.gmra.mrb[0].mxu0 %v121
    %v435 = vpop.f32.mrb[0].mxu0
    %v436 = vadd.f32 0.0, %v435
    %v437 = vpop.f32.mrb[0].mxu0
    %v438 = vadd.f32 0.0, %v437
    %439 = vmatprep.mubr.f32.mxu0 %v124
    %440 = vmatmul.mubr.f32.gmra.mrb[0].mxu0 %v123
    %v441 = vpop.f32.mrb[0].mxu0
    %v442 = vadd.f32 0.0, %v441
    %v443 = vpop.f32.mrb[0].mxu0
    %v444 = vadd.f32 0.0, %v443
    %445 = vdwg.mxu0
    %v446 = vld [vmem:[%s2] sm:$0xff]
    %v447 = vld [vmem:[%s2 + $0x8] sm:$0xff]
    %v448 = vld [vmem:[%s2 + $0x10] sm:$0xff]
    %v449 = vld [vmem:[%s2 + $0x18] sm:$0xff]
    %v450 = vld [vmem:[%s2 + $0x20] sm:$0xff]
    %v451 = vld [vmem:[%s2 + $0x28] sm:$0xff]
    %v452 = vld [vmem:[%s2 + $0x30] sm:$0xff]
    %v453 = vld [vmem:[%s2 + $0x38] sm:$0xff]
    %v454 = vld [vmem:[%s2 + $0x40] sm:$0xff]
    %v455 = vld [vmem:[%s2 + $0x48] sm:$0xff]
    %v456 = vld [vmem:[%s2 + $0x50] sm:$0xff]
    %v457 = vld [vmem:[%s2 + $0x58] sm:$0xff]
    %v458 = vld [vmem:[%s2 + $0x60] sm:$0xff]
    %v459 = vld [vmem:[%s2 + $0x68] sm:$0xff]
    %v460 = vld [vmem:[%s2 + $0x70] sm:$0xff]
    %v461 = vld [vmem:[%s2 + $0x78] sm:$0xff]
    %v462 = vld [vmem:[%s2 + $0x80] sm:$0xff]
    %v463 = vld [vmem:[%s2 + $0x88] sm:$0xff]
    %v464 = vld [vmem:[%s2 + $0x90] sm:$0xff]
    %v465 = vld [vmem:[%s2 + $0x98] sm:$0xff]
    %v466 = vld [vmem:[%s2 + $0xa0] sm:$0xff]
    %v467 = vld [vmem:[%s2 + $0xa8] sm:$0xff]
    %v468 = vld [vmem:[%s2 + $0xb0] sm:$0xff]
    %v469 = vld [vmem:[%s2 + $0xb8] sm:$0xff]
    %v470 = vld [vmem:[%s2 + $0xc0] sm:$0xff]
    %v471 = vld [vmem:[%s2 + $0xc8] sm:$0xff]
    %v472 = vld [vmem:[%s2 + $0xd0] sm:$0xff]
    %v473 = vld [vmem:[%s2 + $0xd8] sm:$0xff]
    %v474 = vld [vmem:[%s2 + $0xe0] sm:$0xff]
    %v475 = vld [vmem:[%s2 + $0xe8] sm:$0xff]
    %v476 = vld [vmem:[%s2 + $0xf0] sm:$0xff]
    %v477 = vld [vmem:[%s2 + $0xf8] sm:$0xff]
    %v478 = vld [vmem:[%s2 + $0x100] sm:$0xff]
    %v479 = vld [vmem:[%s2 + $0x108] sm:$0xff]
    %v480 = vld [vmem:[%s2 + $0x110] sm:$0xff]
    %v481 = vld [vmem:[%s2 + $0x118] sm:$0xff]
    %v482 = vld [vmem:[%s2 + $0x120] sm:$0xff]
    %v483 = vld [vmem:[%s2 + $0x128] sm:$0xff]
    %v484 = vld [vmem:[%s2 + $0x130] sm:$0xff]
    %v485 = vld [vmem:[%s2 + $0x138] sm:$0xff]
    %v486 = vld [vmem:[%s2 + $0x140] sm:$0xff]
    %v487 = vld [vmem:[%s2 + $0x148] sm:$0xff]
    %v488 = vld [vmem:[%s2 + $0x150] sm:$0xff]
    %v489 = vld [vmem:[%s2 + $0x158] sm:$0xff]
    %v490 = vld [vmem:[%s2 + $0x160] sm:$0xff]
    %v491 = vld [vmem:[%s2 + $0x168] sm:$0xff]
    %v492 = vld [vmem:[%s2 + $0x170] sm:$0xff]
    %v493 = vld [vmem:[%s2 + $0x178] sm:$0xff]
    %v494 = vld [vmem:[%s2 + $0x180] sm:$0xff]
    %v495 = vld [vmem:[%s2 + $0x188] sm:$0xff]
    %v496 = vld [vmem:[%s2 + $0x190] sm:$0xff]
    %v497 = vld [vmem:[%s2 + $0x198] sm:$0xff]
    %v498 = vld [vmem:[%s2 + $0x1a0] sm:$0xff]
    %v499 = vld [vmem:[%s2 + $0x1a8] sm:$0xff]
    %v500 = vld [vmem:[%s2 + $0x1b0] sm:$0xff]
    %v501 = vld [vmem:[%s2 + $0x1b8] sm:$0xff]
    %v502 = vld [vmem:[%s2 + $0x1c0] sm:$0xff]
    %v503 = vld [vmem:[%s2 + $0x1c8] sm:$0xff]
    %v504 = vld [vmem:[%s2 + $0x1d0] sm:$0xff]
    %v505 = vld [vmem:[%s2 + $0x1d8] sm:$0xff]
    %v506 = vld [vmem:[%s2 + $0x1e0] sm:$0xff]
    %v507 = vld [vmem:[%s2 + $0x1e8] sm:$0xff]
    %v508 = vld [vmem:[%s2 + $0x1f0] sm:$0xff]
    %v509 = vld [vmem:[%s2 + $0x1f8] sm:$0xff]
    %v510 = vld [vmem:[%s2 + $0x200] sm:$0xff]
    %v511 = vld [vmem:[%s2 + $0x208] sm:$0xff]
    %v512 = vld [vmem:[%s2 + $0x210] sm:$0xff]
    %v513 = vld [vmem:[%s2 + $0x218] sm:$0xff]
    %v514 = vld [vmem:[%s2 + $0x220] sm:$0xff]
    %v515 = vld [vmem:[%s2 + $0x228] sm:$0xff]
    %v516 = vld [vmem:[%s2 + $0x230] sm:$0xff]
    %v517 = vld [vmem:[%s2 + $0x238] sm:$0xff]
    %v518 = vld [vmem:[%s2 + $0x240] sm:$0xff]
    %v519 = vld [vmem:[%s2 + $0x248] sm:$0xff]
    %v520 = vld [vmem:[%s2 + $0x250] sm:$0xff]
    %v521 = vld [vmem:[%s2 + $0x258] sm:$0xff]
    %v522 = vld [vmem:[%s2 + $0x260] sm:$0xff]
    %v523 = vld [vmem:[%s2 + $0x268] sm:$0xff]
    %v524 = vld [vmem:[%s2 + $0x270] sm:$0xff]
    %v525 = vld [vmem:[%s2 + $0x278] sm:$0xff]
    %v526 = vld [vmem:[%s2 + $0x280] sm:$0xff]
    %v527 = vld [vmem:[%s2 + $0x288] sm:$0xff]
    %v528 = vld [vmem:[%s2 + $0x290] sm:$0xff]
    %v529 = vld [vmem:[%s2 + $0x298] sm:$0xff]
    %v530 = vld [vmem:[%s2 + $0x2a0] sm:$0xff]
    %v531 = vld [vmem:[%s2 + $0x2a8] sm:$0xff]
    %v532 = vld [vmem:[%s2 + $0x2b0] sm:$0xff]
    %v533 = vld [vmem:[%s2 + $0x2b8] sm:$0xff]
    %v534 = vld [vmem:[%s2 + $0x2c0] sm:$0xff]
    %v535 = vld [vmem:[%s2 + $0x2c8] sm:$0xff]
    %v536 = vld [vmem:[%s2 + $0x2d0] sm:$0xff]
    %v537 = vld [vmem:[%s2 + $0x2d8] sm:$0xff]
    %v538 = vld [vmem:[%s2 + $0x2e0] sm:$0xff]
    %v539 = vld [vmem:[%s2 + $0x2e8] sm:$0xff]
    %v540 = vld [vmem:[%s2 + $0x2f0] sm:$0xff]
    %v541 = vld [vmem:[%s2 + $0x2f8] sm:$0xff]
    %v542 = vld [vmem:[%s2 + $0x300] sm:$0xff]
    %v543 = vld [vmem:[%s2 + $0x308] sm:$0xff]
    %v544 = vld [vmem:[%s2 + $0x310] sm:$0xff]
    %v545 = vld [vmem:[%s2 + $0x318] sm:$0xff]
    %v546 = vld [vmem:[%s2 + $0x320] sm:$0xff]
    %v547 = vld [vmem:[%s2 + $0x328] sm:$0xff]
    %v548 = vld [vmem:[%s2 + $0x330] sm:$0xff]
    %v549 = vld [vmem:[%s2 + $0x338] sm:$0xff]
    %v550 = vld [vmem:[%s2 + $0x340] sm:$0xff]
    %v551 = vld [vmem:[%s2 + $0x348] sm:$0xff]
    %v552 = vld [vmem:[%s2 + $0x350] sm:$0xff]
    %v553 = vld [vmem:[%s2 + $0x358] sm:$0xff]
    %v554 = vld [vmem:[%s2 + $0x360] sm:$0xff]
    %v555 = vld [vmem:[%s2 + $0x368] sm:$0xff]
    %v556 = vld [vmem:[%s2 + $0x370] sm:$0xff]
    %v557 = vld [vmem:[%s2 + $0x378] sm:$0xff]
    %v558 = vld [vmem:[%s2 + $0x380] sm:$0xff]
    %v559 = vld [vmem:[%s2 + $0x388] sm:$0xff]
    %v560 = vld [vmem:[%s2 + $0x390] sm:$0xff]
    %v561 = vld [vmem:[%s2 + $0x398] sm:$0xff]
    %v562 = vld [vmem:[%s2 + $0x3a0] sm:$0xff]
    %v563 = vld [vmem:[%s2 + $0x3a8] sm:$0xff]
    %v564 = vld [vmem:[%s2 + $0x3b0] sm:$0xff]
    %v565 = vld [vmem:[%s2 + $0x3b8] sm:$0xff]
    %v566 = vld [vmem:[%s2 + $0x3c0] sm:$0xff]
    %v567 = vld [vmem:[%s2 + $0x3c8] sm:$0xff]
    %v568 = vld [vmem:[%s2 + $0x3d0] sm:$0xff]
    %v569 = vld [vmem:[%s2 + $0x3d8] sm:$0xff]
    %v570 = vld [vmem:[%s2 + $0x3e0] sm:$0xff]
    %v571 = vld [vmem:[%s2 + $0x3e8] sm:$0xff]
    %v572 = vld [vmem:[%s2 + $0x3f0] sm:$0xff]
    %v573 = vld [vmem:[%s2 + $0x3f8] sm:$0xff]
    %v574 = vld [vmem:[%s1] sm:$0xff]
    %v575 = vld [vmem:[%s1 + $0x8] sm:$0xff]
    %v576 = vld [vmem:[%s1 + $0x10] sm:$0xff]
    %v577 = vld [vmem:[%s1 + $0x18] sm:$0xff]
    %v578 = vld [vmem:[%s1 + $0x20] sm:$0xff]
    %v579 = vld [vmem:[%s1 + $0x28] sm:$0xff]
    %v580 = vld [vmem:[%s1 + $0x30] sm:$0xff]
    %v581 = vld [vmem:[%s1 + $0x38] sm:$0xff]
    %v582 = vld [vmem:[%s1 + $0x40] sm:$0xff]
    %v583 = vld [vmem:[%s1 + $0x48] sm:$0xff]
    %v584 = vld [vmem:[%s1 + $0x50] sm:$0xff]
    %v585 = vld [vmem:[%s1 + $0x58] sm:$0xff]
    %v586 = vld [vmem:[%s1 + $0x60] sm:$0xff]
    %v587 = vld [vmem:[%s1 + $0x68] sm:$0xff]
    %v588 = vld [vmem:[%s1 + $0x70] sm:$0xff]
    %v589 = vld [vmem:[%s1 + $0x78] sm:$0xff]
    %v590 = vld [vmem:[%s1 + $0x80] sm:$0xff]
    %v591 = vld [vmem:[%s1 + $0x88] sm:$0xff]
    %v592 = vld [vmem:[%s1 + $0x90] sm:$0xff]
    %v593 = vld [vmem:[%s1 + $0x98] sm:$0xff]
    %v594 = vld [vmem:[%s1 + $0xa0] sm:$0xff]
    %v595 = vld [vmem:[%s1 + $0xa8] sm:$0xff]
    %v596 = vld [vmem:[%s1 + $0xb0] sm:$0xff]
    %v597 = vld [vmem:[%s1 + $0xb8] sm:$0xff]
    %v598 = vld [vmem:[%s1 + $0xc0] sm:$0xff]
    %v599 = vld [vmem:[%s1 + $0xc8] sm:$0xff]
    %v600 = vld [vmem:[%s1 + $0xd0] sm:$0xff]
    %v601 = vld [vmem:[%s1 + $0xd8] sm:$0xff]
    %v602 = vld [vmem:[%s1 + $0xe0] sm:$0xff]
    %v603 = vld [vmem:[%s1 + $0xe8] sm:$0xff]
    %v604 = vld [vmem:[%s1 + $0xf0] sm:$0xff]
    %v605 = vld [vmem:[%s1 + $0xf8] sm:$0xff]
    %v606 = vld [vmem:[%s1 + $0x100] sm:$0xff]
    %v607 = vld [vmem:[%s1 + $0x108] sm:$0xff]
    %v608 = vld [vmem:[%s1 + $0x110] sm:$0xff]
    %v609 = vld [vmem:[%s1 + $0x118] sm:$0xff]
    %v610 = vld [vmem:[%s1 + $0x120] sm:$0xff]
    %v611 = vld [vmem:[%s1 + $0x128] sm:$0xff]
    %v612 = vld [vmem:[%s1 + $0x130] sm:$0xff]
    %v613 = vld [vmem:[%s1 + $0x138] sm:$0xff]
    %v614 = vld [vmem:[%s1 + $0x140] sm:$0xff]
    %v615 = vld [vmem:[%s1 + $0x148] sm:$0xff]
    %v616 = vld [vmem:[%s1 + $0x150] sm:$0xff]
    %v617 = vld [vmem:[%s1 + $0x158] sm:$0xff]
    %v618 = vld [vmem:[%s1 + $0x160] sm:$0xff]
    %v619 = vld [vmem:[%s1 + $0x168] sm:$0xff]
    %v620 = vld [vmem:[%s1 + $0x170] sm:$0xff]
    %v621 = vld [vmem:[%s1 + $0x178] sm:$0xff]
    %v622 = vld [vmem:[%s1 + $0x180] sm:$0xff]
    %v623 = vld [vmem:[%s1 + $0x188] sm:$0xff]
    %v624 = vld [vmem:[%s1 + $0x190] sm:$0xff]
    %v625 = vld [vmem:[%s1 + $0x198] sm:$0xff]
    %v626 = vld [vmem:[%s1 + $0x1a0] sm:$0xff]
    %v627 = vld [vmem:[%s1 + $0x1a8] sm:$0xff]
    %v628 = vld [vmem:[%s1 + $0x1b0] sm:$0xff]
    %v629 = vld [vmem:[%s1 + $0x1b8] sm:$0xff]
    %v630 = vld [vmem:[%s1 + $0x1c0] sm:$0xff]
    %v631 = vld [vmem:[%s1 + $0x1c8] sm:$0xff]
    %v632 = vld [vmem:[%s1 + $0x1d0] sm:$0xff]
    %v633 = vld [vmem:[%s1 + $0x1d8] sm:$0xff]
    %v634 = vld [vmem:[%s1 + $0x1e0] sm:$0xff]
    %v635 = vld [vmem:[%s1 + $0x1e8] sm:$0xff]
    %v636 = vld [vmem:[%s1 + $0x1f0] sm:$0xff]
    %v637 = vld [vmem:[%s1 + $0x1f8] sm:$0xff]
    %v638 = vld [vmem:[%s1 + $0x200] sm:$0xff]
    %v639 = vld [vmem:[%s1 + $0x208] sm:$0xff]
    %v640 = vld [vmem:[%s1 + $0x210] sm:$0xff]
    %v641 = vld [vmem:[%s1 + $0x218] sm:$0xff]
    %v642 = vld [vmem:[%s1 + $0x220] sm:$0xff]
    %v643 = vld [vmem:[%s1 + $0x228] sm:$0xff]
    %v644 = vld [vmem:[%s1 + $0x230] sm:$0xff]
    %v645 = vld [vmem:[%s1 + $0x238] sm:$0xff]
    %v646 = vld [vmem:[%s1 + $0x240] sm:$0xff]
    %v647 = vld [vmem:[%s1 + $0x248] sm:$0xff]
    %v648 = vld [vmem:[%s1 + $0x250] sm:$0xff]
    %v649 = vld [vmem:[%s1 + $0x258] sm:$0xff]
    %v650 = vld [vmem:[%s1 + $0x260] sm:$0xff]
    %v651 = vld [vmem:[%s1 + $0x268] sm:$0xff]
    %v652 = vld [vmem:[%s1 + $0x270] sm:$0xff]
    %v653 = vld [vmem:[%s1 + $0x278] sm:$0xff]
    %v654 = vld [vmem:[%s1 + $0x280] sm:$0xff]
    %v655 = vld [vmem:[%s1 + $0x288] sm:$0xff]
    %v656 = vld [vmem:[%s1 + $0x290] sm:$0xff]
    %v657 = vld [vmem:[%s1 + $0x298] sm:$0xff]
    %v658 = vld [vmem:[%s1 + $0x2a0] sm:$0xff]
    %v659 = vld [vmem:[%s1 + $0x2a8] sm:$0xff]
    %v660 = vld [vmem:[%s1 + $0x2b0] sm:$0xff]
    %v661 = vld [vmem:[%s1 + $0x2b8] sm:$0xff]
    %v662 = vld [vmem:[%s1 + $0x2c0] sm:$0xff]
    %v663 = vld [vmem:[%s1 + $0x2c8] sm:$0xff]
    %v664 = vld [vmem:[%s1 + $0x2d0] sm:$0xff]
    %v665 = vld [vmem:[%s1 + $0x2d8] sm:$0xff]
    %v666 = vld [vmem:[%s1 + $0x2e0] sm:$0xff]
    %v667 = vld [vmem:[%s1 + $0x2e8] sm:$0xff]
    %v668 = vld [vmem:[%s1 + $0x2f0] sm:$0xff]
    %v669 = vld [vmem:[%s1 + $0x2f8] sm:$0xff]
    %v670 = vld [vmem:[%s1 + $0x300] sm:$0xff]
    %v671 = vld [vmem:[%s1 + $0x308] sm:$0xff]
    %v672 = vld [vmem:[%s1 + $0x310] sm:$0xff]
    %v673 = vld [vmem:[%s1 + $0x318] sm:$0xff]
    %v674 = vld [vmem:[%s1 + $0x320] sm:$0xff]
    %v675 = vld [vmem:[%s1 + $0x328] sm:$0xff]
    %v676 = vld [vmem:[%s1 + $0x330] sm:$0xff]
    %v677 = vld [vmem:[%s1 + $0x338] sm:$0xff]
    %v678 = vld [vmem:[%s1 + $0x340] sm:$0xff]
    %v679 = vld [vmem:[%s1 + $0x348] sm:$0xff]
    %v680 = vld [vmem:[%s1 + $0x350] sm:$0xff]
    %v681 = vld [vmem:[%s1 + $0x358] sm:$0xff]
    %v682 = vld [vmem:[%s1 + $0x360] sm:$0xff]
    %v683 = vld [vmem:[%s1 + $0x368] sm:$0xff]
    %v684 = vld [vmem:[%s1 + $0x370] sm:$0xff]
    %v685 = vld [vmem:[%s1 + $0x378] sm:$0xff]
    %v686 = vld [vmem:[%s1 + $0x380] sm:$0xff]
    %v687 = vld [vmem:[%s1 + $0x388] sm:$0xff]
    %v688 = vld [vmem:[%s1 + $0x390] sm:$0xff]
    %v689 = vld [vmem:[%s1 + $0x398] sm:$0xff]
    %v690 = vld [vmem:[%s1 + $0x3a0] sm:$0xff]
    %v691 = vld [vmem:[%s1 + $0x3a8] sm:$0xff]
    %v692 = vld [vmem:[%s1 + $0x3b0] sm:$0xff]
    %v693 = vld [vmem:[%s1 + $0x3b8] sm:$0xff]
    %v694 = vld [vmem:[%s1 + $0x3c0] sm:$0xff]
    %v695 = vld [vmem:[%s1 + $0x3c8] sm:$0xff]
    %v696 = vld [vmem:[%s1 + $0x3d0] sm:$0xff]
    %v697 = vld [vmem:[%s1 + $0x3d8] sm:$0xff]
    %v698 = vld [vmem:[%s1 + $0x3e0] sm:$0xff]
    %v699 = vld [vmem:[%s1 + $0x3e8] sm:$0xff]
    %v700 = vld [vmem:[%s1 + $0x3f0] sm:$0xff]
    %v701 = vld [vmem:[%s1 + $0x3f8] sm:$0xff]
    %702 = vmatprep.subr.mxu0 %v575
    %703 = vmatpush1.msra.mxu0 %v574
    %704 = vmatprep.subr.mxu0 %v577
    %705 = vmatpush1.msra.mxu0 %v576
    %706 = vmatprep.subr.mxu0 %v579
    %707 = vmatpush1.msra.mxu0 %v578
    %708 = vmatprep.subr.mxu0 %v581
    %709 = vmatpush1.msra.mxu0 %v580
    %710 = vmatprep.subr.mxu0 %v583
    %711 = vmatpush1.msra.mxu0 %v582
    %712 = vmatprep.subr.mxu0 %v585
    %713 = vmatpush1.msra.mxu0 %v584
    %714 = vmatprep.subr.mxu0 %v587
    %715 = vmatpush1.msra.mxu0 %v586
    %716 = vmatprep.subr.mxu0 %v589
    %717 = vmatpush1.msra.mxu0 %v588
    %718 = vmatprep.subr.mxu0 %v591
    %719 = vmatpush1.msra.mxu0 %v590
    %720 = vmatprep.subr.mxu0 %v593
    %721 = vmatpush1.msra.mxu0 %v592
    %722 = vmatprep.subr.mxu0 %v595
    %723 = vmatpush1.msra.mxu0 %v594
    %724 = vmatprep.subr.mxu0 %v597
    %725 = vmatpush1.msra.mxu0 %v596
    %726 = vmatprep.subr.mxu0 %v599
    %727 = vmatpush1.msra.mxu0 %v598
    %728 = vmatprep.subr.mxu0 %v601
    %729 = vmatpush1.msra.mxu0 %v600
    %730 = vmatprep.subr.mxu0 %v603
    %731 = vmatpush1.msra.mxu0 %v602
    %732 = vmatprep.subr.mxu0 %v605
    %733 = vmatpush1.msra.mxu0 %v604
    %734 = vmatprep.subr.mxu0 %v607
    %735 = vmatpush1.msra.mxu0 %v606
    %736 = vmatprep.subr.mxu0 %v609
    %737 = vmatpush1.msra.mxu0 %v608
    %738 = vmatprep.subr.mxu0 %v611
    %739 = vmatpush1.msra.mxu0 %v610
    %740 = vmatprep.subr.mxu0 %v613
    %741 = vmatpush1.msra.mxu0 %v612
    %742 = vmatprep.subr.mxu0 %v615
    %743 = vmatpush1.msra.mxu0 %v614
    %744 = vmatprep.subr.mxu0 %v617
    %745 = vmatpush1.msra.mxu0 %v616
    %746 = vmatprep.subr.mxu0 %v619
    %747 = vmatpush1.msra.mxu0 %v618
    %748 = vmatprep.subr.mxu0 %v621
    %749 = vmatpush1.msra.mxu0 %v620
    %750 = vmatprep.subr.mxu0 %v623
    %751 = vmatpush1.msra.mxu0 %v622
    %752 = vmatprep.subr.mxu0 %v625
    %753 = vmatpush1.msra.mxu0 %v624
    %754 = vmatprep.subr.mxu0 %v627
    %755 = vmatpush1.msra.mxu0 %v626
    %756 = vmatprep.subr.mxu0 %v629
    %757 = vmatpush1.msra.mxu0 %v628
    %758 = vmatprep.subr.mxu0 %v631
    %759 = vmatpush1.msra.mxu0 %v630
    %760 = vmatprep.subr.mxu0 %v633
    %761 = vmatpush1.msra.mxu0 %v632
    %762 = vmatprep.subr.mxu0 %v635
    %763 = vmatpush1.msra.mxu0 %v634
    %764 = vmatprep.subr.mxu0 %v637
    %765 = vmatpush1.msra.mxu0 %v636
    %766 = vmatprep.mubr.f32.mxu0 %v361
    %767 = vmatmul.mubr.f32.gmra.mrb[0].mxu0 %v359
    %v768 = vpop.f32.mrb[0].mxu0
    %v769 = vadd.f32 0.0, %v768
    %v770 = vpop.f32.mrb[0].mxu0
    %v771 = vadd.f32 0.0, %v770
    %772 = vmatprep.mubr.f32.mxu0 %v367
    %773 = vmatmul.mubr.f32.gmra.mrb[0].mxu0 %v365
    %v774 = vpop.f32.mrb[0].mxu0
    %v775 = vadd.f32 0.0, %v774
    %v776 = vpop.f32.mrb[0].mxu0
    %v777 = vadd.f32 0.0, %v776
    %778 = vdwg.mxu0
    %779 = vmatprep.subr.mxu0 %v639
    %780 = vmatpush1.msra.mxu0 %v638
    %781 = vmatprep.subr.mxu0 %v641
    %782 = vmatpush1.msra.mxu0 %v640
    %783 = vmatprep.subr.mxu0 %v643
    %784 = vmatpush1.msra.mxu0 %v642
    %785 = vmatprep.subr.mxu0 %v645
    %786 = vmatpush1.msra.mxu0 %v644
    %787 = vmatprep.subr.mxu0 %v647
    %788 = vmatpush1.msra.mxu0 %v646
    %789 = vmatprep.subr.mxu0 %v649
    %790 = vmatpush1.msra.mxu0 %v648
    %791 = vmatprep.subr.mxu0 %v651
    %792 = vmatpush1.msra.mxu0 %v650
    %793 = vmatprep.subr.mxu0 %v653
    %794 = vmatpush1.msra.mxu0 %v652
    %795 = vmatprep.subr.mxu0 %v655
    %796 = vmatpush1.msra.mxu0 %v654
    %797 = vmatprep.subr.mxu0 %v657
    %798 = vmatpush1.msra.mxu0 %v656
    %799 = vmatprep.subr.mxu0 %v659
    %800 = vmatpush1.msra.mxu0 %v658
    %801 = vmatprep.subr.mxu0 %v661
    %802 = vmatpush1.msra.mxu0 %v660
    %803 = vmatprep.subr.mxu0 %v663
    %804 = vmatpush1.msra.mxu0 %v662
    %805 = vmatprep.subr.mxu0 %v665
    %806 = vmatpush1.msra.mxu0 %v664
    %807 = vmatprep.subr.mxu0 %v667
    %808 = vmatpush1.msra.mxu0 %v666
    %809 = vmatprep.subr.mxu0 %v669
    %810 = vmatpush1.msra.mxu0 %v668
    %811 = vmatprep.subr.mxu0 %v671
    %812 = vmatpush1.msra.mxu0 %v670
    %813 = vmatprep.subr.mxu0 %v673
    %814 = vmatpush1.msra.mxu0 %v672
    %815 = vmatprep.subr.mxu0 %v675
    %816 = vmatpush1.msra.mxu0 %v674
    %817 = vmatprep.subr.mxu0 %v677
    %818 = vmatpush1.msra.mxu0 %v676
    %819 = vmatprep.subr.mxu0 %v679
    %820 = vmatpush1.msra.mxu0 %v678
    %821 = vmatprep.subr.mxu0 %v681
    %822 = vmatpush1.msra.mxu0 %v680
    %823 = vmatprep.subr.mxu0 %v683
    %824 = vmatpush1.msra.mxu0 %v682
    %825 = vmatprep.subr.mxu0 %v685
    %826 = vmatpush1.msra.mxu0 %v684
    %827 = vmatprep.subr.mxu0 %v687
    %828 = vmatpush1.msra.mxu0 %v686
    %829 = vmatprep.subr.mxu0 %v689
    %830 = vmatpush1.msra.mxu0 %v688
    %831 = vmatprep.subr.mxu0 %v691
    %832 = vmatpush1.msra.mxu0 %v690
    %833 = vmatprep.subr.mxu0 %v693
    %834 = vmatpush1.msra.mxu0 %v692
    %835 = vmatprep.subr.mxu0 %v695
    %836 = vmatpush1.msra.mxu0 %v694
    %837 = vmatprep.subr.mxu0 %v697
    %838 = vmatpush1.msra.mxu0 %v696
    %839 = vmatprep.subr.mxu0 %v699
    %840 = vmatpush1.msra.mxu0 %v698
    %841 = vmatprep.subr.mxu0 %v701
    %842 = vmatpush1.msra.mxu0 %v700
    %843 = vmatprep.mubr.f32.mxu0 %v438
    %844 = vmatmul.mubr.f32.gmra.mrb[0].mxu0 %v436
    %v845 = vpop.f32.mrb[0].mxu0
    %v846 = vadd.f32 %v769, %v845
    %v847 = vpop.f32.mrb[0].mxu0
    %v848 = vadd.f32 %v771, %v847
    %849 = vmatprep.mubr.f32.mxu0 %v444
    %850 = vmatmul.mubr.f32.gmra.mrb[0].mxu0 %v442
    %v851 = vpop.f32.mrb[0].mxu0
    %v852 = vadd.f32 %v775, %v851
    %v853 = vpop.f32.mrb[0].mxu0
    %v854 = vadd.f32 %v777, %v853
    %855 = vdwg.mxu0
    %v856 = vld [vmem:[#allocation2] sm:$0xff]
    %v857 = vld [vmem:[#allocation2 + $0x8] sm:$0xff]
    %v858 = vld [vmem:[#allocation2 + $0x10] sm:$0xff]
    %v859 = vld [vmem:[#allocation2 + $0x18] sm:$0xff]
    %v860 = vld [vmem:[#allocation2 + $0x20] sm:$0xff]
    %v861 = vld [vmem:[#allocation2 + $0x28] sm:$0xff]
    %v862 = vld [vmem:[#allocation2 + $0x30] sm:$0xff]
    %v863 = vld [vmem:[#allocation2 + $0x38] sm:$0xff]
    %v864 = vld [vmem:[#allocation2 + $0x40] sm:$0xff]
    %v865 = vld [vmem:[#allocation2 + $0x48] sm:$0xff]
    %v866 = vld [vmem:[#allocation2 + $0x50] sm:$0xff]
    %v867 = vld [vmem:[#allocation2 + $0x58] sm:$0xff]
    %v868 = vld [vmem:[#allocation2 + $0x60] sm:$0xff]
    %v869 = vld [vmem:[#allocation2 + $0x68] sm:$0xff]
    %v870 = vld [vmem:[#allocation2 + $0x70] sm:$0xff]
    %v871 = vld [vmem:[#allocation2 + $0x78] sm:$0xff]
    %v872 = vld [vmem:[#allocation2 + $0x80] sm:$0xff]
    %v873 = vld [vmem:[#allocation2 + $0x88] sm:$0xff]
    %v874 = vld [vmem:[#allocation2 + $0x90] sm:$0xff]
    %v875 = vld [vmem:[#allocation2 + $0x98] sm:$0xff]
    %v876 = vld [vmem:[#allocation2 + $0xa0] sm:$0xff]
    %v877 = vld [vmem:[#allocation2 + $0xa8] sm:$0xff]
    %v878 = vld [vmem:[#allocation2 + $0xb0] sm:$0xff]
    %v879 = vld [vmem:[#allocation2 + $0xb8] sm:$0xff]
    %v880 = vld [vmem:[#allocation2 + $0xc0] sm:$0xff]
    %v881 = vld [vmem:[#allocation2 + $0xc8] sm:$0xff]
    %v882 = vld [vmem:[#allocation2 + $0xd0] sm:$0xff]
    %v883 = vld [vmem:[#allocation2 + $0xd8] sm:$0xff]
    %v884 = vld [vmem:[#allocation2 + $0xe0] sm:$0xff]
    %v885 = vld [vmem:[#allocation2 + $0xe8] sm:$0xff]
    %v886 = vld [vmem:[#allocation2 + $0xf0] sm:$0xff]
    %v887 = vld [vmem:[#allocation2 + $0xf8] sm:$0xff]
    %v888 = vld [vmem:[#allocation2 + $0x100] sm:$0xff]
    %v889 = vld [vmem:[#allocation2 + $0x108] sm:$0xff]
    %v890 = vld [vmem:[#allocation2 + $0x110] sm:$0xff]
    %v891 = vld [vmem:[#allocation2 + $0x118] sm:$0xff]
    %v892 = vld [vmem:[#allocation2 + $0x120] sm:$0xff]
    %v893 = vld [vmem:[#allocation2 + $0x128] sm:$0xff]
    %v894 = vld [vmem:[#allocation2 + $0x130] sm:$0xff]
    %v895 = vld [vmem:[#allocation2 + $0x138] sm:$0xff]
    %v896 = vld [vmem:[#allocation2 + $0x140] sm:$0xff]
    %v897 = vld [vmem:[#allocation2 + $0x148] sm:$0xff]
    %v898 = vld [vmem:[#allocation2 + $0x150] sm:$0xff]
    %v899 = vld [vmem:[#allocation2 + $0x158] sm:$0xff]
    %v900 = vld [vmem:[#allocation2 + $0x160] sm:$0xff]
    %v901 = vld [vmem:[#allocation2 + $0x168] sm:$0xff]
    %v902 = vld [vmem:[#allocation2 + $0x170] sm:$0xff]
    %v903 = vld [vmem:[#allocation2 + $0x178] sm:$0xff]
    %v904 = vld [vmem:[#allocation2 + $0x180] sm:$0xff]
    %v905 = vld [vmem:[#allocation2 + $0x188] sm:$0xff]
    %v906 = vld [vmem:[#allocation2 + $0x190] sm:$0xff]
    %v907 = vld [vmem:[#allocation2 + $0x198] sm:$0xff]
    %v908 = vld [vmem:[#allocation2 + $0x1a0] sm:$0xff]
    %v909 = vld [vmem:[#allocation2 + $0x1a8] sm:$0xff]
    %v910 = vld [vmem:[#allocation2 + $0x1b0] sm:$0xff]
    %v911 = vld [vmem:[#allocation2 + $0x1b8] sm:$0xff]
    %v912 = vld [vmem:[#allocation2 + $0x1c0] sm:$0xff]
    %v913 = vld [vmem:[#allocation2 + $0x1c8] sm:$0xff]
    %v914 = vld [vmem:[#allocation2 + $0x1d0] sm:$0xff]
    %v915 = vld [vmem:[#allocation2 + $0x1d8] sm:$0xff]
    %v916 = vld [vmem:[#allocation2 + $0x1e0] sm:$0xff]
    %v917 = vld [vmem:[#allocation2 + $0x1e8] sm:$0xff]
    %v918 = vld [vmem:[#allocation2 + $0x1f0] sm:$0xff]
    %v919 = vld [vmem:[#allocation2 + $0x1f8] sm:$0xff]
    %v920 = vld [vmem:[#allocation2 + $0x200] sm:$0xff]
    %v921 = vld [vmem:[#allocation2 + $0x208] sm:$0xff]
    %v922 = vld [vmem:[#allocation2 + $0x210] sm:$0xff]
    %v923 = vld [vmem:[#allocation2 + $0x218] sm:$0xff]
    %v924 = vld [vmem:[#allocation2 + $0x220] sm:$0xff]
    %v925 = vld [vmem:[#allocation2 + $0x228] sm:$0xff]
    %v926 = vld [vmem:[#allocation2 + $0x230] sm:$0xff]
    %v927 = vld [vmem:[#allocation2 + $0x238] sm:$0xff]
    %v928 = vld [vmem:[#allocation2 + $0x240] sm:$0xff]
    %v929 = vld [vmem:[#allocation2 + $0x248] sm:$0xff]
    %v930 = vld [vmem:[#allocation2 + $0x250] sm:$0xff]
    %v931 = vld [vmem:[#allocation2 + $0x258] sm:$0xff]
    %v932 = vld [vmem:[#allocation2 + $0x260] sm:$0xff]
    %v933 = vld [vmem:[#allocation2 + $0x268] sm:$0xff]
    %v934 = vld [vmem:[#allocation2 + $0x270] sm:$0xff]
    %v935 = vld [vmem:[#allocation2 + $0x278] sm:$0xff]
    %v936 = vld [vmem:[#allocation2 + $0x280] sm:$0xff]
    %v937 = vld [vmem:[#allocation2 + $0x288] sm:$0xff]
    %v938 = vld [vmem:[#allocation2 + $0x290] sm:$0xff]
    %v939 = vld [vmem:[#allocation2 + $0x298] sm:$0xff]
    %v940 = vld [vmem:[#allocation2 + $0x2a0] sm:$0xff]
    %v941 = vld [vmem:[#allocation2 + $0x2a8] sm:$0xff]
    %v942 = vld [vmem:[#allocation2 + $0x2b0] sm:$0xff]
    %v943 = vld [vmem:[#allocation2 + $0x2b8] sm:$0xff]
    %v944 = vld [vmem:[#allocation2 + $0x2c0] sm:$0xff]
    %v945 = vld [vmem:[#allocation2 + $0x2c8] sm:$0xff]
    %v946 = vld [vmem:[#allocation2 + $0x2d0] sm:$0xff]
    %v947 = vld [vmem:[#allocation2 + $0x2d8] sm:$0xff]
    %v948 = vld [vmem:[#allocation2 + $0x2e0] sm:$0xff]
    %v949 = vld [vmem:[#allocation2 + $0x2e8] sm:$0xff]
    %v950 = vld [vmem:[#allocation2 + $0x2f0] sm:$0xff]
    %v951 = vld [vmem:[#allocation2 + $0x2f8] sm:$0xff]
    %v952 = vld [vmem:[#allocation2 + $0x300] sm:$0xff]
    %v953 = vld [vmem:[#allocation2 + $0x308] sm:$0xff]
    %v954 = vld [vmem:[#allocation2 + $0x310] sm:$0xff]
    %v955 = vld [vmem:[#allocation2 + $0x318] sm:$0xff]
    %v956 = vld [vmem:[#allocation2 + $0x320] sm:$0xff]
    %v957 = vld [vmem:[#allocation2 + $0x328] sm:$0xff]
    %v958 = vld [vmem:[#allocation2 + $0x330] sm:$0xff]
    %v959 = vld [vmem:[#allocation2 + $0x338] sm:$0xff]
    %v960 = vld [vmem:[#allocation2 + $0x340] sm:$0xff]
    %v961 = vld [vmem:[#allocation2 + $0x348] sm:$0xff]
    %v962 = vld [vmem:[#allocation2 + $0x350] sm:$0xff]
    %v963 = vld [vmem:[#allocation2 + $0x358] sm:$0xff]
    %v964 = vld [vmem:[#allocation2 + $0x360] sm:$0xff]
    %v965 = vld [vmem:[#allocation2 + $0x368] sm:$0xff]
    %v966 = vld [vmem:[#allocation2 + $0x370] sm:$0xff]
    %v967 = vld [vmem:[#allocation2 + $0x378] sm:$0xff]
    %v968 = vld [vmem:[#allocation2 + $0x380] sm:$0xff]
    %v969 = vld [vmem:[#allocation2 + $0x388] sm:$0xff]
    %v970 = vld [vmem:[#allocation2 + $0x390] sm:$0xff]
    %v971 = vld [vmem:[#allocation2 + $0x398] sm:$0xff]
    %v972 = vld [vmem:[#allocation2 + $0x3a0] sm:$0xff]
    %v973 = vld [vmem:[#allocation2 + $0x3a8] sm:$0xff]
    %v974 = vld [vmem:[#allocation2 + $0x3b0] sm:$0xff]
    %v975 = vld [vmem:[#allocation2 + $0x3b8] sm:$0xff]
    %v976 = vld [vmem:[#allocation2 + $0x3c0] sm:$0xff]
    %v977 = vld [vmem:[#allocation2 + $0x3c8] sm:$0xff]
    %v978 = vld [vmem:[#allocation2 + $0x3d0] sm:$0xff]
    %v979 = vld [vmem:[#allocation2 + $0x3d8] sm:$0xff]
    %v980 = vld [vmem:[#allocation2 + $0x3e0] sm:$0xff]
    %v981 = vld [vmem:[#allocation2 + $0x3e8] sm:$0xff]
    %v982 = vld [vmem:[#allocation2 + $0x3f0] sm:$0xff]
    %v983 = vld [vmem:[#allocation2 + $0x3f8] sm:$0xff]
    %984 = vmatprep.subr.mxu0 %v857
    %985 = vmatpush1.msra.mxu0 %v856
    %986 = vmatprep.subr.mxu0 %v859
    %987 = vmatpush1.msra.mxu0 %v858
    %988 = vmatprep.subr.mxu0 %v861
    %989 = vmatpush1.msra.mxu0 %v860
    %990 = vmatprep.subr.mxu0 %v863
    %991 = vmatpush1.msra.mxu0 %v862
    %992 = vmatprep.subr.mxu0 %v865
    %993 = vmatpush1.msra.mxu0 %v864
    %994 = vmatprep.subr.mxu0 %v867
    %995 = vmatpush1.msra.mxu0 %v866
    %996 = vmatprep.subr.mxu0 %v869
    %997 = vmatpush1.msra.mxu0 %v868
    %998 = vmatprep.subr.mxu0 %v871
    %999 = vmatpush1.msra.mxu0 %v870
    %1000 = vmatprep.subr.mxu0 %v873
    %1001 = vmatpush1.msra.mxu0 %v872
    %1002 = vmatprep.subr.mxu0 %v875
    %1003 = vmatpush1.msra.mxu0 %v874
    %1004 = vmatprep.subr.mxu0 %v877
    %1005 = vmatpush1.msra.mxu0 %v876
    %1006 = vmatprep.subr.mxu0 %v879
    %1007 = vmatpush1.msra.mxu0 %v878
    %1008 = vmatprep.subr.mxu0 %v881
    %1009 = vmatpush1.msra.mxu0 %v880
    %1010 = vmatprep.subr.mxu0 %v883
    %1011 = vmatpush1.msra.mxu0 %v882
    %1012 = vmatprep.subr.mxu0 %v885
    %1013 = vmatpush1.msra.mxu0 %v884
    %1014 = vmatprep.subr.mxu0 %v887
    %1015 = vmatpush1.msra.mxu0 %v886
    %1016 = vmatprep.subr.mxu0 %v889
    %1017 = vmatpush1.msra.mxu0 %v888
    %1018 = vmatprep.subr.mxu0 %v891
    %1019 = vmatpush1.msra.mxu0 %v890
    %1020 = vmatprep.subr.mxu0 %v893
    %1021 = vmatpush1.msra.mxu0 %v892
    %1022 = vmatprep.subr.mxu0 %v895
    %1023 = vmatpush1.msra.mxu0 %v894
    %1024 = vmatprep.subr.mxu0 %v897
    %1025 = vmatpush1.msra.mxu0 %v896
    %1026 = vmatprep.subr.mxu0 %v899
    %1027 = vmatpush1.msra.mxu0 %v898
    %1028 = vmatprep.subr.mxu0 %v901
    %1029 = vmatpush1.msra.mxu0 %v900
    %1030 = vmatprep.subr.mxu0 %v903
    %1031 = vmatpush1.msra.mxu0 %v902
    %1032 = vmatprep.subr.mxu0 %v905
    %1033 = vmatpush1.msra.mxu0 %v904
    %1034 = vmatprep.subr.mxu0 %v907
    %1035 = vmatpush1.msra.mxu0 %v906
    %1036 = vmatprep.subr.mxu0 %v909
    %1037 = vmatpush1.msra.mxu0 %v908
    %1038 = vmatprep.subr.mxu0 %v911
    %1039 = vmatpush1.msra.mxu0 %v910
    %1040 = vmatprep.subr.mxu0 %v913
    %1041 = vmatpush1.msra.mxu0 %v912
    %1042 = vmatprep.subr.mxu0 %v915
    %1043 = vmatpush1.msra.mxu0 %v914
    %1044 = vmatprep.subr.mxu0 %v917
    %1045 = vmatpush1.msra.mxu0 %v916
    %1046 = vmatprep.subr.mxu0 %v919
    %1047 = vmatpush1.msra.mxu0 %v918
    %1048 = vmatprep.mubr.f32.mxu0 %v361
    %1049 = vmatmul.mubr.f32.gmra.mrb[0].mxu0 %v359
    %v1050 = vpop.f32.mrb[0].mxu0
    %v1051 = vadd.f32 0.0, %v1050
    %v1052 = vpop.f32.mrb[0].mxu0
    %v1053 = vadd.f32 0.0, %v1052
    %1054 = vmatprep.mubr.f32.mxu0 %v367
    %1055 = vmatmul.mubr.f32.gmra.mrb[0].mxu0 %v365
    %v1056 = vpop.f32.mrb[0].mxu0
    %v1057 = vadd.f32 0.0, %v1056
    %v1058 = vpop.f32.mrb[0].mxu0
    %v1059 = vadd.f32 0.0, %v1058
    %1060 = vdwg.mxu0
    %1061 = vmatprep.subr.mxu0 %v921
    %1062 = vmatpush1.msra.mxu0 %v920
    %1063 = vmatprep.subr.mxu0 %v923
    %1064 = vmatpush1.msra.mxu0 %v922
    %1065 = vmatprep.subr.mxu0 %v925
    %1066 = vmatpush1.msra.mxu0 %v924
    %1067 = vmatprep.subr.mxu0 %v927
    %1068 = vmatpush1.msra.mxu0 %v926
    %1069 = vmatprep.subr.mxu0 %v929
    %1070 = vmatpush1.msra.mxu0 %v928
    %1071 = vmatprep.subr.mxu0 %v931
    %1072 = vmatpush1.msra.mxu0 %v930
    %1073 = vmatprep.subr.mxu0 %v933
    %1074 = vmatpush1.msra.mxu0 %v932
    %1075 = vmatprep.subr.mxu0 %v935
    %1076 = vmatpush1.msra.mxu0 %v934
    %1077 = vmatprep.subr.mxu0 %v937
    %1078 = vmatpush1.msra.mxu0 %v936
    %1079 = vmatprep.subr.mxu0 %v939
    %1080 = vmatpush1.msra.mxu0 %v938
    %1081 = vmatprep.subr.mxu0 %v941
    %1082 = vmatpush1.msra.mxu0 %v940
    %1083 = vmatprep.subr.mxu0 %v943
    %1084 = vmatpush1.msra.mxu0 %v942
    %1085 = vmatprep.subr.mxu0 %v945
    %1086 = vmatpush1.msra.mxu0 %v944
    %1087 = vmatprep.subr.mxu0 %v947
    %1088 = vmatpush1.msra.mxu0 %v946
    %1089 = vmatprep.subr.mxu0 %v949
    %1090 = vmatpush1.msra.mxu0 %v948
    %1091 = vmatprep.subr.mxu0 %v951
    %1092 = vmatpush1.msra.mxu0 %v950
    %1093 = vmatprep.subr.mxu0 %v953
    %1094 = vmatpush1.msra.mxu0 %v952
    %1095 = vmatprep.subr.mxu0 %v955
    %1096 = vmatpush1.msra.mxu0 %v954
    %1097 = vmatprep.subr.mxu0 %v957
    %1098 = vmatpush1.msra.mxu0 %v956
    %1099 = vmatprep.subr.mxu0 %v959
    %1100 = vmatpush1.msra.mxu0 %v958
    %1101 = vmatprep.subr.mxu0 %v961
    %1102 = vmatpush1.msra.mxu0 %v960
    %1103 = vmatprep.subr.mxu0 %v963
    %1104 = vmatpush1.msra.mxu0 %v962
    %1105 = vmatprep.subr.mxu0 %v965
    %1106 = vmatpush1.msra.mxu0 %v964
    %1107 = vmatprep.subr.mxu0 %v967
    %1108 = vmatpush1.msra.mxu0 %v966
    %1109 = vmatprep.subr.mxu0 %v969
    %1110 = vmatpush1.msra.mxu0 %v968
    %1111 = vmatprep.subr.mxu0 %v971
    %1112 = vmatpush1.msra.mxu0 %v970
    %1113 = vmatprep.subr.mxu0 %v973
    %1114 = vmatpush1.msra.mxu0 %v972
    %1115 = vmatprep.subr.mxu0 %v975
    %1116 = vmatpush1.msra.mxu0 %v974
    %1117 = vmatprep.subr.mxu0 %v977
    %1118 = vmatpush1.msra.mxu0 %v976
    %1119 = vmatprep.subr.mxu0 %v979
    %1120 = vmatpush1.msra.mxu0 %v978
    %1121 = vmatprep.subr.mxu0 %v981
    %1122 = vmatpush1.msra.mxu0 %v980
    %1123 = vmatprep.subr.mxu0 %v983
    %1124 = vmatpush1.msra.mxu0 %v982
    %1125 = vmatprep.mubr.f32.mxu0 %v438
    %1126 = vmatmul.mubr.f32.gmra.mrb[0].mxu0 %v436
    %v1127 = vpop.f32.mrb[0].mxu0
    %v1128 = vadd.f32 %v1051, %v1127
    %v1129 = vpop.f32.mrb[0].mxu0
    %v1130 = vadd.f32 %v1053, %v1129
    %1131 = vmatprep.mubr.f32.mxu0 %v444
    %1132 = vmatmul.mubr.f32.gmra.mrb[0].mxu0 %v442
    %v1133 = vpop.f32.mrb[0].mxu0
    %v1134 = vadd.f32 %v1057, %v1133
    %v1135 = vpop.f32.mrb[0].mxu0
    %v1136 = vadd.f32 %v1059, %v1135
    %1137 = vdwg.mxu0
    %v1138 = vrot.slane %v846, 7
    %v1139 = vrot.slane %v848, 7
    %v1140 = vrot.slane %v852, 7
    %v1141 = vrot.slane %v854, 7
    %vm1142 = vcmp.lt.s32.totalorder %v126, 1
    %v1143 = vsel %vm1142, %v1138, %v1140
    %v1144 = vsel %vm1142, %v1139, %v1141
    %v1145 = vsel %vm1142, %v1140, %v1138
    %v1146 = vsel %vm1142, %v1141, %v1139
    %v1147 = vmul.f32 %v1145, %v156
    %v1148 = vmul.f32 %v1146, %v156
    %v1149 = vmul.f32 %v1143, %v157
    %v1150 = vmul.f32 %v1144, %v157
    %v1151 = vrot.slane %v1128, 1
    %v1152 = vrot.slane %v1130, 1
    %v1153 = vrot.slane %v1134, 1
    %v1154 = vrot.slane %v1136, 1
    %vm1155 = vcmp.lt.s32.totalorder %v126, 7
    %v1156 = vsel %vm1155, %v1151, %v1153
    %v1157 = vsel %vm1155, %v1152, %v1154
    %v1158 = vsel %vm1155, %v1153, %v1151
    %v1159 = vsel %vm1155, %v1154, %v1152
    %v1160 = vmul.f32 %v1156, %v162
    %v1161 = vmul.f32 %v1157, %v162
    %v1162 = vmul.f32 %v1158, %v163
    %v1163 = vmul.f32 %v1159, %v163
    %1164 = vmatprep.subr.mxu0 %v447
    %1165 = vmatpush1.msra.mxu0 %v446
    %1166 = vmatprep.subr.mxu0 %v449
    %1167 = vmatpush1.msra.mxu0 %v448
    %1168 = vmatprep.subr.mxu0 %v451
    %1169 = vmatpush1.msra.mxu0 %v450
    %1170 = vmatprep.subr.mxu0 %v453
    %1171 = vmatpush1.msra.mxu0 %v452
    %1172 = vmatprep.subr.mxu0 %v455
    %1173 = vmatpush1.msra.mxu0 %v454
    %1174 = vmatprep.subr.mxu0 %v457
    %1175 = vmatpush1.msra.mxu0 %v456
    %1176 = vmatprep.subr.mxu0 %v459
    %1177 = vmatpush1.msra.mxu0 %v458
    %1178 = vmatprep.subr.mxu0 %v461
    %1179 = vmatpush1.msra.mxu0 %v460
    %1180 = vmatprep.subr.mxu0 %v463
    %1181 = vmatpush1.msra.mxu0 %v462
    %1182 = vmatprep.subr.mxu0 %v465
    %1183 = vmatpush1.msra.mxu0 %v464
    %1184 = vmatprep.subr.mxu0 %v467
    %1185 = vmatpush1.msra.mxu0 %v466
    %1186 = vmatprep.subr.mxu0 %v469
    %1187 = vmatpush1.msra.mxu0 %v468
    %1188 = vmatprep.subr.mxu0 %v471
    %1189 = vmatpush1.msra.mxu0 %v470
    %1190 = vmatprep.subr.mxu0 %v473
    %1191 = vmatpush1.msra.mxu0 %v472
    %1192 = vmatprep.subr.mxu0 %v475
    %1193 = vmatpush1.msra.mxu0 %v474
    %1194 = vmatprep.subr.mxu0 %v477
    %1195 = vmatpush1.msra.mxu0 %v476
    %1196 = vmatprep.subr.mxu0 %v479
    %1197 = vmatpush1.msra.mxu0 %v478
    %1198 = vmatprep.subr.mxu0 %v481
    %1199 = vmatpush1.msra.mxu0 %v480
    %1200 = vmatprep.subr.mxu0 %v483
    %1201 = vmatpush1.msra.mxu0 %v482
    %1202 = vmatprep.subr.mxu0 %v485
    %1203 = vmatpush1.msra.mxu0 %v484
    %1204 = vmatprep.subr.mxu0 %v487
    %1205 = vmatpush1.msra.mxu0 %v486
    %1206 = vmatprep.subr.mxu0 %v489
    %1207 = vmatpush1.msra.mxu0 %v488
    %1208 = vmatprep.subr.mxu0 %v491
    %1209 = vmatpush1.msra.mxu0 %v490
    %1210 = vmatprep.subr.mxu0 %v493
    %1211 = vmatpush1.msra.mxu0 %v492
    %1212 = vmatprep.subr.mxu0 %v495
    %1213 = vmatpush1.msra.mxu0 %v494
    %1214 = vmatprep.subr.mxu0 %v497
    %1215 = vmatpush1.msra.mxu0 %v496
    %1216 = vmatprep.subr.mxu0 %v499
    %1217 = vmatpush1.msra.mxu0 %v498
    %1218 = vmatprep.subr.mxu0 %v501
    %1219 = vmatpush1.msra.mxu0 %v500
    %1220 = vmatprep.subr.mxu0 %v503
    %1221 = vmatpush1.msra.mxu0 %v502
    %1222 = vmatprep.subr.mxu0 %v505
    %1223 = vmatpush1.msra.mxu0 %v504
    %1224 = vmatprep.subr.mxu0 %v507
    %1225 = vmatpush1.msra.mxu0 %v506
    %1226 = vmatprep.subr.mxu0 %v509
    %1227 = vmatpush1.msra.mxu0 %v508
    %1228 = vmatprep.mubr.f32.mxu0 %v361
    %1229 = vmatmul.mubr.f32.gmra.mrb[0].mxu0 %v359
    %v1230 = vpop.f32.mrb[0].mxu0
    %v1231 = vadd.f32 %v1147, %v1230
    %v1232 = vpop.f32.mrb[0].mxu0
    %v1233 = vadd.f32 %v1148, %v1232
    %1234 = vmatprep.mubr.f32.mxu0 %v367
    %1235 = vmatmul.mubr.f32.gmra.mrb[0].mxu0 %v365
    %v1236 = vpop.f32.mrb[0].mxu0
    %v1237 = vadd.f32 %v1149, %v1236
    %v1238 = vpop.f32.mrb[0].mxu0
    %v1239 = vadd.f32 %v1150, %v1238
    %1240 = vdwg.mxu0
    %1241 = vmatprep.subr.mxu0 %v511
    %1242 = vmatpush1.msra.mxu0 %v510
    %1243 = vmatprep.subr.mxu0 %v513
    %1244 = vmatpush1.msra.mxu0 %v512
    %1245 = vmatprep.subr.mxu0 %v515
    %1246 = vmatpush1.msra.mxu0 %v514
    %1247 = vmatprep.subr.mxu0 %v517
    %1248 = vmatpush1.msra.mxu0 %v516
    %1249 = vmatprep.subr.mxu0 %v519
    %1250 = vmatpush1.msra.mxu0 %v518
    %1251 = vmatprep.subr.mxu0 %v521
    %1252 = vmatpush1.msra.mxu0 %v520
    %1253 = vmatprep.subr.mxu0 %v523
    %1254 = vmatpush1.msra.mxu0 %v522
    %1255 = vmatprep.subr.mxu0 %v525
    %1256 = vmatpush1.msra.mxu0 %v524
    %1257 = vmatprep.subr.mxu0 %v527
    %1258 = vmatpush1.msra.mxu0 %v526
    %1259 = vmatprep.subr.mxu0 %v529
    %1260 = vmatpush1.msra.mxu0 %v528
    %1261 = vmatprep.subr.mxu0 %v531
    %1262 = vmatpush1.msra.mxu0 %v530
    %1263 = vmatprep.subr.mxu0 %v533
    %1264 = vmatpush1.msra.mxu0 %v532
    %1265 = vmatprep.subr.mxu0 %v535
    %1266 = vmatpush1.msra.mxu0 %v534
    %1267 = vmatprep.subr.mxu0 %v537
    %1268 = vmatpush1.msra.mxu0 %v536
    %1269 = vmatprep.subr.mxu0 %v539
    %1270 = vmatpush1.msra.mxu0 %v538
    %1271 = vmatprep.subr.mxu0 %v541
    %1272 = vmatpush1.msra.mxu0 %v540
    %1273 = vmatprep.subr.mxu0 %v543
    %1274 = vmatpush1.msra.mxu0 %v542
    %1275 = vmatprep.subr.mxu0 %v545
    %1276 = vmatpush1.msra.mxu0 %v544
    %1277 = vmatprep.subr.mxu0 %v547
    %1278 = vmatpush1.msra.mxu0 %v546
    %1279 = vmatprep.subr.mxu0 %v549
    %1280 = vmatpush1.msra.mxu0 %v548
    %1281 = vmatprep.subr.mxu0 %v551
    %1282 = vmatpush1.msra.mxu0 %v550
    %1283 = vmatprep.subr.mxu0 %v553
    %1284 = vmatpush1.msra.mxu0 %v552
    %1285 = vmatprep.subr.mxu0 %v555
    %1286 = vmatpush1.msra.mxu0 %v554
    %1287 = vmatprep.subr.mxu0 %v557
    %1288 = vmatpush1.msra.mxu0 %v556
    %1289 = vmatprep.subr.mxu0 %v559
    %1290 = vmatpush1.msra.mxu0 %v558
    %1291 = vmatprep.subr.mxu0 %v561
    %1292 = vmatpush1.msra.mxu0 %v560
    %1293 = vmatprep.subr.mxu0 %v563
    %1294 = vmatpush1.msra.mxu0 %v562
    %1295 = vmatprep.subr.mxu0 %v565
    %1296 = vmatpush1.msra.mxu0 %v564
    %1297 = vmatprep.subr.mxu0 %v567
    %1298 = vmatpush1.msra.mxu0 %v566
    %1299 = vmatprep.subr.mxu0 %v569
    %1300 = vmatpush1.msra.mxu0 %v568
    %1301 = vmatprep.subr.mxu0 %v571
    %1302 = vmatpush1.msra.mxu0 %v570
    %1303 = vmatprep.subr.mxu0 %v573
    %1304 = vmatpush1.msra.mxu0 %v572
    %1305 = vmatprep.mubr.f32.mxu0 %v438
    %1306 = vmatmul.mubr.f32.gmra.mrb[0].mxu0 %v436
    %v1307 = vpop.f32.mrb[0].mxu0
    %v1308 = vadd.f32 %v1231, %v1307
    %v1309 = vpop.f32.mrb[0].mxu0
    %v1310 = vadd.f32 %v1233, %v1309
    %1311 = vmatprep.mubr.f32.mxu0 %v444
    %1312 = vmatmul.mubr.f32.gmra.mrb[0].mxu0 %v442
    %v1313 = vpop.f32.mrb[0].mxu0
    %v1314 = vadd.f32 %v1237, %v1313
    %v1315 = vpop.f32.mrb[0].mxu0
    %v1316 = vadd.f32 %v1239, %v1315
    %1317 = vdwg.mxu0
    %v1318 = vadd.f32 %v1308, %v1160
    %v1319 = vadd.f32 %v1310, %v1161
    %v1320 = vadd.f32 %v1314, %v1162
    %v1321 = vadd.f32 %v1316, %v1163
    %v1322 = vld [vmem:[%s4] sm:$0x3]
    %v1324 = vlaneseq
    %v1325 = vshrl.u32 %v1324, 7
    %v1326 = vsub.s32 0, %v1325
    %v1327 = vrot.slane %v1322, %v1326
    %v1328 = vlaneseq
    %v1329 = vshrl.u32 %v1328, 7
    %v1330 = vsub.s32 1, %v1329
    %v1331 = vrot.slane %v1322, %v1330
    %v1334 = vadd.f32 %v1318, %v1327
    %v1335 = vadd.f32 %v1319, %v1331
    %v1336 = vadd.f32 %v1320, %v1327
    %v1337 = vadd.f32 %v1321, %v1331
    %v1338 = vadd.f32 %v1334, %v1336
    %v1339 = vrot.slane %v1338, 4
    %v1340 = vadd.f32 %v1338, %v1339
    %v1341 = vrot.slane %v1340, 2
    %v1342 = vadd.f32 %v1340, %v1341
    %v1343 = vrot.slane %v1342, 1
    %v1344 = vadd.f32 %v1342, %v1343
    %v1345 = vadd.f32 %v1335, %v1337
    %v1346 = vrot.slane %v1345, 4
    %v1347 = vadd.f32 %v1345, %v1346
    %v1348 = vrot.slane %v1347, 2
    %v1349 = vadd.f32 %v1347, %v1348
    %v1350 = vrot.slane %v1349, 1
    %v1351 = vadd.f32 %v1349, %v1350
    %v1352 = vmul.f32 %v1334, %v1334
    %v1353 = vmul.f32 %v1335, %v1335
    %v1354 = vmul.f32 %v1336, %v1336
    %v1355 = vmul.f32 %v1337, %v1337
    %v1356 = vadd.f32 %v1352, %v1354
    %v1357 = vrot.slane %v1356, 4
    %v1358 = vadd.f32 %v1356, %v1357
    %v1359 = vrot.slane %v1358, 2
    %v1360 = vadd.f32 %v1358, %v1359
    %v1361 = vrot.slane %v1360, 1
    %v1362 = vadd.f32 %v1360, %v1361
    %v1363 = vadd.f32 %v1353, %v1355
    %v1364 = vrot.slane %v1363, 4
    %v1365 = vadd.f32 %v1363, %v1364
    %v1366 = vrot.slane %v1365, 2
    %v1367 = vadd.f32 %v1365, %v1366
    %v1368 = vrot.slane %v1367, 1
    %v1369 = vadd.f32 %v1367, %v1368
    %vm1370 = vcmask 1040384
    %v1371 = vsel %vm1370, %v1344, %v1362
    %v1372 = vsel %vm1370, %v1351, %v1369
    %v1373 = vld [vmem:[%s14] sm:$0xff]
    %v1374 = vld [vmem:[%s14 + $0x8] sm:$0xff]
    %v1375 = vld [vmem:[%s14 + $0x10] sm:$0xff]
    %v1376 = vld [vmem:[%s14 + $0x18] sm:$0xff]
    %v1377 = vld [vmem:[%s14 + $0x20] sm:$0xff]
    %v1378 = vld [vmem:[%s14 + $0x28] sm:$0xff]
    %v1379 = vld [vmem:[%s14 + $0x30] sm:$0xff]
    %v1380 = vld [vmem:[%s14 + $0x38] sm:$0xff]
    %v1381 = vld [vmem:[%s14 + $0x40] sm:$0xff]
    %v1382 = vld [vmem:[%s14 + $0x48] sm:$0xff]
    %v1383 = vld [vmem:[%s14 + $0x50] sm:$0xff]
    %v1384 = vld [vmem:[%s14 + $0x58] sm:$0xff]
    %v1385 = vld [vmem:[%s14 + $0x60] sm:$0xff]
    %v1386 = vld [vmem:[%s14 + $0x68] sm:$0xff]
    %v1387 = vld [vmem:[%s14 + $0x70] sm:$0xff]
    %v1388 = vld [vmem:[%s14 + $0x78] sm:$0xff]
    %v1389 = vld [vmem:[%s14 + $0x80] sm:$0xff]
    %v1390 = vld [vmem:[%s14 + $0x88] sm:$0xff]
    %v1391 = vld [vmem:[%s14 + $0x90] sm:$0xff]
    %v1392 = vld [vmem:[%s14 + $0x98] sm:$0xff]
    %v1393 = vld [vmem:[%s14 + $0xa0] sm:$0xff]
    %v1394 = vld [vmem:[%s14 + $0xa8] sm:$0xff]
    %v1395 = vld [vmem:[%s14 + $0xb0] sm:$0xff]
    %v1396 = vld [vmem:[%s14 + $0xb8] sm:$0xff]
    %v1397 = vld [vmem:[%s14 + $0xc0] sm:$0xff]
    %v1398 = vld [vmem:[%s14 + $0xc8] sm:$0xff]
    %v1399 = vld [vmem:[%s14 + $0xd0] sm:$0xff]
    %v1400 = vld [vmem:[%s14 + $0xd8] sm:$0xff]
    %v1401 = vld [vmem:[%s14 + $0xe0] sm:$0xff]
    %v1402 = vld [vmem:[%s14 + $0xe8] sm:$0xff]
    %v1403 = vld [vmem:[%s14 + $0xf0] sm:$0xff]
    %v1404 = vld [vmem:[%s14 + $0xf8] sm:$0xff]
    %1405 = vmatprep.subr.mxu0 0.0
    %1406 = vmatpush1.msra.mxu0 %v1373
    %1407 = vmatprep.subr.mxu0 0.0
    %1408 = vmatpush1.msra.mxu0 %v1374
    %1409 = vmatprep.subr.mxu0 0.0
    %1410 = vmatpush1.msra.mxu0 %v1375
    %1411 = vmatprep.subr.mxu0 0.0
    %1412 = vmatpush1.msra.mxu0 %v1376
    %1413 = vmatprep.subr.mxu0 0.0
    %1414 = vmatpush1.msra.mxu0 %v1377
    %1415 = vmatprep.subr.mxu0 0.0
    %1416 = vmatpush1.msra.mxu0 %v1378
    %1417 = vmatprep.subr.mxu0 0.0
    %1418 = vmatpush1.msra.mxu0 %v1379
    %1419 = vmatprep.subr.mxu0 0.0
    %1420 = vmatpush1.msra.mxu0 %v1380
    %1421 = vmatprep.subr.mxu0 0.0
    %1422 = vmatpush1.msra.mxu0 %v1381
    %1423 = vmatprep.subr.mxu0 0.0
    %1424 = vmatpush1.msra.mxu0 %v1382
    %1425 = vmatprep.subr.mxu0 0.0
    %1426 = vmatpush1.msra.mxu0 %v1383
    %1427 = vmatprep.subr.mxu0 0.0
    %1428 = vmatpush1.msra.mxu0 %v1384
    %1429 = vmatprep.subr.mxu0 0.0
    %1430 = vmatpush1.msra.mxu0 %v1385
    %1431 = vmatprep.subr.mxu0 0.0
    %1432 = vmatpush1.msra.mxu0 %v1386
    %1433 = vmatprep.subr.mxu0 0.0
    %1434 = vmatpush1.msra.mxu0 %v1387
    %1435 = vmatprep.subr.mxu0 0.0
    %1436 = vmatpush1.msra.mxu0 %v1388
    %1437 = vmatprep.subr.mxu0 0.0
    %1438 = vmatpush1.msra.mxu0 %v1389
    %1439 = vmatprep.subr.mxu0 0.0
    %1440 = vmatpush1.msra.mxu0 %v1390
    %1441 = vmatprep.subr.mxu0 0.0
    %1442 = vmatpush1.msra.mxu0 %v1391
    %1443 = vmatprep.subr.mxu0 0.0
    %1444 = vmatpush1.msra.mxu0 %v1392
    %1445 = vmatprep.subr.mxu0 0.0
    %1446 = vmatpush1.msra.mxu0 %v1393
    %1447 = vmatprep.subr.mxu0 0.0
    %1448 = vmatpush1.msra.mxu0 %v1394
    %1449 = vmatprep.subr.mxu0 0.0
    %1450 = vmatpush1.msra.mxu0 %v1395
    %1451 = vmatprep.subr.mxu0 0.0
    %1452 = vmatpush1.msra.mxu0 %v1396
    %1453 = vmatprep.subr.mxu0 0.0
    %1454 = vmatpush1.msra.mxu0 %v1397
    %1455 = vmatprep.subr.mxu0 0.0
    %1456 = vmatpush1.msra.mxu0 %v1398
    %1457 = vmatprep.subr.mxu0 0.0
    %1458 = vmatpush1.msra.mxu0 %v1399
    %1459 = vmatprep.subr.mxu0 0.0
    %1460 = vmatpush1.msra.mxu0 %v1400
    %1461 = vmatprep.subr.mxu0 0.0
    %1462 = vmatpush1.msra.mxu0 %v1401
    %1463 = vmatprep.subr.mxu0 0.0
    %1464 = vmatpush1.msra.mxu0 %v1402
    %1465 = vmatprep.subr.mxu0 0.0
    %1466 = vmatpush1.msra.mxu0 %v1403
    %1467 = vmatprep.subr.mxu0 0.0
    %1468 = vmatpush1.msra.mxu0 %v1404
    %1469 = vmatprep.mubr.f32.mxu0 %v1372
    %1470 = vmatmul.mubr.f32.gmra.mrb[0].mxu0 %v1371
    %v1471 = vpop.f32.mrb[0].mxu0
    %v1472 = vadd.f32 0.0, %v1471
    %v1473 = vpop.f32.mrb[0].mxu0
    %1474 = vdwg.mxu0
    %v1475 = vmul.f32 %v1472, 0.0009765625
    %v1476 = vmul.f32 %v1475, %v1475
    %v1478 = vrot.slane %v1476, 7
    %v1480 = vsub.f32 %v1475, %v1478
    %v1481 = vld [vmem:[%s5] sm:$0x1]
    %v1482 = vadd.f32 %v1480, 1e-05
    %v1483 = vrsqrt.pop %v1482
    %v1486 = vunpack.c.l.s4 1966171168
    %v1487 = vunpack.c.0.s8 %v1486
    %v1488 = vlaneseq
    %v1489 = vshrl.u32 %v1488, 7
    %v1490 = vsub.s32 %v1487, %v1489
    %v1491 = vrot.slane %v1483, %v1490
    %v1492 = vcombine.high %v1491, %v1491
    %v1494 = vunpack.c.l.s4 1966171168
    %v1495 = vunpack.c.0.s8 %v1494
    %v1496 = vlaneseq
    %v1497 = vshrl.u32 %v1496, 7
    %v1498 = vsub.s32 %v1495, %v1497
    %v1499 = vrot.slane %v1492, %v1498
    %v1501 = vmul.f32 %v1481, %v1499
    %v1502 = vld [vmem:[%s6] sm:$0x1]
    %v1503 = vmul.f32 %v1475, %v1501
    %v1504 = vsub.f32 %v1502, %v1503
    %v1506 = vlaneseq
    %v1507 = vshrl.u32 %v1506, 7
    %v1508 = vsub.s32 0, %v1507
    %v1509 = vrot.slane %v1504, %v1508
    %v1511 = vsel %vm1370, %v1501, %v1509
    %v1512 = vld [vmem:[%s15] sm:$0xff]
    %v1514 = vcombine.high %v1512, %v1512
    %vm1515 = vcmask 31744
    %v1517 = vsel %vm1515, %v1511, 0
    %vm1519 = vcmask 1043456
    %v1520 = vsel %vm1519, %v1512, 0
    %v1522 = vsel %vm1519, %v1514, 0
    %1524 = vmatprep.subr.mxu0 %v1522
    %1525 = vmatpush1.msra.mxu0 %v1520
    %1526 = vmatprep.subr.mxu0 0.0
    %1527 = vmatpush1.msra.mxu0 0.0
    %1528 = vmatprep.subr.mxu0 0.0
    %1529 = vmatpush1.msra.mxu0 0.0
    %1530 = vmatprep.subr.mxu0 0.0
    %1531 = vmatpush1.msra.mxu0 0.0
    %1532 = vmatprep.subr.mxu0 0.0
    %1533 = vmatpush1.msra.mxu0 0.0
    %1534 = vmatprep.subr.mxu0 0.0
    %1535 = vmatpush1.msra.mxu0 0.0
    %1536 = vmatprep.subr.mxu0 0.0
    %1537 = vmatpush1.msra.mxu0 0.0
    %1538 = vmatprep.subr.mxu0 0.0
    %1539 = vmatpush1.msra.mxu0 0.0
    %1540 = vmatprep.subr.mxu0 0.0
    %1541 = vmatpush1.msra.mxu0 0.0
    %1542 = vmatprep.subr.mxu0 0.0
    %1543 = vmatpush1.msra.mxu0 0.0
    %1544 = vmatprep.subr.mxu0 0.0
    %1545 = vmatpush1.msra.mxu0 0.0
    %1546 = vmatprep.subr.mxu0 0.0
    %1547 = vmatpush1.msra.mxu0 0.0
    %1548 = vmatprep.subr.mxu0 0.0
    %1549 = vmatpush1.msra.mxu0 0.0
    %1550 = vmatprep.subr.mxu0 0.0
    %1551 = vmatpush1.msra.mxu0 0.0
    %1552 = vmatprep.subr.mxu0 0.0
    %1553 = vmatpush1.msra.mxu0 0.0
    %1554 = vmatprep.subr.mxu0 0.0
    %1555 = vmatpush1.msra.mxu0 0.0
    %1556 = vmatprep.subr.mxu0 0.0
    %1557 = vmatpush1.msra.mxu0 0.0
    %1558 = vmatprep.subr.mxu0 0.0
    %1559 = vmatpush1.msra.mxu0 0.0
    %1560 = vmatprep.subr.mxu0 0.0
    %1561 = vmatpush1.msra.mxu0 0.0
    %1562 = vmatprep.subr.mxu0 0.0
    %1563 = vmatpush1.msra.mxu0 0.0
    %1564 = vmatprep.subr.mxu0 0.0
    %1565 = vmatpush1.msra.mxu0 0.0
    %1566 = vmatprep.subr.mxu0 0.0
    %1567 = vmatpush1.msra.mxu0 0.0
    %1568 = vmatprep.subr.mxu0 0.0
    %1569 = vmatpush1.msra.mxu0 0.0
    %1570 = vmatprep.subr.mxu0 0.0
    %1571 = vmatpush1.msra.mxu0 0.0
    %1572 = vmatprep.subr.mxu0 0.0
    %1573 = vmatpush1.msra.mxu0 0.0
    %1574 = vmatprep.subr.mxu0 0.0
    %1575 = vmatpush1.msra.mxu0 0.0
    %1576 = vmatprep.subr.mxu0 0.0
    %1577 = vmatpush1.msra.mxu0 0.0
    %1578 = vmatprep.subr.mxu0 0.0
    %1579 = vmatpush1.msra.mxu0 0.0
    %1580 = vmatprep.subr.mxu0 0.0
    %1581 = vmatpush1.msra.mxu0 0.0
    %1582 = vmatprep.subr.mxu0 0.0
    %1583 = vmatpush1.msra.mxu0 0.0
    %1584 = vmatprep.subr.mxu0 0.0
    %1585 = vmatpush1.msra.mxu0 0.0
    %1586 = vmatprep.subr.mxu0 0.0
    %1587 = vmatpush1.msra.mxu0 0.0
    %1588 = vmatprep.mubr.f32.mxu0 0.0
    %1589 = vmatmul.mubr.f32.gmra.mrb[0].mxu0 %v1517
    %v1590 = vpop.f32.mrb[0].mxu0
    %v1591 = vadd.f32 0.0, %v1590
    %v1592 = vpop.f32.mrb[0].mxu0
    %v1593 = vadd.f32 0.0, %v1592
    %1594 = vdwg.mxu0
    %v1595 = vlaneseq
    %v1596 = vshrl.u32 %v1595, 7
    %v1597 = vsub.s32 0, %v1596
    %v1598 = vrot.slane %v1591, %v1597
    %v1599 = vlaneseq
    %v1600 = vshrl.u32 %v1599, 7
    %v1601 = vsub.s32 0, %v1600
    %v1602 = vrot.slane %v1593, %v1601
    %v1603 = vmul.f32 %v1334, %v1598
    %v1604 = vmul.f32 %v1335, %v1602
    %v1605 = vmul.f32 %v1336, %v1598
    %v1606 = vmul.f32 %v1337, %v1602
    %v1607 = vlaneseq
    %v1608 = vshrl.u32 %v1607, 7
    %v1609 = vsub.s32 1, %v1608
    %v1610 = vrot.slane %v1591, %v1609
    %v1611 = vlaneseq
    %v1612 = vshrl.u32 %v1611, 7
    %v1613 = vsub.s32 1, %v1612
    %v1614 = vrot.slane %v1593, %v1613
    %v1615 = vadd.f32 %v1603, %v1610
    %v1616 = vadd.f32 %v1604, %v1614
    %v1617 = vadd.f32 %v1605, %v1610
    %v1618 = vadd.f32 %v1606, %v1614
    %v1619 = vmax.f32 %v1615, 0.0
    %v1620 = vmax.f32 %v1616, 0.0
    %v1621 = vmax.f32 %v1617, 0.0
    %v1622 = vmax.f32 %v1618, 0.0
    %1623 = vmatprep.subr.mxu0 %v165
    %1624 = vmatpush1.msra.mxu0 %v164
    %1625 = vmatprep.subr.mxu0 %v169
    %1626 = vmatpush1.msra.mxu0 %v168
    %1627 = vmatprep.subr.mxu0 %v173
    %1628 = vmatpush1.msra.mxu0 %v172
    %1629 = vmatprep.subr.mxu0 %v177
    %1630 = vmatpush1.msra.mxu0 %v176
    %1631 = vmatprep.subr.mxu0 %v181
    %1632 = vmatpush1.msra.mxu0 %v180
    %1633 = vmatprep.subr.mxu0 %v185
    %1634 = vmatpush1.msra.mxu0 %v184
    %1635 = vmatprep.subr.mxu0 %v189
    %1636 = vmatpush1.msra.mxu0 %v188
    %1637 = vmatprep.subr.mxu0 %v193
    %1638 = vmatpush1.msra.mxu0 %v192
    %1639 = vmatprep.subr.mxu0 %v197
    %1640 = vmatpush1.msra.mxu0 %v196
    %1641 = vmatprep.subr.mxu0 %v201
    %1642 = vmatpush1.msra.mxu0 %v200
    %1643 = vmatprep.subr.mxu0 %v205
    %1644 = vmatpush1.msra.mxu0 %v204
    %1645 = vmatprep.subr.mxu0 %v209
    %1646 = vmatpush1.msra.mxu0 %v208
    %1647 = vmatprep.subr.mxu0 %v213
    %1648 = vmatpush1.msra.mxu0 %v212
    %1649 = vmatprep.subr.mxu0 %v217
    %1650 = vmatpush1.msra.mxu0 %v216
    %1651 = vmatprep.subr.mxu0 %v221
    %1652 = vmatpush1.msra.mxu0 %v220
    %1653 = vmatprep.subr.mxu0 %v225
    %1654 = vmatpush1.msra.mxu0 %v224
    %1655 = vmatprep.subr.mxu0 %v229
    %1656 = vmatpush1.msra.mxu0 %v228
    %1657 = vmatprep.subr.mxu0 %v233
    %1658 = vmatpush1.msra.mxu0 %v232
    %1659 = vmatprep.subr.mxu0 %v237
    %1660 = vmatpush1.msra.mxu0 %v236
    %1661 = vmatprep.subr.mxu0 %v241
    %1662 = vmatpush1.msra.mxu0 %v240
    %1663 = vmatprep.subr.mxu0 %v245
    %1664 = vmatpush1.msra.mxu0 %v244
    %1665 = vmatprep.subr.mxu0 %v249
    %1666 = vmatpush1.msra.mxu0 %v248
    %1667 = vmatprep.subr.mxu0 %v253
    %1668 = vmatpush1.msra.mxu0 %v252
    %1669 = vmatprep.subr.mxu0 %v257
    %1670 = vmatpush1.msra.mxu0 %v256
    %1671 = vmatprep.subr.mxu0 %v261
    %1672 = vmatpush1.msra.mxu0 %v260
    %1673 = vmatprep.subr.mxu0 %v265
    %1674 = vmatpush1.msra.mxu0 %v264
    %1675 = vmatprep.subr.mxu0 %v269
    %1676 = vmatpush1.msra.mxu0 %v268
    %1677 = vmatprep.subr.mxu0 %v273
    %1678 = vmatpush1.msra.mxu0 %v272
    %1679 = vmatprep.subr.mxu0 %v277
    %1680 = vmatpush1.msra.mxu0 %v276
    %1681 = vmatprep.subr.mxu0 %v281
    %1682 = vmatpush1.msra.mxu0 %v280
    %1683 = vmatprep.subr.mxu0 %v285
    %1684 = vmatpush1.msra.mxu0 %v284
    %1685 = vmatprep.subr.mxu0 %v289
    %1686 = vmatpush1.msra.mxu0 %v288
    %1687 = vmatprep.mubr.f32.mxu0 %v1620
    %1688 = vmatmul.mubr.f32.gmra.mrb[0].mxu0 %v1619
    %v1689 = vpop.f32.mrb[0].mxu0
    %v1690 = vadd.f32 0.0, %v1689
    %v1691 = vpop.f32.mrb[0].mxu0
    %v1692 = vadd.f32 0.0, %v1691
    %1693 = vmatprep.mubr.f32.mxu0 %v1622
    %1694 = vmatmul.mubr.f32.gmra.mrb[0].mxu0 %v1621
    %v1695 = vpop.f32.mrb[0].mxu0
    %v1696 = vadd.f32 0.0, %v1695
    %v1697 = vpop.f32.mrb[0].mxu0
    %v1698 = vadd.f32 0.0, %v1697
    %1699 = vdwg.mxu0
    %1700 = vmatprep.subr.mxu0 %v167
    %1701 = vmatpush1.msra.mxu0 %v166
    %1702 = vmatprep.subr.mxu0 %v171
    %1703 = vmatpush1.msra.mxu0 %v170
    %1704 = vmatprep.subr.mxu0 %v175
    %1705 = vmatpush1.msra.mxu0 %v174
    %1706 = vmatprep.subr.mxu0 %v179
    %1707 = vmatpush1.msra.mxu0 %v178
    %1708 = vmatprep.subr.mxu0 %v183
    %1709 = vmatpush1.msra.mxu0 %v182
    %1710 = vmatprep.subr.mxu0 %v187
    %1711 = vmatpush1.msra.mxu0 %v186
    %1712 = vmatprep.subr.mxu0 %v191
    %1713 = vmatpush1.msra.mxu0 %v190
    %1714 = vmatprep.subr.mxu0 %v195
    %1715 = vmatpush1.msra.mxu0 %v194
    %1716 = vmatprep.subr.mxu0 %v199
    %1717 = vmatpush1.msra.mxu0 %v198
    %1718 = vmatprep.subr.mxu0 %v203
    %1719 = vmatpush1.msra.mxu0 %v202
    %1720 = vmatprep.subr.mxu0 %v207
    %1721 = vmatpush1.msra.mxu0 %v206
    %1722 = vmatprep.subr.mxu0 %v211
    %1723 = vmatpush1.msra.mxu0 %v210
    %1724 = vmatprep.subr.mxu0 %v215
    %1725 = vmatpush1.msra.mxu0 %v214
    %1726 = vmatprep.subr.mxu0 %v219
    %1727 = vmatpush1.msra.mxu0 %v218
    %1728 = vmatprep.subr.mxu0 %v223
    %1729 = vmatpush1.msra.mxu0 %v222
    %1730 = vmatprep.subr.mxu0 %v227
    %1731 = vmatpush1.msra.mxu0 %v226
    %1732 = vmatprep.subr.mxu0 %v231
    %1733 = vmatpush1.msra.mxu0 %v230
    %1734 = vmatprep.subr.mxu0 %v235
    %1735 = vmatpush1.msra.mxu0 %v234
    %1736 = vmatprep.subr.mxu0 %v239
    %1737 = vmatpush1.msra.mxu0 %v238
    %1738 = vmatprep.subr.mxu0 %v243
    %1739 = vmatpush1.msra.mxu0 %v242
    %1740 = vmatprep.subr.mxu0 %v247
    %1741 = vmatpush1.msra.mxu0 %v246
    %1742 = vmatprep.subr.mxu0 %v251
    %1743 = vmatpush1.msra.mxu0 %v250
    %1744 = vmatprep.subr.mxu0 %v255
    %1745 = vmatpush1.msra.mxu0 %v254
    %1746 = vmatprep.subr.mxu0 %v259
    %1747 = vmatpush1.msra.mxu0 %v258
    %1748 = vmatprep.subr.mxu0 %v263
    %1749 = vmatpush1.msra.mxu0 %v262
    %1750 = vmatprep.subr.mxu0 %v267
    %1751 = vmatpush1.msra.mxu0 %v266
    %1752 = vmatprep.subr.mxu0 %v271
    %1753 = vmatpush1.msra.mxu0 %v270
    %1754 = vmatprep.subr.mxu0 %v275
    %1755 = vmatpush1.msra.mxu0 %v274
    %1756 = vmatprep.subr.mxu0 %v279
    %1757 = vmatpush1.msra.mxu0 %v278
    %1758 = vmatprep.subr.mxu0 %v283
    %1759 = vmatpush1.msra.mxu0 %v282
    %1760 = vmatprep.subr.mxu0 %v287
    %1761 = vmatpush1.msra.mxu0 %v286
    %1762 = vmatprep.subr.mxu0 %v291
    %1763 = vmatpush1.msra.mxu0 %v290
    %1764 = vmatprep.mubr.f32.mxu0 %v1620
    %1765 = vmatmul.mubr.f32.gmra.mrb[0].mxu0 %v1619
    %v1766 = vpop.f32.mrb[0].mxu0
    %v1767 = vadd.f32 0.0, %v1766
    %v1768 = vpop.f32.mrb[0].mxu0
    %v1769 = vadd.f32 0.0, %v1768
    %1770 = vmatprep.mubr.f32.mxu0 %v1622
    %1771 = vmatmul.mubr.f32.gmra.mrb[0].mxu0 %v1621
    %v1772 = vpop.f32.mrb[0].mxu0
    %v1773 = vadd.f32 0.0, %v1772
    %v1774 = vpop.f32.mrb[0].mxu0
    %v1775 = vadd.f32 0.0, %v1774
    %1776 = vdwg.mxu0
    %v1777 = vld [vmem:[#allocation6] sm:$0xff]
    %v1778 = vld [vmem:[#allocation6 + $0x8] sm:$0xff]
    %v1779 = vld [vmem:[#allocation6 + $0x10] sm:$0xff]
    %v1780 = vld [vmem:[#allocation6 + $0x18] sm:$0xff]
    %v1781 = vld [vmem:[#allocation6 + $0x20] sm:$0xff]
    %v1782 = vld [vmem:[#allocation6 + $0x28] sm:$0xff]
    %v1783 = vld [vmem:[#allocation6 + $0x30] sm:$0xff]
    %v1784 = vld [vmem:[#allocation6 + $0x38] sm:$0xff]
    %v1785 = vld [vmem:[#allocation6 + $0x40] sm:$0xff]
    %v1786 = vld [vmem:[#allocation6 + $0x48] sm:$0xff]
    %v1787 = vld [vmem:[#allocation6 + $0x50] sm:$0xff]
    %v1788 = vld [vmem:[#allocation6 + $0x58] sm:$0xff]
    %v1789 = vld [vmem:[#allocation6 + $0x60] sm:$0xff]
    %v1790 = vld [vmem:[#allocation6 + $0x68] sm:$0xff]
    %v1791 = vld [vmem:[#allocation6 + $0x70] sm:$0xff]
    %v1792 = vld [vmem:[#allocation6 + $0x78] sm:$0xff]
    %v1793 = vld [vmem:[#allocation6 + $0x80] sm:$0xff]
    %v1794 = vld [vmem:[#allocation6 + $0x88] sm:$0xff]
    %v1795 = vld [vmem:[#allocation6 + $0x90] sm:$0xff]
    %v1796 = vld [vmem:[#allocation6 + $0x98] sm:$0xff]
    %v1797 = vld [vmem:[#allocation6 + $0xa0] sm:$0xff]
    %v1798 = vld [vmem:[#allocation6 + $0xa8] sm:$0xff]
    %v1799 = vld [vmem:[#allocation6 + $0xb0] sm:$0xff]
    %v1800 = vld [vmem:[#allocation6 + $0xb8] sm:$0xff]
    %v1801 = vld [vmem:[#allocation6 + $0xc0] sm:$0xff]
    %v1802 = vld [vmem:[#allocation6 + $0xc8] sm:$0xff]
    %v1803 = vld [vmem:[#allocation6 + $0xd0] sm:$0xff]
    %v1804 = vld [vmem:[#allocation6 + $0xd8] sm:$0xff]
    %v1805 = vld [vmem:[#allocation6 + $0xe0] sm:$0xff]
    %v1806 = vld [vmem:[#allocation6 + $0xe8] sm:$0xff]
    %v1807 = vld [vmem:[#allocation6 + $0xf0] sm:$0xff]
    %v1808 = vld [vmem:[#allocation6 + $0xf8] sm:$0xff]
    %v1809 = vld [vmem:[#allocation6 + $0x100] sm:$0xff]
    %v1810 = vld [vmem:[#allocation6 + $0x108] sm:$0xff]
    %v1811 = vld [vmem:[#allocation6 + $0x110] sm:$0xff]
    %v1812 = vld [vmem:[#allocation6 + $0x118] sm:$0xff]
    %v1813 = vld [vmem:[#allocation6 + $0x120] sm:$0xff]
    %v1814 = vld [vmem:[#allocation6 + $0x128] sm:$0xff]
    %v1815 = vld [vmem:[#allocation6 + $0x130] sm:$0xff]
    %v1816 = vld [vmem:[#allocation6 + $0x138] sm:$0xff]
    %v1817 = vld [vmem:[#allocation6 + $0x140] sm:$0xff]
    %v1818 = vld [vmem:[#allocation6 + $0x148] sm:$0xff]
    %v1819 = vld [vmem:[#allocation6 + $0x150] sm:$0xff]
    %v1820 = vld [vmem:[#allocation6 + $0x158] sm:$0xff]
    %v1821 = vld [vmem:[#allocation6 + $0x160] sm:$0xff]
    %v1822 = vld [vmem:[#allocation6 + $0x168] sm:$0xff]
    %v1823 = vld [vmem:[#allocation6 + $0x170] sm:$0xff]
    %v1824 = vld [vmem:[#allocation6 + $0x178] sm:$0xff]
    %v1825 = vld [vmem:[#allocation6 + $0x180] sm:$0xff]
    %v1826 = vld [vmem:[#allocation6 + $0x188] sm:$0xff]
    %v1827 = vld [vmem:[#allocation6 + $0x190] sm:$0xff]
    %v1828 = vld [vmem:[#allocation6 + $0x198] sm:$0xff]
    %v1829 = vld [vmem:[#allocation6 + $0x1a0] sm:$0xff]
    %v1830 = vld [vmem:[#allocation6 + $0x1a8] sm:$0xff]
    %v1831 = vld [vmem:[#allocation6 + $0x1b0] sm:$0xff]
    %v1832 = vld [vmem:[#allocation6 + $0x1b8] sm:$0xff]
    %v1833 = vld [vmem:[#allocation6 + $0x1c0] sm:$0xff]
    %v1834 = vld [vmem:[#allocation6 + $0x1c8] sm:$0xff]
    %v1835 = vld [vmem:[#allocation6 + $0x1d0] sm:$0xff]
    %v1836 = vld [vmem:[#allocation6 + $0x1d8] sm:$0xff]
    %v1837 = vld [vmem:[#allocation6 + $0x1e0] sm:$0xff]
    %v1838 = vld [vmem:[#allocation6 + $0x1e8] sm:$0xff]
    %v1839 = vld [vmem:[#allocation6 + $0x1f0] sm:$0xff]
    %v1840 = vld [vmem:[#allocation6 + $0x1f8] sm:$0xff]
    %v1841 = vld [vmem:[#allocation6 + $0x200] sm:$0xff]
    %v1842 = vld [vmem:[#allocation6 + $0x208] sm:$0xff]
    %v1843 = vld [vmem:[#allocation6 + $0x210] sm:$0xff]
    %v1844 = vld [vmem:[#allocation6 + $0x218] sm:$0xff]
    %v1845 = vld [vmem:[#allocation6 + $0x220] sm:$0xff]
    %v1846 = vld [vmem:[#allocation6 + $0x228] sm:$0xff]
    %v1847 = vld [vmem:[#allocation6 + $0x230] sm:$0xff]
    %v1848 = vld [vmem:[#allocation6 + $0x238] sm:$0xff]
    %v1849 = vld [vmem:[#allocation6 + $0x240] sm:$0xff]
    %v1850 = vld [vmem:[#allocation6 + $0x248] sm:$0xff]
    %v1851 = vld [vmem:[#allocation6 + $0x250] sm:$0xff]
    %v1852 = vld [vmem:[#allocation6 + $0x258] sm:$0xff]
    %v1853 = vld [vmem:[#allocation6 + $0x260] sm:$0xff]
    %v1854 = vld [vmem:[#allocation6 + $0x268] sm:$0xff]
    %v1855 = vld [vmem:[#allocation6 + $0x270] sm:$0xff]
    %v1856 = vld [vmem:[#allocation6 + $0x278] sm:$0xff]
    %v1857 = vld [vmem:[#allocation6 + $0x280] sm:$0xff]
    %v1858 = vld [vmem:[#allocation6 + $0x288] sm:$0xff]
    %v1859 = vld [vmem:[#allocation6 + $0x290] sm:$0xff]
    %v1860 = vld [vmem:[#allocation6 + $0x298] sm:$0xff]
    %v1861 = vld [vmem:[#allocation6 + $0x2a0] sm:$0xff]
    %v1862 = vld [vmem:[#allocation6 + $0x2a8] sm:$0xff]
    %v1863 = vld [vmem:[#allocation6 + $0x2b0] sm:$0xff]
    %v1864 = vld [vmem:[#allocation6 + $0x2b8] sm:$0xff]
    %v1865 = vld [vmem:[#allocation6 + $0x2c0] sm:$0xff]
    %v1866 = vld [vmem:[#allocation6 + $0x2c8] sm:$0xff]
    %v1867 = vld [vmem:[#allocation6 + $0x2d0] sm:$0xff]
    %v1868 = vld [vmem:[#allocation6 + $0x2d8] sm:$0xff]
    %v1869 = vld [vmem:[#allocation6 + $0x2e0] sm:$0xff]
    %v1870 = vld [vmem:[#allocation6 + $0x2e8] sm:$0xff]
    %v1871 = vld [vmem:[#allocation6 + $0x2f0] sm:$0xff]
    %v1872 = vld [vmem:[#allocation6 + $0x2f8] sm:$0xff]
    %v1873 = vld [vmem:[#allocation6 + $0x300] sm:$0xff]
    %v1874 = vld [vmem:[#allocation6 + $0x308] sm:$0xff]
    %v1875 = vld [vmem:[#allocation6 + $0x310] sm:$0xff]
    %v1876 = vld [vmem:[#allocation6 + $0x318] sm:$0xff]
    %v1877 = vld [vmem:[#allocation6 + $0x320] sm:$0xff]
    %v1878 = vld [vmem:[#allocation6 + $0x328] sm:$0xff]
    %v1879 = vld [vmem:[#allocation6 + $0x330] sm:$0xff]
    %v1880 = vld [vmem:[#allocation6 + $0x338] sm:$0xff]
    %v1881 = vld [vmem:[#allocation6 + $0x340] sm:$0xff]
    %v1882 = vld [vmem:[#allocation6 + $0x348] sm:$0xff]
    %v1883 = vld [vmem:[#allocation6 + $0x350] sm:$0xff]
    %v1884 = vld [vmem:[#allocation6 + $0x358] sm:$0xff]
    %v1885 = vld [vmem:[#allocation6 + $0x360] sm:$0xff]
    %v1886 = vld [vmem:[#allocation6 + $0x368] sm:$0xff]
    %v1887 = vld [vmem:[#allocation6 + $0x370] sm:$0xff]
    %v1888 = vld [vmem:[#allocation6 + $0x378] sm:$0xff]
    %v1889 = vld [vmem:[#allocation6 + $0x380] sm:$0xff]
    %v1890 = vld [vmem:[#allocation6 + $0x388] sm:$0xff]
    %v1891 = vld [vmem:[#allocation6 + $0x390] sm:$0xff]
    %v1892 = vld [vmem:[#allocation6 + $0x398] sm:$0xff]
    %v1893 = vld [vmem:[#allocation6 + $0x3a0] sm:$0xff]
    %v1894 = vld [vmem:[#allocation6 + $0x3a8] sm:$0xff]
    %v1895 = vld [vmem:[#allocation6 + $0x3b0] sm:$0xff]
    %v1896 = vld [vmem:[#allocation6 + $0x3b8] sm:$0xff]
    %v1897 = vld [vmem:[#allocation6 + $0x3c0] sm:$0xff]
    %v1898 = vld [vmem:[#allocation6 + $0x3c8] sm:$0xff]
    %v1899 = vld [vmem:[#allocation6 + $0x3d0] sm:$0xff]
    %v1900 = vld [vmem:[#allocation6 + $0x3d8] sm:$0xff]
    %v1901 = vld [vmem:[#allocation6 + $0x3e0] sm:$0xff]
    %v1902 = vld [vmem:[#allocation6 + $0x3e8] sm:$0xff]
    %v1903 = vld [vmem:[#allocation6 + $0x3f0] sm:$0xff]
    %v1904 = vld [vmem:[#allocation6 + $0x3f8] sm:$0xff]
    %v1905 = vld [vmem:[#allocation4] sm:$0xff]
    %v1906 = vld [vmem:[#allocation4 + $0x8] sm:$0xff]
    %v1907 = vld [vmem:[#allocation4 + $0x10] sm:$0xff]
    %v1908 = vld [vmem:[#allocation4 + $0x18] sm:$0xff]
    %v1909 = vld [vmem:[#allocation4 + $0x20] sm:$0xff]
    %v1910 = vld [vmem:[#allocation4 + $0x28] sm:$0xff]
    %v1911 = vld [vmem:[#allocation4 + $0x30] sm:$0xff]
    %v1912 = vld [vmem:[#allocation4 + $0x38] sm:$0xff]
    %v1913 = vld [vmem:[#allocation4 + $0x40] sm:$0xff]
    %v1914 = vld [vmem:[#allocation4 + $0x48] sm:$0xff]
    %v1915 = vld [vmem:[#allocation4 + $0x50] sm:$0xff]
    %v1916 = vld [vmem:[#allocation4 + $0x58] sm:$0xff]
    %v1917 = vld [vmem:[#allocation4 + $0x60] sm:$0xff]
    %v1918 = vld [vmem:[#allocation4 + $0x68] sm:$0xff]
    %v1919 = vld [vmem:[#allocation4 + $0x70] sm:$0xff]
    %v1920 = vld [vmem:[#allocation4 + $0x78] sm:$0xff]
    %v1921 = vld [vmem:[#allocation4 + $0x80] sm:$0xff]
    %v1922 = vld [vmem:[#allocation4 + $0x88] sm:$0xff]
    %v1923 = vld [vmem:[#allocation4 + $0x90] sm:$0xff]
    %v1924 = vld [vmem:[#allocation4 + $0x98] sm:$0xff]
    %v1925 = vld [vmem:[#allocation4 + $0xa0] sm:$0xff]
    %v1926 = vld [vmem:[#allocation4 + $0xa8] sm:$0xff]
    %v1927 = vld [vmem:[#allocation4 + $0xb0] sm:$0xff]
    %v1928 = vld [vmem:[#allocation4 + $0xb8] sm:$0xff]
    %v1929 = vld [vmem:[#allocation4 + $0xc0] sm:$0xff]
    %v1930 = vld [vmem:[#allocation4 + $0xc8] sm:$0xff]
    %v1931 = vld [vmem:[#allocation4 + $0xd0] sm:$0xff]
    %v1932 = vld [vmem:[#allocation4 + $0xd8] sm:$0xff]
    %v1933 = vld [vmem:[#allocation4 + $0xe0] sm:$0xff]
    %v1934 = vld [vmem:[#allocation4 + $0xe8] sm:$0xff]
    %v1935 = vld [vmem:[#allocation4 + $0xf0] sm:$0xff]
    %v1936 = vld [vmem:[#allocation4 + $0xf8] sm:$0xff]
    %v1937 = vld [vmem:[#allocation4 + $0x100] sm:$0xff]
    %v1938 = vld [vmem:[#allocation4 + $0x108] sm:$0xff]
    %v1939 = vld [vmem:[#allocation4 + $0x110] sm:$0xff]
    %v1940 = vld [vmem:[#allocation4 + $0x118] sm:$0xff]
    %v1941 = vld [vmem:[#allocation4 + $0x120] sm:$0xff]
    %v1942 = vld [vmem:[#allocation4 + $0x128] sm:$0xff]
    %v1943 = vld [vmem:[#allocation4 + $0x130] sm:$0xff]
    %v1944 = vld [vmem:[#allocation4 + $0x138] sm:$0xff]
    %v1945 = vld [vmem:[#allocation4 + $0x140] sm:$0xff]
    %v1946 = vld [vmem:[#allocation4 + $0x148] sm:$0xff]
    %v1947 = vld [vmem:[#allocation4 + $0x150] sm:$0xff]
    %v1948 = vld [vmem:[#allocation4 + $0x158] sm:$0xff]
    %v1949 = vld [vmem:[#allocation4 + $0x160] sm:$0xff]
    %v1950 = vld [vmem:[#allocation4 + $0x168] sm:$0xff]
    %v1951 = vld [vmem:[#allocation4 + $0x170] sm:$0xff]
    %v1952 = vld [vmem:[#allocation4 + $0x178] sm:$0xff]
    %v1953 = vld [vmem:[#allocation4 + $0x180] sm:$0xff]
    %v1954 = vld [vmem:[#allocation4 + $0x188] sm:$0xff]
    %v1955 = vld [vmem:[#allocation4 + $0x190] sm:$0xff]
    %v1956 = vld [vmem:[#allocation4 + $0x198] sm:$0xff]
    %v1957 = vld [vmem:[#allocation4 + $0x1a0] sm:$0xff]
    %v1958 = vld [vmem:[#allocation4 + $0x1a8] sm:$0xff]
    %v1959 = vld [vmem:[#allocation4 + $0x1b0] sm:$0xff]
    %v1960 = vld [vmem:[#allocation4 + $0x1b8] sm:$0xff]
    %v1961 = vld [vmem:[#allocation4 + $0x1c0] sm:$0xff]
    %v1962 = vld [vmem:[#allocation4 + $0x1c8] sm:$0xff]
    %v1963 = vld [vmem:[#allocation4 + $0x1d0] sm:$0xff]
    %v1964 = vld [vmem:[#allocation4 + $0x1d8] sm:$0xff]
    %v1965 = vld [vmem:[#allocation4 + $0x1e0] sm:$0xff]
    %v1966 = vld [vmem:[#allocation4 + $0x1e8] sm:$0xff]
    %v1967 = vld [vmem:[#allocation4 + $0x1f0] sm:$0xff]
    %v1968 = vld [vmem:[#allocation4 + $0x1f8] sm:$0xff]
    %v1969 = vld [vmem:[#allocation4 + $0x200] sm:$0xff]
    %v1970 = vld [vmem:[#allocation4 + $0x208] sm:$0xff]
    %v1971 = vld [vmem:[#allocation4 + $0x210] sm:$0xff]
    %v1972 = vld [vmem:[#allocation4 + $0x218] sm:$0xff]
    %v1973 = vld [vmem:[#allocation4 + $0x220] sm:$0xff]
    %v1974 = vld [vmem:[#allocation4 + $0x228] sm:$0xff]
    %v1975 = vld [vmem:[#allocation4 + $0x230] sm:$0xff]
    %v1976 = vld [vmem:[#allocation4 + $0x238] sm:$0xff]
    %v1977 = vld [vmem:[#allocation4 + $0x240] sm:$0xff]
    %v1978 = vld [vmem:[#allocation4 + $0x248] sm:$0xff]
    %v1979 = vld [vmem:[#allocation4 + $0x250] sm:$0xff]
    %v1980 = vld [vmem:[#allocation4 + $0x258] sm:$0xff]
    %v1981 = vld [vmem:[#allocation4 + $0x260] sm:$0xff]
    %v1982 = vld [vmem:[#allocation4 + $0x268] sm:$0xff]
    %v1983 = vld [vmem:[#allocation4 + $0x270] sm:$0xff]
    %v1984 = vld [vmem:[#allocation4 + $0x278] sm:$0xff]
    %v1985 = vld [vmem:[#allocation4 + $0x280] sm:$0xff]
    %v1986 = vld [vmem:[#allocation4 + $0x288] sm:$0xff]
    %v1987 = vld [vmem:[#allocation4 + $0x290] sm:$0xff]
    %v1988 = vld [vmem:[#allocation4 + $0x298] sm:$0xff]
    %v1989 = vld [vmem:[#allocation4 + $0x2a0] sm:$0xff]
    %v1990 = vld [vmem:[#allocation4 + $0x2a8] sm:$0xff]
    %v1991 = vld [vmem:[#allocation4 + $0x2b0] sm:$0xff]
    %v1992 = vld [vmem:[#allocation4 + $0x2b8] sm:$0xff]
    %v1993 = vld [vmem:[#allocation4 + $0x2c0] sm:$0xff]
    %v1994 = vld [vmem:[#allocation4 + $0x2c8] sm:$0xff]
    %v1995 = vld [vmem:[#allocation4 + $0x2d0] sm:$0xff]
    %v1996 = vld [vmem:[#allocation4 + $0x2d8] sm:$0xff]
    %v1997 = vld [vmem:[#allocation4 + $0x2e0] sm:$0xff]
    %v1998 = vld [vmem:[#allocation4 + $0x2e8] sm:$0xff]
    %v1999 = vld [vmem:[#allocation4 + $0x2f0] sm:$0xff]
    %v2000 = vld [vmem:[#allocation4 + $0x2f8] sm:$0xff]
    %v2001 = vld [vmem:[#allocation4 + $0x300] sm:$0xff]
    %v2002 = vld [vmem:[#allocation4 + $0x308] sm:$0xff]
    %v2003 = vld [vmem:[#allocation4 + $0x310] sm:$0xff]
    %v2004 = vld [vmem:[#allocation4 + $0x318] sm:$0xff]
    %v2005 = vld [vmem:[#allocation4 + $0x320] sm:$0xff]
    %v2006 = vld [vmem:[#allocation4 + $0x328] sm:$0xff]
    %v2007 = vld [vmem:[#allocation4 + $0x330] sm:$0xff]
    %v2008 = vld [vmem:[#allocation4 + $0x338] sm:$0xff]
    %v2009 = vld [vmem:[#allocation4 + $0x340] sm:$0xff]
    %v2010 = vld [vmem:[#allocation4 + $0x348] sm:$0xff]
    %v2011 = vld [vmem:[#allocation4 + $0x350] sm:$0xff]
    %v2012 = vld [vmem:[#allocation4 + $0x358] sm:$0xff]
    %v2013 = vld [vmem:[#allocation4 + $0x360] sm:$0xff]
    %v2014 = vld [vmem:[#allocation4 + $0x368] sm:$0xff]
    %v2015 = vld [vmem:[#allocation4 + $0x370] sm:$0xff]
    %v2016 = vld [vmem:[#allocation4 + $0x378] sm:$0xff]
    %v2017 = vld [vmem:[#allocation4 + $0x380] sm:$0xff]
    %v2018 = vld [vmem:[#allocation4 + $0x388] sm:$0xff]
    %v2019 = vld [vmem:[#allocation4 + $0x390] sm:$0xff]
    %v2020 = vld [vmem:[#allocation4 + $0x398] sm:$0xff]
    %v2021 = vld [vmem:[#allocation4 + $0x3a0] sm:$0xff]
    %v2022 = vld [vmem:[#allocation4 + $0x3a8] sm:$0xff]
    %v2023 = vld [vmem:[#allocation4 + $0x3b0] sm:$0xff]
    %v2024 = vld [vmem:[#allocation4 + $0x3b8] sm:$0xff]
    %v2025 = vld [vmem:[#allocation4 + $0x3c0] sm:$0xff]
    %v2026 = vld [vmem:[#allocation4 + $0x3c8] sm:$0xff]
    %v2027 = vld [vmem:[#allocation4 + $0x3d0] sm:$0xff]
    %v2028 = vld [vmem:[#allocation4 + $0x3d8] sm:$0xff]
    %v2029 = vld [vmem:[#allocation4 + $0x3e0] sm:$0xff]
    %v2030 = vld [vmem:[#allocation4 + $0x3e8] sm:$0xff]
    %v2031 = vld [vmem:[#allocation4 + $0x3f0] sm:$0xff]
    %v2032 = vld [vmem:[#allocation4 + $0x3f8] sm:$0xff]
    %2033 = vmatprep.subr.mxu0 %v1906
    %2034 = vmatpush1.msra.mxu0 %v1905
    %2035 = vmatprep.subr.mxu0 %v1908
    %2036 = vmatpush1.msra.mxu0 %v1907
    %2037 = vmatprep.subr.mxu0 %v1910
    %2038 = vmatpush1.msra.mxu0 %v1909
    %2039 = vmatprep.subr.mxu0 %v1912
    %2040 = vmatpush1.msra.mxu0 %v1911
    %2041 = vmatprep.subr.mxu0 %v1914
    %2042 = vmatpush1.msra.mxu0 %v1913
    %2043 = vmatprep.subr.mxu0 %v1916
    %2044 = vmatpush1.msra.mxu0 %v1915
    %2045 = vmatprep.subr.mxu0 %v1918
    %2046 = vmatpush1.msra.mxu0 %v1917
    %2047 = vmatprep.subr.mxu0 %v1920
    %2048 = vmatpush1.msra.mxu0 %v1919
    %2049 = vmatprep.subr.mxu0 %v1922
    %2050 = vmatpush1.msra.mxu0 %v1921
    %2051 = vmatprep.subr.mxu0 %v1924
    %2052 = vmatpush1.msra.mxu0 %v1923
    %2053 = vmatprep.subr.mxu0 %v1926
    %2054 = vmatpush1.msra.mxu0 %v1925
    %2055 = vmatprep.subr.mxu0 %v1928
    %2056 = vmatpush1.msra.mxu0 %v1927
    %2057 = vmatprep.subr.mxu0 %v1930
    %2058 = vmatpush1.msra.mxu0 %v1929
    %2059 = vmatprep.subr.mxu0 %v1932
    %2060 = vmatpush1.msra.mxu0 %v1931
    %2061 = vmatprep.subr.mxu0 %v1934
    %2062 = vmatpush1.msra.mxu0 %v1933
    %2063 = vmatprep.subr.mxu0 %v1936
    %2064 = vmatpush1.msra.mxu0 %v1935
    %2065 = vmatprep.subr.mxu0 %v1938
    %2066 = vmatpush1.msra.mxu0 %v1937
    %2067 = vmatprep.subr.mxu0 %v1940
    %2068 = vmatpush1.msra.mxu0 %v1939
    %2069 = vmatprep.subr.mxu0 %v1942
    %2070 = vmatpush1.msra.mxu0 %v1941
    %2071 = vmatprep.subr.mxu0 %v1944
    %2072 = vmatpush1.msra.mxu0 %v1943
    %2073 = vmatprep.subr.mxu0 %v1946
    %2074 = vmatpush1.msra.mxu0 %v1945
    %2075 = vmatprep.subr.mxu0 %v1948
    %2076 = vmatpush1.msra.mxu0 %v1947
    %2077 = vmatprep.subr.mxu0 %v1950
    %2078 = vmatpush1.msra.mxu0 %v1949
    %2079 = vmatprep.subr.mxu0 %v1952
    %2080 = vmatpush1.msra.mxu0 %v1951
    %2081 = vmatprep.subr.mxu0 %v1954
    %2082 = vmatpush1.msra.mxu0 %v1953
    %2083 = vmatprep.subr.mxu0 %v1956
    %2084 = vmatpush1.msra.mxu0 %v1955
    %2085 = vmatprep.subr.mxu0 %v1958
    %2086 = vmatpush1.msra.mxu0 %v1957
    %2087 = vmatprep.subr.mxu0 %v1960
    %2088 = vmatpush1.msra.mxu0 %v1959
    %2089 = vmatprep.subr.mxu0 %v1962
    %2090 = vmatpush1.msra.mxu0 %v1961
    %2091 = vmatprep.subr.mxu0 %v1964
    %2092 = vmatpush1.msra.mxu0 %v1963
    %2093 = vmatprep.subr.mxu0 %v1966
    %2094 = vmatpush1.msra.mxu0 %v1965
    %2095 = vmatprep.subr.mxu0 %v1968
    %2096 = vmatpush1.msra.mxu0 %v1967
    %2097 = vmatprep.mubr.f32.mxu0 %v1692
    %2098 = vmatmul.mubr.f32.gmra.mrb[0].mxu0 %v1690
    %v2099 = vpop.f32.mrb[0].mxu0
    %v2100 = vadd.f32 0.0, %v2099
    %v2101 = vpop.f32.mrb[0].mxu0
    %v2102 = vadd.f32 0.0, %v2101
    %2103 = vmatprep.mubr.f32.mxu0 %v1698
    %2104 = vmatmul.mubr.f32.gmra.mrb[0].mxu0 %v1696
    %v2105 = vpop.f32.mrb[0].mxu0
    %v2106 = vadd.f32 0.0, %v2105
    %v2107 = vpop.f32.mrb[0].mxu0
    %v2108 = vadd.f32 0.0, %v2107
    %2109 = vdwg.mxu0
    %2110 = vmatprep.subr.mxu0 %v1970
    %2111 = vmatpush1.msra.mxu0 %v1969
    %2112 = vmatprep.subr.mxu0 %v1972
    %2113 = vmatpush1.msra.mxu0 %v1971
    %2114 = vmatprep.subr.mxu0 %v1974
    %2115 = vmatpush1.msra.mxu0 %v1973
    %2116 = vmatprep.subr.mxu0 %v1976
    %2117 = vmatpush1.msra.mxu0 %v1975
    %2118 = vmatprep.subr.mxu0 %v1978
    %2119 = vmatpush1.msra.mxu0 %v1977
    %2120 = vmatprep.subr.mxu0 %v1980
    %2121 = vmatpush1.msra.mxu0 %v1979
    %2122 = vmatprep.subr.mxu0 %v1982
    %2123 = vmatpush1.msra.mxu0 %v1981
    %2124 = vmatprep.subr.mxu0 %v1984
    %2125 = vmatpush1.msra.mxu0 %v1983
    %2126 = vmatprep.subr.mxu0 %v1986
    %2127 = vmatpush1.msra.mxu0 %v1985
    %2128 = vmatprep.subr.mxu0 %v1988
    %2129 = vmatpush1.msra.mxu0 %v1987
    %2130 = vmatprep.subr.mxu0 %v1990
    %2131 = vmatpush1.msra.mxu0 %v1989
    %2132 = vmatprep.subr.mxu0 %v1992
    %2133 = vmatpush1.msra.mxu0 %v1991
    %2134 = vmatprep.subr.mxu0 %v1994
    %2135 = vmatpush1.msra.mxu0 %v1993
    %2136 = vmatprep.subr.mxu0 %v1996
    %2137 = vmatpush1.msra.mxu0 %v1995
    %2138 = vmatprep.subr.mxu0 %v1998
    %2139 = vmatpush1.msra.mxu0 %v1997
    %2140 = vmatprep.subr.mxu0 %v2000
    %2141 = vmatpush1.msra.mxu0 %v1999
    %2142 = vmatprep.subr.mxu0 %v2002
    %2143 = vmatpush1.msra.mxu0 %v2001
    %2144 = vmatprep.subr.mxu0 %v2004
    %2145 = vmatpush1.msra.mxu0 %v2003
    %2146 = vmatprep.subr.mxu0 %v2006
    %2147 = vmatpush1.msra.mxu0 %v2005
    %2148 = vmatprep.subr.mxu0 %v2008
    %2149 = vmatpush1.msra.mxu0 %v2007
    %2150 = vmatprep.subr.mxu0 %v2010
    %2151 = vmatpush1.msra.mxu0 %v2009
    %2152 = vmatprep.subr.mxu0 %v2012
    %2153 = vmatpush1.msra.mxu0 %v2011
    %2154 = vmatprep.subr.mxu0 %v2014
    %2155 = vmatpush1.msra.mxu0 %v2013
    %2156 = vmatprep.subr.mxu0 %v2016
    %2157 = vmatpush1.msra.mxu0 %v2015
    %2158 = vmatprep.subr.mxu0 %v2018
    %2159 = vmatpush1.msra.mxu0 %v2017
    %2160 = vmatprep.subr.mxu0 %v2020
    %2161 = vmatpush1.msra.mxu0 %v2019
    %2162 = vmatprep.subr.mxu0 %v2022
    %2163 = vmatpush1.msra.mxu0 %v2021
    %2164 = vmatprep.subr.mxu0 %v2024
    %2165 = vmatpush1.msra.mxu0 %v2023
    %2166 = vmatprep.subr.mxu0 %v2026
    %2167 = vmatpush1.msra.mxu0 %v2025
    %2168 = vmatprep.subr.mxu0 %v2028
    %2169 = vmatpush1.msra.mxu0 %v2027
    %2170 = vmatprep.subr.mxu0 %v2030
    %2171 = vmatpush1.msra.mxu0 %v2029
    %2172 = vmatprep.subr.mxu0 %v2032
    %2173 = vmatpush1.msra.mxu0 %v2031
    %2174 = vmatprep.mubr.f32.mxu0 %v1769
    %2175 = vmatmul.mubr.f32.gmra.mrb[0].mxu0 %v1767
    %v2176 = vpop.f32.mrb[0].mxu0
    %v2177 = vadd.f32 %v2100, %v2176
    %v2178 = vpop.f32.mrb[0].mxu0
    %v2179 = vadd.f32 %v2102, %v2178
    %2180 = vmatprep.mubr.f32.mxu0 %v1775
    %2181 = vmatmul.mubr.f32.gmra.mrb[0].mxu0 %v1773
    %v2182 = vpop.f32.mrb[0].mxu0
    %v2183 = vadd.f32 %v2106, %v2182
    %v2184 = vpop.f32.mrb[0].mxu0
    %v2185 = vadd.f32 %v2108, %v2184
    %2186 = vdwg.mxu0
    %v2187 = vld [vmem:[#allocation7] sm:$0xff]
    %v2188 = vld [vmem:[#allocation7 + $0x8] sm:$0xff]
    %v2189 = vld [vmem:[#allocation7 + $0x10] sm:$0xff]
    %v2190 = vld [vmem:[#allocation7 + $0x18] sm:$0xff]
    %v2191 = vld [vmem:[#allocation7 + $0x20] sm:$0xff]
    %v2192 = vld [vmem:[#allocation7 + $0x28] sm:$0xff]
    %v2193 = vld [vmem:[#allocation7 + $0x30] sm:$0xff]
    %v2194 = vld [vmem:[#allocation7 + $0x38] sm:$0xff]
    %v2195 = vld [vmem:[#allocation7 + $0x40] sm:$0xff]
    %v2196 = vld [vmem:[#allocation7 + $0x48] sm:$0xff]
    %v2197 = vld [vmem:[#allocation7 + $0x50] sm:$0xff]
    %v2198 = vld [vmem:[#allocation7 + $0x58] sm:$0xff]
    %v2199 = vld [vmem:[#allocation7 + $0x60] sm:$0xff]
    %v2200 = vld [vmem:[#allocation7 + $0x68] sm:$0xff]
    %v2201 = vld [vmem:[#allocation7 + $0x70] sm:$0xff]
    %v2202 = vld [vmem:[#allocation7 + $0x78] sm:$0xff]
    %v2203 = vld [vmem:[#allocation7 + $0x80] sm:$0xff]
    %v2204 = vld [vmem:[#allocation7 + $0x88] sm:$0xff]
    %v2205 = vld [vmem:[#allocation7 + $0x90] sm:$0xff]
    %v2206 = vld [vmem:[#allocation7 + $0x98] sm:$0xff]
    %v2207 = vld [vmem:[#allocation7 + $0xa0] sm:$0xff]
    %v2208 = vld [vmem:[#allocation7 + $0xa8] sm:$0xff]
    %v2209 = vld [vmem:[#allocation7 + $0xb0] sm:$0xff]
    %v2210 = vld [vmem:[#allocation7 + $0xb8] sm:$0xff]
    %v2211 = vld [vmem:[#allocation7 + $0xc0] sm:$0xff]
    %v2212 = vld [vmem:[#allocation7 + $0xc8] sm:$0xff]
    %v2213 = vld [vmem:[#allocation7 + $0xd0] sm:$0xff]
    %v2214 = vld [vmem:[#allocation7 + $0xd8] sm:$0xff]
    %v2215 = vld [vmem:[#allocation7 + $0xe0] sm:$0xff]
    %v2216 = vld [vmem:[#allocation7 + $0xe8] sm:$0xff]
    %v2217 = vld [vmem:[#allocation7 + $0xf0] sm:$0xff]
    %v2218 = vld [vmem:[#allocation7 + $0xf8] sm:$0xff]
    %v2219 = vld [vmem:[#allocation7 + $0x100] sm:$0xff]
    %v2220 = vld [vmem:[#allocation7 + $0x108] sm:$0xff]
    %v2221 = vld [vmem:[#allocation7 + $0x110] sm:$0xff]
    %v2222 = vld [vmem:[#allocation7 + $0x118] sm:$0xff]
    %v2223 = vld [vmem:[#allocation7 + $0x120] sm:$0xff]
    %v2224 = vld [vmem:[#allocation7 + $0x128] sm:$0xff]
    %v2225 = vld [vmem:[#allocation7 + $0x130] sm:$0xff]
    %v2226 = vld [vmem:[#allocation7 + $0x138] sm:$0xff]
    %v2227 = vld [vmem:[#allocation7 + $0x140] sm:$0xff]
    %v2228 = vld [vmem:[#allocation7 + $0x148] sm:$0xff]
    %v2229 = vld [vmem:[#allocation7 + $0x150] sm:$0xff]
    %v2230 = vld [vmem:[#allocation7 + $0x158] sm:$0xff]
    %v2231 = vld [vmem:[#allocation7 + $0x160] sm:$0xff]
    %v2232 = vld [vmem:[#allocation7 + $0x168] sm:$0xff]
    %v2233 = vld [vmem:[#allocation7 + $0x170] sm:$0xff]
    %v2234 = vld [vmem:[#allocation7 + $0x178] sm:$0xff]
    %v2235 = vld [vmem:[#allocation7 + $0x180] sm:$0xff]
    %v2236 = vld [vmem:[#allocation7 + $0x188] sm:$0xff]
    %v2237 = vld [vmem:[#allocation7 + $0x190] sm:$0xff]
    %v2238 = vld [vmem:[#allocation7 + $0x198] sm:$0xff]
    %v2239 = vld [vmem:[#allocation7 + $0x1a0] sm:$0xff]
    %v2240 = vld [vmem:[#allocation7 + $0x1a8] sm:$0xff]
    %v2241 = vld [vmem:[#allocation7 + $0x1b0] sm:$0xff]
    %v2242 = vld [vmem:[#allocation7 + $0x1b8] sm:$0xff]
    %v2243 = vld [vmem:[#allocation7 + $0x1c0] sm:$0xff]
    %v2244 = vld [vmem:[#allocation7 + $0x1c8] sm:$0xff]
    %v2245 = vld [vmem:[#allocation7 + $0x1d0] sm:$0xff]
    %v2246 = vld [vmem:[#allocation7 + $0x1d8] sm:$0xff]
    %v2247 = vld [vmem:[#allocation7 + $0x1e0] sm:$0xff]
    %v2248 = vld [vmem:[#allocation7 + $0x1e8] sm:$0xff]
    %v2249 = vld [vmem:[#allocation7 + $0x1f0] sm:$0xff]
    %v2250 = vld [vmem:[#allocation7 + $0x1f8] sm:$0xff]
    %v2251 = vld [vmem:[#allocation7 + $0x200] sm:$0xff]
    %v2252 = vld [vmem:[#allocation7 + $0x208] sm:$0xff]
    %v2253 = vld [vmem:[#allocation7 + $0x210] sm:$0xff]
    %v2254 = vld [vmem:[#allocation7 + $0x218] sm:$0xff]
    %v2255 = vld [vmem:[#allocation7 + $0x220] sm:$0xff]
    %v2256 = vld [vmem:[#allocation7 + $0x228] sm:$0xff]
    %v2257 = vld [vmem:[#allocation7 + $0x230] sm:$0xff]
    %v2258 = vld [vmem:[#allocation7 + $0x238] sm:$0xff]
    %v2259 = vld [vmem:[#allocation7 + $0x240] sm:$0xff]
    %v2260 = vld [vmem:[#allocation7 + $0x248] sm:$0xff]
    %v2261 = vld [vmem:[#allocation7 + $0x250] sm:$0xff]
    %v2262 = vld [vmem:[#allocation7 + $0x258] sm:$0xff]
    %v2263 = vld [vmem:[#allocation7 + $0x260] sm:$0xff]
    %v2264 = vld [vmem:[#allocation7 + $0x268] sm:$0xff]
    %v2265 = vld [vmem:[#allocation7 + $0x270] sm:$0xff]
    %v2266 = vld [vmem:[#allocation7 + $0x278] sm:$0xff]
    %v2267 = vld [vmem:[#allocation7 + $0x280] sm:$0xff]
    %v2268 = vld [vmem:[#allocation7 + $0x288] sm:$0xff]
    %v2269 = vld [vmem:[#allocation7 + $0x290] sm:$0xff]
    %v2270 = vld [vmem:[#allocation7 + $0x298] sm:$0xff]
    %v2271 = vld [vmem:[#allocation7 + $0x2a0] sm:$0xff]
    %v2272 = vld [vmem:[#allocation7 + $0x2a8] sm:$0xff]
    %v2273 = vld [vmem:[#allocation7 + $0x2b0] sm:$0xff]
    %v2274 = vld [vmem:[#allocation7 + $0x2b8] sm:$0xff]
    %v2275 = vld [vmem:[#allocation7 + $0x2c0] sm:$0xff]
    %v2276 = vld [vmem:[#allocation7 + $0x2c8] sm:$0xff]
    %v2277 = vld [vmem:[#allocation7 + $0x2d0] sm:$0xff]
    %v2278 = vld [vmem:[#allocation7 + $0x2d8] sm:$0xff]
    %v2279 = vld [vmem:[#allocation7 + $0x2e0] sm:$0xff]
    %v2280 = vld [vmem:[#allocation7 + $0x2e8] sm:$0xff]
    %v2281 = vld [vmem:[#allocation7 + $0x2f0] sm:$0xff]
    %v2282 = vld [vmem:[#allocation7 + $0x2f8] sm:$0xff]
    %v2283 = vld [vmem:[#allocation7 + $0x300] sm:$0xff]
    %v2284 = vld [vmem:[#allocation7 + $0x308] sm:$0xff]
    %v2285 = vld [vmem:[#allocation7 + $0x310] sm:$0xff]
    %v2286 = vld [vmem:[#allocation7 + $0x318] sm:$0xff]
    %v2287 = vld [vmem:[#allocation7 + $0x320] sm:$0xff]
    %v2288 = vld [vmem:[#allocation7 + $0x328] sm:$0xff]
    %v2289 = vld [vmem:[#allocation7 + $0x330] sm:$0xff]
    %v2290 = vld [vmem:[#allocation7 + $0x338] sm:$0xff]
    %v2291 = vld [vmem:[#allocation7 + $0x340] sm:$0xff]
    %v2292 = vld [vmem:[#allocation7 + $0x348] sm:$0xff]
    %v2293 = vld [vmem:[#allocation7 + $0x350] sm:$0xff]
    %v2294 = vld [vmem:[#allocation7 + $0x358] sm:$0xff]
    %v2295 = vld [vmem:[#allocation7 + $0x360] sm:$0xff]
    %v2296 = vld [vmem:[#allocation7 + $0x368] sm:$0xff]
    %v2297 = vld [vmem:[#allocation7 + $0x370] sm:$0xff]
    %v2298 = vld [vmem:[#allocation7 + $0x378] sm:$0xff]
    %v2299 = vld [vmem:[#allocation7 + $0x380] sm:$0xff]
    %v2300 = vld [vmem:[#allocation7 + $0x388] sm:$0xff]
    %v2301 = vld [vmem:[#allocation7 + $0x390] sm:$0xff]
    %v2302 = vld [vmem:[#allocation7 + $0x398] sm:$0xff]
    %v2303 = vld [vmem:[#allocation7 + $0x3a0] sm:$0xff]
    %v2304 = vld [vmem:[#allocation7 + $0x3a8] sm:$0xff]
    %v2305 = vld [vmem:[#allocation7 + $0x3b0] sm:$0xff]
    %v2306 = vld [vmem:[#allocation7 + $0x3b8] sm:$0xff]
    %v2307 = vld [vmem:[#allocation7 + $0x3c0] sm:$0xff]
    %v2308 = vld [vmem:[#allocation7 + $0x3c8] sm:$0xff]
    %v2309 = vld [vmem:[#allocation7 + $0x3d0] sm:$0xff]
    %v2310 = vld [vmem:[#allocation7 + $0x3d8] sm:$0xff]
    %v2311 = vld [vmem:[#allocation7 + $0x3e0] sm:$0xff]
    %v2312 = vld [vmem:[#allocation7 + $0x3e8] sm:$0xff]
    %v2313 = vld [vmem:[#allocation7 + $0x3f0] sm:$0xff]
    %v2314 = vld [vmem:[#allocation7 + $0x3f8] sm:$0xff]
    %2315 = vmatprep.subr.mxu0 %v2188
    %2316 = vmatpush1.msra.mxu0 %v2187
    %2317 = vmatprep.subr.mxu0 %v2190
    %2318 = vmatpush1.msra.mxu0 %v2189
    %2319 = vmatprep.subr.mxu0 %v2192
    %2320 = vmatpush1.msra.mxu0 %v2191
    %2321 = vmatprep.subr.mxu0 %v2194
    %2322 = vmatpush1.msra.mxu0 %v2193
    %2323 = vmatprep.subr.mxu0 %v2196
    %2324 = vmatpush1.msra.mxu0 %v2195
    %2325 = vmatprep.subr.mxu0 %v2198
    %2326 = vmatpush1.msra.mxu0 %v2197
    %2327 = vmatprep.subr.mxu0 %v2200
    %2328 = vmatpush1.msra.mxu0 %v2199
    %2329 = vmatprep.subr.mxu0 %v2202
    %2330 = vmatpush1.msra.mxu0 %v2201
    %2331 = vmatprep.subr.mxu0 %v2204
    %2332 = vmatpush1.msra.mxu0 %v2203
    %2333 = vmatprep.subr.mxu0 %v2206
    %2334 = vmatpush1.msra.mxu0 %v2205
    %2335 = vmatprep.subr.mxu0 %v2208
    %2336 = vmatpush1.msra.mxu0 %v2207
    %2337 = vmatprep.subr.mxu0 %v2210
    %2338 = vmatpush1.msra.mxu0 %v2209
    %2339 = vmatprep.subr.mxu0 %v2212
    %2340 = vmatpush1.msra.mxu0 %v2211
    %2341 = vmatprep.subr.mxu0 %v2214
    %2342 = vmatpush1.msra.mxu0 %v2213
    %2343 = vmatprep.subr.mxu0 %v2216
    %2344 = vmatpush1.msra.mxu0 %v2215
    %2345 = vmatprep.subr.mxu0 %v2218
    %2346 = vmatpush1.msra.mxu0 %v2217
    %2347 = vmatprep.subr.mxu0 %v2220
    %2348 = vmatpush1.msra.mxu0 %v2219
    %2349 = vmatprep.subr.mxu0 %v2222
    %2350 = vmatpush1.msra.mxu0 %v2221
    %2351 = vmatprep.subr.mxu0 %v2224
    %2352 = vmatpush1.msra.mxu0 %v2223
    %2353 = vmatprep.subr.mxu0 %v2226
    %2354 = vmatpush1.msra.mxu0 %v2225
    %2355 = vmatprep.subr.mxu0 %v2228
    %2356 = vmatpush1.msra.mxu0 %v2227
    %2357 = vmatprep.subr.mxu0 %v2230
    %2358 = vmatpush1.msra.mxu0 %v2229
    %2359 = vmatprep.subr.mxu0 %v2232
    %2360 = vmatpush1.msra.mxu0 %v2231
    %2361 = vmatprep.subr.mxu0 %v2234
    %2362 = vmatpush1.msra.mxu0 %v2233
    %2363 = vmatprep.subr.mxu0 %v2236
    %2364 = vmatpush1.msra.mxu0 %v2235
    %2365 = vmatprep.subr.mxu0 %v2238
    %2366 = vmatpush1.msra.mxu0 %v2237
    %2367 = vmatprep.subr.mxu0 %v2240
    %2368 = vmatpush1.msra.mxu0 %v2239
    %2369 = vmatprep.subr.mxu0 %v2242
    %2370 = vmatpush1.msra.mxu0 %v2241
    %2371 = vmatprep.subr.mxu0 %v2244
    %2372 = vmatpush1.msra.mxu0 %v2243
    %2373 = vmatprep.subr.mxu0 %v2246
    %2374 = vmatpush1.msra.mxu0 %v2245
    %2375 = vmatprep.subr.mxu0 %v2248
    %2376 = vmatpush1.msra.mxu0 %v2247
    %2377 = vmatprep.subr.mxu0 %v2250
    %2378 = vmatpush1.msra.mxu0 %v2249
    %2379 = vmatprep.mubr.f32.mxu0 %v1692
    %2380 = vmatmul.mubr.f32.gmra.mrb[0].mxu0 %v1690
    %v2381 = vpop.f32.mrb[0].mxu0
    %v2382 = vadd.f32 0.0, %v2381
    %v2383 = vpop.f32.mrb[0].mxu0
    %v2384 = vadd.f32 0.0, %v2383
    %2385 = vmatprep.mubr.f32.mxu0 %v1698
    %2386 = vmatmul.mubr.f32.gmra.mrb[0].mxu0 %v1696
    %v2387 = vpop.f32.mrb[0].mxu0
    %v2388 = vadd.f32 0.0, %v2387
    %v2389 = vpop.f32.mrb[0].mxu0
    %v2390 = vadd.f32 0.0, %v2389
    %2391 = vdwg.mxu0
    %2392 = vmatprep.subr.mxu0 %v2252
    %2393 = vmatpush1.msra.mxu0 %v2251
    %2394 = vmatprep.subr.mxu0 %v2254
    %2395 = vmatpush1.msra.mxu0 %v2253
    %2396 = vmatprep.subr.mxu0 %v2256
    %2397 = vmatpush1.msra.mxu0 %v2255
    %2398 = vmatprep.subr.mxu0 %v2258
    %2399 = vmatpush1.msra.mxu0 %v2257
    %2400 = vmatprep.subr.mxu0 %v2260
    %2401 = vmatpush1.msra.mxu0 %v2259
    %2402 = vmatprep.subr.mxu0 %v2262
    %2403 = vmatpush1.msra.mxu0 %v2261
    %2404 = vmatprep.subr.mxu0 %v2264
    %2405 = vmatpush1.msra.mxu0 %v2263
    %2406 = vmatprep.subr.mxu0 %v2266
    %2407 = vmatpush1.msra.mxu0 %v2265
    %2408 = vmatprep.subr.mxu0 %v2268
    %2409 = vmatpush1.msra.mxu0 %v2267
    %2410 = vmatprep.subr.mxu0 %v2270
    %2411 = vmatpush1.msra.mxu0 %v2269
    %2412 = vmatprep.subr.mxu0 %v2272
    %2413 = vmatpush1.msra.mxu0 %v2271
    %2414 = vmatprep.subr.mxu0 %v2274
    %2415 = vmatpush1.msra.mxu0 %v2273
    %2416 = vmatprep.subr.mxu0 %v2276
    %2417 = vmatpush1.msra.mxu0 %v2275
    %2418 = vmatprep.subr.mxu0 %v2278
    %2419 = vmatpush1.msra.mxu0 %v2277
    %2420 = vmatprep.subr.mxu0 %v2280
    %2421 = vmatpush1.msra.mxu0 %v2279
    %2422 = vmatprep.subr.mxu0 %v2282
    %2423 = vmatpush1.msra.mxu0 %v2281
    %2424 = vmatprep.subr.mxu0 %v2284
    %2425 = vmatpush1.msra.mxu0 %v2283
    %2426 = vmatprep.subr.mxu0 %v2286
    %2427 = vmatpush1.msra.mxu0 %v2285
    %2428 = vmatprep.subr.mxu0 %v2288
    %2429 = vmatpush1.msra.mxu0 %v2287
    %2430 = vmatprep.subr.mxu0 %v2290
    %2431 = vmatpush1.msra.mxu0 %v2289
    %2432 = vmatprep.subr.mxu0 %v2292
    %2433 = vmatpush1.msra.mxu0 %v2291
    %2434 = vmatprep.subr.mxu0 %v2294
    %2435 = vmatpush1.msra.mxu0 %v2293
    %2436 = vmatprep.subr.mxu0 %v2296
    %2437 = vmatpush1.msra.mxu0 %v2295
    %2438 = vmatprep.subr.mxu0 %v2298
    %2439 = vmatpush1.msra.mxu0 %v2297
    %2440 = vmatprep.subr.mxu0 %v2300
    %2441 = vmatpush1.msra.mxu0 %v2299
    %2442 = vmatprep.subr.mxu0 %v2302
    %2443 = vmatpush1.msra.mxu0 %v2301
    %2444 = vmatprep.subr.mxu0 %v2304
    %2445 = vmatpush1.msra.mxu0 %v2303
    %2446 = vmatprep.subr.mxu0 %v2306
    %2447 = vmatpush1.msra.mxu0 %v2305
    %2448 = vmatprep.subr.mxu0 %v2308
    %2449 = vmatpush1.msra.mxu0 %v2307
    %2450 = vmatprep.subr.mxu0 %v2310
    %2451 = vmatpush1.msra.mxu0 %v2309
    %2452 = vmatprep.subr.mxu0 %v2312
    %2453 = vmatpush1.msra.mxu0 %v2311
    %2454 = vmatprep.subr.mxu0 %v2314
    %2455 = vmatpush1.msra.mxu0 %v2313
    %2456 = vmatprep.mubr.f32.mxu0 %v1769
    %2457 = vmatmul.mubr.f32.gmra.mrb[0].mxu0 %v1767
    %v2458 = vpop.f32.mrb[0].mxu0
    %v2459 = vadd.f32 %v2382, %v2458
    %v2460 = vpop.f32.mrb[0].mxu0
    %v2461 = vadd.f32 %v2384, %v2460
    %2462 = vmatprep.mubr.f32.mxu0 %v1775
    %2463 = vmatmul.mubr.f32.gmra.mrb[0].mxu0 %v1773
    %v2464 = vpop.f32.mrb[0].mxu0
    %v2465 = vadd.f32 %v2388, %v2464
    %v2466 = vpop.f32.mrb[0].mxu0
    %v2467 = vadd.f32 %v2390, %v2466
    %2468 = vdwg.mxu0
    %v2469 = vrot.slane %v2177, 7
    %v2470 = vrot.slane %v2179, 7
    %v2471 = vrot.slane %v2183, 7
    %v2472 = vrot.slane %v2185, 7
    %v2473 = vsel %vm1142, %v2469, %v2471
    %v2474 = vsel %vm1142, %v2470, %v2472
    %v2475 = vsel %vm1142, %v2471, %v2469
    %v2476 = vsel %vm1142, %v2472, %v2470
    %v2477 = vmul.f32 %v2475, %v156
    %v2478 = vmul.f32 %v2476, %v156
    %v2479 = vmul.f32 %v2473, %v157
    %v2480 = vmul.f32 %v2474, %v157
    %v2481 = vrot.slane %v2459, 1
    %v2482 = vrot.slane %v2461, 1
    %v2483 = vrot.slane %v2465, 1
    %v2484 = vrot.slane %v2467, 1
    %v2485 = vsel %vm1155, %v2481, %v2483
    %v2486 = vsel %vm1155, %v2482, %v2484
    %v2487 = vsel %vm1155, %v2483, %v2481
    %v2488 = vsel %vm1155, %v2484, %v2482
    %v2489 = vmul.f32 %v2485, %v162
    %v2490 = vmul.f32 %v2486, %v162
    %v2491 = vmul.f32 %v2487, %v163
    %v2492 = vmul.f32 %v2488, %v163
    %2493 = vmatprep.subr.mxu0 %v1778
    %2494 = vmatpush1.msra.mxu0 %v1777
    %2495 = vmatprep.subr.mxu0 %v1780
    %2496 = vmatpush1.msra.mxu0 %v1779
    %2497 = vmatprep.subr.mxu0 %v1782
    %2498 = vmatpush1.msra.mxu0 %v1781
    %2499 = vmatprep.subr.mxu0 %v1784
    %2500 = vmatpush1.msra.mxu0 %v1783
    %2501 = vmatprep.subr.mxu0 %v1786
    %2502 = vmatpush1.msra.mxu0 %v1785
    %2503 = vmatprep.subr.mxu0 %v1788
    %2504 = vmatpush1.msra.mxu0 %v1787
    %2505 = vmatprep.subr.mxu0 %v1790
    %2506 = vmatpush1.msra.mxu0 %v1789
    %2507 = vmatprep.subr.mxu0 %v1792
    %2508 = vmatpush1.msra.mxu0 %v1791
    %2509 = vmatprep.subr.mxu0 %v1794
    %2510 = vmatpush1.msra.mxu0 %v1793
    %2511 = vmatprep.subr.mxu0 %v1796
    %2512 = vmatpush1.msra.mxu0 %v1795
    %2513 = vmatprep.subr.mxu0 %v1798
    %2514 = vmatpush1.msra.mxu0 %v1797
    %2515 = vmatprep.subr.mxu0 %v1800
    %2516 = vmatpush1.msra.mxu0 %v1799
    %2517 = vmatprep.subr.mxu0 %v1802
    %2518 = vmatpush1.msra.mxu0 %v1801
    %2519 = vmatprep.subr.mxu0 %v1804
    %2520 = vmatpush1.msra.mxu0 %v1803
    %2521 = vmatprep.subr.mxu0 %v1806
    %2522 = vmatpush1.msra.mxu0 %v1805
    %2523 = vmatprep.subr.mxu0 %v1808
    %2524 = vmatpush1.msra.mxu0 %v1807
    %2525 = vmatprep.subr.mxu0 %v1810
    %2526 = vmatpush1.msra.mxu0 %v1809
    %2527 = vmatprep.subr.mxu0 %v1812
    %2528 = vmatpush1.msra.mxu0 %v1811
    %2529 = vmatprep.subr.mxu0 %v1814
    %2530 = vmatpush1.msra.mxu0 %v1813
    %2531 = vmatprep.subr.mxu0 %v1816
    %2532 = vmatpush1.msra.mxu0 %v1815
    %2533 = vmatprep.subr.mxu0 %v1818
    %2534 = vmatpush1.msra.mxu0 %v1817
    %2535 = vmatprep.subr.mxu0 %v1820
    %2536 = vmatpush1.msra.mxu0 %v1819
    %2537 = vmatprep.subr.mxu0 %v1822
    %2538 = vmatpush1.msra.mxu0 %v1821
    %2539 = vmatprep.subr.mxu0 %v1824
    %2540 = vmatpush1.msra.mxu0 %v1823
    %2541 = vmatprep.subr.mxu0 %v1826
    %2542 = vmatpush1.msra.mxu0 %v1825
    %2543 = vmatprep.subr.mxu0 %v1828
    %2544 = vmatpush1.msra.mxu0 %v1827
    %2545 = vmatprep.subr.mxu0 %v1830
    %2546 = vmatpush1.msra.mxu0 %v1829
    %2547 = vmatprep.subr.mxu0 %v1832
    %2548 = vmatpush1.msra.mxu0 %v1831
    %2549 = vmatprep.subr.mxu0 %v1834
    %2550 = vmatpush1.msra.mxu0 %v1833
    %2551 = vmatprep.subr.mxu0 %v1836
    %2552 = vmatpush1.msra.mxu0 %v1835
    %2553 = vmatprep.subr.mxu0 %v1838
    %2554 = vmatpush1.msra.mxu0 %v1837
    %2555 = vmatprep.subr.mxu0 %v1840
    %2556 = vmatpush1.msra.mxu0 %v1839
    %2557 = vmatprep.mubr.f32.mxu0 %v1692
    %2558 = vmatmul.mubr.f32.gmra.mrb[0].mxu0 %v1690
    %v2559 = vpop.f32.mrb[0].mxu0
    %v2560 = vadd.f32 %v2477, %v2559
    %v2561 = vpop.f32.mrb[0].mxu0
    %v2562 = vadd.f32 %v2478, %v2561
    %2563 = vmatprep.mubr.f32.mxu0 %v1698
    %2564 = vmatmul.mubr.f32.gmra.mrb[0].mxu0 %v1696
    %v2565 = vpop.f32.mrb[0].mxu0
    %v2566 = vadd.f32 %v2479, %v2565
    %v2567 = vpop.f32.mrb[0].mxu0
    %v2568 = vadd.f32 %v2480, %v2567
    %2569 = vdwg.mxu0
    %2570 = vmatprep.subr.mxu0 %v1842
    %2571 = vmatpush1.msra.mxu0 %v1841
    %2572 = vmatprep.subr.mxu0 %v1844
    %2573 = vmatpush1.msra.mxu0 %v1843
    %2574 = vmatprep.subr.mxu0 %v1846
    %2575 = vmatpush1.msra.mxu0 %v1845
    %2576 = vmatprep.subr.mxu0 %v1848
    %2577 = vmatpush1.msra.mxu0 %v1847
    %2578 = vmatprep.subr.mxu0 %v1850
    %2579 = vmatpush1.msra.mxu0 %v1849
    %2580 = vmatprep.subr.mxu0 %v1852
    %2581 = vmatpush1.msra.mxu0 %v1851
    %2582 = vmatprep.subr.mxu0 %v1854
    %2583 = vmatpush1.msra.mxu0 %v1853
    %2584 = vmatprep.subr.mxu0 %v1856
    %2585 = vmatpush1.msra.mxu0 %v1855
    %2586 = vmatprep.subr.mxu0 %v1858
    %2587 = vmatpush1.msra.mxu0 %v1857
    %2588 = vmatprep.subr.mxu0 %v1860
    %2589 = vmatpush1.msra.mxu0 %v1859
    %2590 = vmatprep.subr.mxu0 %v1862
    %2591 = vmatpush1.msra.mxu0 %v1861
    %2592 = vmatprep.subr.mxu0 %v1864
    %2593 = vmatpush1.msra.mxu0 %v1863
    %2594 = vmatprep.subr.mxu0 %v1866
    %2595 = vmatpush1.msra.mxu0 %v1865
    %2596 = vmatprep.subr.mxu0 %v1868
    %2597 = vmatpush1.msra.mxu0 %v1867
    %2598 = vmatprep.subr.mxu0 %v1870
    %2599 = vmatpush1.msra.mxu0 %v1869
    %2600 = vmatprep.subr.mxu0 %v1872
    %2601 = vmatpush1.msra.mxu0 %v1871
    %2602 = vmatprep.subr.mxu0 %v1874
    %2603 = vmatpush1.msra.mxu0 %v1873
    %2604 = vmatprep.subr.mxu0 %v1876
    %2605 = vmatpush1.msra.mxu0 %v1875
    %2606 = vmatprep.subr.mxu0 %v1878
    %2607 = vmatpush1.msra.mxu0 %v1877
    %2608 = vmatprep.subr.mxu0 %v1880
    %2609 = vmatpush1.msra.mxu0 %v1879
    %2610 = vmatprep.subr.mxu0 %v1882
    %2611 = vmatpush1.msra.mxu0 %v1881
    %2612 = vmatprep.subr.mxu0 %v1884
    %2613 = vmatpush1.msra.mxu0 %v1883
    %2614 = vmatprep.subr.mxu0 %v1886
    %2615 = vmatpush1.msra.mxu0 %v1885
    %2616 = vmatprep.subr.mxu0 %v1888
    %2617 = vmatpush1.msra.mxu0 %v1887
    %2618 = vmatprep.subr.mxu0 %v1890
    %2619 = vmatpush1.msra.mxu0 %v1889
    %2620 = vmatprep.subr.mxu0 %v1892
    %2621 = vmatpush1.msra.mxu0 %v1891
    %2622 = vmatprep.subr.mxu0 %v1894
    %2623 = vmatpush1.msra.mxu0 %v1893
    %2624 = vmatprep.subr.mxu0 %v1896
    %2625 = vmatpush1.msra.mxu0 %v1895
    %2626 = vmatprep.subr.mxu0 %v1898
    %2627 = vmatpush1.msra.mxu0 %v1897
    %2628 = vmatprep.subr.mxu0 %v1900
    %2629 = vmatpush1.msra.mxu0 %v1899
    %2630 = vmatprep.subr.mxu0 %v1902
    %2631 = vmatpush1.msra.mxu0 %v1901
    %2632 = vmatprep.subr.mxu0 %v1904
    %2633 = vmatpush1.msra.mxu0 %v1903
    %2634 = vmatprep.mubr.f32.mxu0 %v1769
    %2635 = vmatmul.mubr.f32.gmra.mrb[0].mxu0 %v1767
    %v2636 = vpop.f32.mrb[0].mxu0
    %v2637 = vadd.f32 %v2560, %v2636
    %v2638 = vpop.f32.mrb[0].mxu0
    %v2639 = vadd.f32 %v2562, %v2638
    %2640 = vmatprep.mubr.f32.mxu0 %v1775
    %2641 = vmatmul.mubr.f32.gmra.mrb[0].mxu0 %v1773
    %v2642 = vpop.f32.mrb[0].mxu0
    %v2643 = vadd.f32 %v2566, %v2642
    %v2644 = vpop.f32.mrb[0].mxu0
    %v2645 = vadd.f32 %v2568, %v2644
    %2646 = vdwg.mxu0
    %v2647 = vadd.f32 %v2637, %v2489
    %v2648 = vadd.f32 %v2639, %v2490
    %v2649 = vadd.f32 %v2643, %v2491
    %v2650 = vadd.f32 %v2645, %v2492
    %v2651 = vld [vmem:[%s10] sm:$0x3]
    %v2653 = vlaneseq
    %v2654 = vshrl.u32 %v2653, 7
    %v2655 = vsub.s32 0, %v2654
    %v2656 = vrot.slane %v2651, %v2655
    %v2657 = vlaneseq
    %v2658 = vshrl.u32 %v2657, 7
    %v2659 = vsub.s32 1, %v2658
    %v2660 = vrot.slane %v2651, %v2659
    %v2663 = vadd.f32 %v2647, %v2656
    %v2664 = vadd.f32 %v2648, %v2660
    %v2665 = vadd.f32 %v2649, %v2656
    %v2666 = vadd.f32 %v2650, %v2660
    %v2667 = vadd.f32 %v2663, %v2665
    %v2668 = vrot.slane %v2667, 4
    %v2669 = vadd.f32 %v2667, %v2668
    %v2670 = vrot.slane %v2669, 2
    %v2671 = vadd.f32 %v2669, %v2670
    %v2672 = vrot.slane %v2671, 1
    %v2673 = vadd.f32 %v2671, %v2672
    %v2674 = vadd.f32 %v2664, %v2666
    %v2675 = vrot.slane %v2674, 4
    %v2676 = vadd.f32 %v2674, %v2675
    %v2677 = vrot.slane %v2676, 2
    %v2678 = vadd.f32 %v2676, %v2677
    %v2679 = vrot.slane %v2678, 1
    %v2680 = vadd.f32 %v2678, %v2679
    %v2681 = vmul.f32 %v2663, %v2663
    %v2682 = vmul.f32 %v2664, %v2664
    %v2683 = vmul.f32 %v2665, %v2665
    %v2684 = vmul.f32 %v2666, %v2666
    %v2685 = vadd.f32 %v2681, %v2683
    %v2686 = vrot.slane %v2685, 4
    %v2687 = vadd.f32 %v2685, %v2686
    %v2688 = vrot.slane %v2687, 2
    %v2689 = vadd.f32 %v2687, %v2688
    %v2690 = vrot.slane %v2689, 1
    %v2691 = vadd.f32 %v2689, %v2690
    %v2692 = vadd.f32 %v2682, %v2684
    %v2693 = vrot.slane %v2692, 4
    %v2694 = vadd.f32 %v2692, %v2693
    %v2695 = vrot.slane %v2694, 2
    %v2696 = vadd.f32 %v2694, %v2695
    %v2697 = vrot.slane %v2696, 1
    %v2698 = vadd.f32 %v2696, %v2697
    %v2699 = vsel %vm1370, %v2673, %v2691
    %v2700 = vsel %vm1370, %v2680, %v2698
    %2701 = vmatprep.subr.mxu0 0.0
    %2702 = vmatpush1.msra.mxu0 %v1373
    %2703 = vmatprep.subr.mxu0 0.0
    %2704 = vmatpush1.msra.mxu0 %v1374
    %2705 = vmatprep.subr.mxu0 0.0
    %2706 = vmatpush1.msra.mxu0 %v1375
    %2707 = vmatprep.subr.mxu0 0.0
    %2708 = vmatpush1.msra.mxu0 %v1376
    %2709 = vmatprep.subr.mxu0 0.0
    %2710 = vmatpush1.msra.mxu0 %v1377
    %2711 = vmatprep.subr.mxu0 0.0
    %2712 = vmatpush1.msra.mxu0 %v1378
    %2713 = vmatprep.subr.mxu0 0.0
    %2714 = vmatpush1.msra.mxu0 %v1379
    %2715 = vmatprep.subr.mxu0 0.0
    %2716 = vmatpush1.msra.mxu0 %v1380
    %2717 = vmatprep.subr.mxu0 0.0
    %2718 = vmatpush1.msra.mxu0 %v1381
    %2719 = vmatprep.subr.mxu0 0.0
    %2720 = vmatpush1.msra.mxu0 %v1382
    %2721 = vmatprep.subr.mxu0 0.0
    %2722 = vmatpush1.msra.mxu0 %v1383
    %2723 = vmatprep.subr.mxu0 0.0
    %2724 = vmatpush1.msra.mxu0 %v1384
    %2725 = vmatprep.subr.mxu0 0.0
    %2726 = vmatpush1.msra.mxu0 %v1385
    %2727 = vmatprep.subr.mxu0 0.0
    %2728 = vmatpush1.msra.mxu0 %v1386
    %2729 = vmatprep.subr.mxu0 0.0
    %2730 = vmatpush1.msra.mxu0 %v1387
    %2731 = vmatprep.subr.mxu0 0.0
    %2732 = vmatpush1.msra.mxu0 %v1388
    %2733 = vmatprep.subr.mxu0 0.0
    %2734 = vmatpush1.msra.mxu0 %v1389
    %2735 = vmatprep.subr.mxu0 0.0
    %2736 = vmatpush1.msra.mxu0 %v1390
    %2737 = vmatprep.subr.mxu0 0.0
    %2738 = vmatpush1.msra.mxu0 %v1391
    %2739 = vmatprep.subr.mxu0 0.0
    %2740 = vmatpush1.msra.mxu0 %v1392
    %2741 = vmatprep.subr.mxu0 0.0
    %2742 = vmatpush1.msra.mxu0 %v1393
    %2743 = vmatprep.subr.mxu0 0.0
    %2744 = vmatpush1.msra.mxu0 %v1394
    %2745 = vmatprep.subr.mxu0 0.0
    %2746 = vmatpush1.msra.mxu0 %v1395
    %2747 = vmatprep.subr.mxu0 0.0
    %2748 = vmatpush1.msra.mxu0 %v1396
    %2749 = vmatprep.subr.mxu0 0.0
    %2750 = vmatpush1.msra.mxu0 %v1397
    %2751 = vmatprep.subr.mxu0 0.0
    %2752 = vmatpush1.msra.mxu0 %v1398
    %2753 = vmatprep.subr.mxu0 0.0
    %2754 = vmatpush1.msra.mxu0 %v1399
    %2755 = vmatprep.subr.mxu0 0.0
    %2756 = vmatpush1.msra.mxu0 %v1400
    %2757 = vmatprep.subr.mxu0 0.0
    %2758 = vmatpush1.msra.mxu0 %v1401
    %2759 = vmatprep.subr.mxu0 0.0
    %2760 = vmatpush1.msra.mxu0 %v1402
    %2761 = vmatprep.subr.mxu0 0.0
    %2762 = vmatpush1.msra.mxu0 %v1403
    %2763 = vmatprep.subr.mxu0 0.0
    %2764 = vmatpush1.msra.mxu0 %v1404
    %2765 = vmatprep.mubr.f32.mxu0 %v2700
    %2766 = vmatmul.mubr.f32.gmra.mrb[0].mxu0 %v2699
    %v2767 = vpop.f32.mrb[0].mxu0
    %v2768 = vadd.f32 0.0, %v2767
    %v2769 = vpop.f32.mrb[0].mxu0
    %2770 = vdwg.mxu0
    %v2771 = vmul.f32 %v2768, 0.0009765625
    %v2772 = vmul.f32 %v2771, %v2771
    %v2774 = vrot.slane %v2772, 7
    %v2776 = vsub.f32 %v2771, %v2774
    %v2777 = vld [vmem:[%s11] sm:$0x1]
    %v2778 = vadd.f32 %v2776, 1e-05
    %v2779 = vrsqrt.pop %v2778
    %v2782 = vunpack.c.l.s4 1966171168
    %v2783 = vunpack.c.0.s8 %v2782
    %v2784 = vlaneseq
    %v2785 = vshrl.u32 %v2784, 7
    %v2786 = vsub.s32 %v2783, %v2785
    %v2787 = vrot.slane %v2779, %v2786
    %v2788 = vcombine.high %v2787, %v2787
    %v2790 = vunpack.c.l.s4 1966171168
    %v2791 = vunpack.c.0.s8 %v2790
    %v2792 = vlaneseq
    %v2793 = vshrl.u32 %v2792, 7
    %v2794 = vsub.s32 %v2791, %v2793
    %v2795 = vrot.slane %v2788, %v2794
    %v2797 = vmul.f32 %v2777, %v2795
    %v2798 = vld [vmem:[%s12] sm:$0x1]
    %v2799 = vmul.f32 %v2771, %v2797
    %v2800 = vsub.f32 %v2798, %v2799
    %v2802 = vlaneseq
    %v2803 = vshrl.u32 %v2802, 7
    %v2804 = vsub.s32 0, %v2803
    %v2805 = vrot.slane %v2800, %v2804
    %v2807 = vsel %vm1370, %v2797, %v2805
    %v2809 = vsel %vm1515, %v2807, 0
    %2811 = vmatprep.subr.mxu0 %v1522
    %2812 = vmatpush1.msra.mxu0 %v1520
    %2813 = vmatprep.subr.mxu0 0.0
    %2814 = vmatpush1.msra.mxu0 0.0
    %2815 = vmatprep.subr.mxu0 0.0
    %2816 = vmatpush1.msra.mxu0 0.0
    %2817 = vmatprep.subr.mxu0 0.0
    %2818 = vmatpush1.msra.mxu0 0.0
    %2819 = vmatprep.subr.mxu0 0.0
    %2820 = vmatpush1.msra.mxu0 0.0
    %2821 = vmatprep.subr.mxu0 0.0
    %2822 = vmatpush1.msra.mxu0 0.0
    %2823 = vmatprep.subr.mxu0 0.0
    %2824 = vmatpush1.msra.mxu0 0.0
    %2825 = vmatprep.subr.mxu0 0.0
    %2826 = vmatpush1.msra.mxu0 0.0
    %2827 = vmatprep.subr.mxu0 0.0
    %2828 = vmatpush1.msra.mxu0 0.0
    %2829 = vmatprep.subr.mxu0 0.0
    %2830 = vmatpush1.msra.mxu0 0.0
    %2831 = vmatprep.subr.mxu0 0.0
    %2832 = vmatpush1.msra.mxu0 0.0
    %2833 = vmatprep.subr.mxu0 0.0
    %2834 = vmatpush1.msra.mxu0 0.0
    %2835 = vmatprep.subr.mxu0 0.0
    %2836 = vmatpush1.msra.mxu0 0.0
    %2837 = vmatprep.subr.mxu0 0.0
    %2838 = vmatpush1.msra.mxu0 0.0
    %2839 = vmatprep.subr.mxu0 0.0
    %2840 = vmatpush1.msra.mxu0 0.0
    %2841 = vmatprep.subr.mxu0 0.0
    %2842 = vmatpush1.msra.mxu0 0.0
    %2843 = vmatprep.subr.mxu0 0.0
    %2844 = vmatpush1.msra.mxu0 0.0
    %2845 = vmatprep.subr.mxu0 0.0
    %2846 = vmatpush1.msra.mxu0 0.0
    %2847 = vmatprep.subr.mxu0 0.0
    %2848 = vmatpush1.msra.mxu0 0.0
    %2849 = vmatprep.subr.mxu0 0.0
    %2850 = vmatpush1.msra.mxu0 0.0
    %2851 = vmatprep.subr.mxu0 0.0
    %2852 = vmatpush1.msra.mxu0 0.0
    %2853 = vmatprep.subr.mxu0 0.0
    %2854 = vmatpush1.msra.mxu0 0.0
    %2855 = vmatprep.subr.mxu0 0.0
    %2856 = vmatpush1.msra.mxu0 0.0
    %2857 = vmatprep.subr.mxu0 0.0
    %2858 = vmatpush1.msra.mxu0 0.0
    %2859 = vmatprep.subr.mxu0 0.0
    %2860 = vmatpush1.msra.mxu0 0.0
    %2861 = vmatprep.subr.mxu0 0.0
    %2862 = vmatpush1.msra.mxu0 0.0
    %2863 = vmatprep.subr.mxu0 0.0
    %2864 = vmatpush1.msra.mxu0 0.0
    %2865 = vmatprep.subr.mxu0 0.0
    %2866 = vmatpush1.msra.mxu0 0.0
    %2867 = vmatprep.subr.mxu0 0.0
    %2868 = vmatpush1.msra.mxu0 0.0
    %2869 = vmatprep.subr.mxu0 0.0
    %2870 = vmatpush1.msra.mxu0 0.0
    %2871 = vmatprep.subr.mxu0 0.0
    %2872 = vmatpush1.msra.mxu0 0.0
    %2873 = vmatprep.subr.mxu0 0.0
    %2874 = vmatpush1.msra.mxu0 0.0
    %2875 = vmatprep.mubr.f32.mxu0 0.0
    %2876 = vmatmul.mubr.f32.gmra.mrb[0].mxu0 %v2809
    %v2877 = vpop.f32.mrb[0].mxu0
    %v2878 = vadd.f32 0.0, %v2877
    %v2879 = vpop.f32.mrb[0].mxu0
    %v2880 = vadd.f32 0.0, %v2879
    %2881 = vdwg.mxu0
    %v2882 = vlaneseq
    %v2883 = vshrl.u32 %v2882, 7
    %v2884 = vsub.s32 0, %v2883
    %v2885 = vrot.slane %v2878, %v2884
    %v2886 = vlaneseq
    %v2887 = vshrl.u32 %v2886, 7
    %v2888 = vsub.s32 0, %v2887
    %v2889 = vrot.slane %v2880, %v2888
    %v2890 = vmul.f32 %v2663, %v2885
    %v2891 = vmul.f32 %v2664, %v2889
    %v2892 = vmul.f32 %v2665, %v2885
    %v2893 = vmul.f32 %v2666, %v2889
    %v2894 = vlaneseq
    %v2895 = vshrl.u32 %v2894, 7
    %v2896 = vsub.s32 1, %v2895
    %v2897 = vrot.slane %v2878, %v2896
    %v2898 = vlaneseq
    %v2899 = vshrl.u32 %v2898, 7
    %v2900 = vsub.s32 1, %v2899
    %v2901 = vrot.slane %v2880, %v2900
    %v2902 = vadd.f32 %v2890, %v2897
    %v2903 = vadd.f32 %v2891, %v2901
    %v2904 = vadd.f32 %v2892, %v2897
    %v2905 = vadd.f32 %v2893, %v2901
    %v2906 = vadd.f32 %v121, %v2902
    %v2907 = vadd.f32 %v122, %v2903
    %v2908 = vadd.f32 %v123, %v2904
    %v2909 = vadd.f32 %v124, %v2905
    %v2910 = vmax.f32 %v2906, 0.0
    %v2911 = vmax.f32 %v2907, 0.0
    %v2912 = vmax.f32 %v2908, 0.0
    %v2913 = vmax.f32 %v2909, 0.0
    %2914 = vst [vmem:[%s16] sm:$0xff] %v2910
    %2915 = vst [vmem:[%s16 + $0x8] sm:$0xff] %v2911
    %2916 = vst [vmem:[%s16 + $0x10] sm:$0xff] %v2912
    %2917 = vst [vmem:[%s16 + $0x18] sm:$0xff] %v2913
    // Predicated region
    $region86: #{basic_block_forward.1} parent=1 // pred_check
      _
    $region87: #{basic_block_forward.1} parent=1 // pred_check_branch
      %2919 = sbr.rel (0) target = $region89
    $region88: #{basic_block_forward.1} parent=1 // pred_region
      _
    $region89: #{basic_block_forward.1} parent=1 // pred_fallthru
      _
    // Predicated region
    $region90: #{basic_block_forward.1} parent=1 // pred_check
      _
    $region91: #{basic_block_forward.1} parent=1 // pred_check_branch
      %2921 = sbr.rel (0) target = $region93
    $region92: #{basic_block_forward.1} parent=1 // pred_region
      _
    $region93: #{basic_block_forward.1} parent=1 // pred_fallthru
      _
    %2922 = vsyncpa [#allocation3], 1
    %2923 = vsyncpa [#allocation5], 1
    %2924 = vsyncpa [#allocation8], 1

</llo_original>
